<compile_context>
chip_gen: v7x
topology: tpu7x:2x2x1
jax: 0.10.0
libtpu: 0.0.40
codegen_flags: <defaults>
</compile_context>

<pallas_src>
import functools

import jax
import jax.numpy as jnp
from jax import lax
from jax.experimental import pallas as pl
from jax.experimental.pallas import tpu as pltpu


# ----------------------------- Pallas kernel --------------------------------

def _spatialwise_kernel(x_ref, w1_ref, w2_ref, b2_ref, w3_ref, b3_ref,
                        out_ref, pad_ref, *, dil, block_h, w_pad, lead):
    # x_ref:   (THd*Wf, C+1) bf16   overlapping row window (tile + dil halo),
    #                               flat; last channel is 1 on real pixels and
    #                               0 on spatial padding (bias/mask channel)
    # w1_ref:  (C+1, Cmp) bf16      fc1 1x1 conv, BN + bias folded in
    # w2_ref:  (3,3,Cmp,Cmp) bf16   b2_ref: (1, Cmp) f32   fc2 3x3 dilated conv
    # w3_ref:  (Cmp, Cop) bf16      b3_ref: (1, Cop) f32   fc3 1x1 conv
    # out_ref: (TH*Wf, Cop)         full padded width; wrapper drops borders
    # pad_ref: (2*lead + THd*Wf, Cmp) bf16  flat padded fc1 activations
    d = dil
    TH = block_h
    Wf = w_pad
    THd = TH + 2 * d
    Cmp = pad_ref.shape[1]

    # ---- fc1: 1x1 conv (+ folded BN/bias) + ReLU on tile rows + dil halo ----
    # Bias enters through the ones channel, so spatial-padding rows (all-zero
    # input) give exactly h1 == 0, i.e. the conv zero-padding fc2 expects.
    h1 = jnp.dot(x_ref[...], w1_ref[...], preferred_element_type=jnp.float32)
    h1 = jnp.maximum(h1, 0.0)

    # ---- stage fc1 activations into the flat scratch (bf16) ----
    pad_ref[lead:lead + THd * Wf, :] = h1.astype(pad_ref.dtype)
    # zero only the small head/tail guard rows; they are read only by the taps
    # of the discarded border columns (kept in-bounds and finite).
    pad_ref[0:lead, :] = jnp.zeros((lead, Cmp), pad_ref.dtype)
    pad_ref[lead + THd * Wf:2 * lead + THd * Wf, :] = jnp.zeros(
        (lead, Cmp), pad_ref.dtype)

    # ---- fc2: 3x3 dilated conv = 9 contiguous row-window matmuls, ----------
    # ---- accumulated in registers (value chain), not VMEM ------------------
    acc = None
    for ky in range(3):
        for kx in range(3):
            start = lead + (ky * Wf + (kx - 1)) * d          # static offset
            tap = pad_ref[start:start + TH * Wf, :]          # contiguous rows
            part = jnp.dot(tap, w2_ref[ky, kx],
                           preferred_element_type=jnp.float32)
            acc = part if acc is None else acc + part
    h2 = jnp.maximum(acc + b2_ref[...], 0.0)                 # bias added once

    # ---- fc3: 1x1 conv + (folded) BN + ReLU ----
    h3 = jnp.dot(h2.astype(w3_ref.dtype), w3_ref[...],
                 preferred_element_type=jnp.float32)
    out_ref[...] = jnp.maximum(h3 + b3_ref[...], 0.0).astype(out_ref.dtype)


# ----------------------------- wrapper ---------------------------------------

def _round_up(v, m):
    return ((v + m - 1) // m) * m


def _pad_axis(a, axis, size):
    if a.shape[axis] == size:
        return a
    pads = [(0, 0)] * a.ndim
    pads[axis] = (0, size - a.shape[axis])
    return jnp.pad(a, pads)


def _vmem_budget_bytes(headroom=0.85, fallback=64 * 2 ** 20):
    """Per-generation VMEM budget (128 MiB v5e/v6e, 64 MiB v7x) with headroom."""
    try:
        cap = int(pltpu.get_tpu_info().vmem_capacity_bytes)
    except Exception:
        cap = fallback
    return int(headroom * cap)


def _pick_block_h(H, W, dil, cin, Cmp, Cop, out_isz, vmem_budget,
                  acc_limit=128 * 1024):
    """Largest block_h whose fc2 f32 accumulator stays ~register-resident and
    whose per-tile VMEM working set fits the budget (need not divide H)."""
    Wf = W + 2 * dil
    Cxp = _round_up(cin, 128)                       # x lane padding in VMEM
    th_acc = acc_limit // (Wf * Cmp * 4)            # keep acc inside vreg file
    fixed = (2 * ((cin * Cmp + 9 * Cmp * Cmp + Cmp * Cop) * 2
                  + (Cmp + Cop) * 4)                # double-buffered weights
             + 4 * 2 ** 20)                         # Mosaic internal scratch
    per_row = Wf * (2 * Cxp * 2 + 2 * Cop * out_isz + Cmp * 2)
    th_mem = (vmem_budget - fixed) // max(per_row, 1)
    return int(max(1, min(H, th_acc, th_mem)))


def spatialwise_pallas(x_nchw, params, *, dil, block_h=None, lane=128,
                       out_dtype=jnp.float32):
    """x_nchw: (N, C, H, W) float32. Returns (N, C*M, H, W) in out_dtype."""
    w1, b1, w2, b2, w3, b3 = params
    N, C, H, W = x_nchw.shape
    Cm, Co = w1.shape[1], w3.shape[1]
    Cmp = _round_up(Cm, lane)
    Cop = _round_up(Co, lane)
    d = dil
    Wf = W + 2 * d
    out_isz = jnp.dtype(out_dtype).itemsize

    vmem_budget = _vmem_budget_bytes()
    if block_h is None:
        block_h = _pick_block_h(H, W, d, C + 1, Cmp, Cop, out_isz, vmem_budget)
    TH = max(1, min(int(block_h), H))
    nh = -(-H // TH)                   # cdiv: block_h need not divide H
    extra = nh * TH - H                # bottom filler rows (computed, dropped)
    THd = TH + 2 * d
    lead = _round_up(max(d, 1), 16)    # bf16 sublane-aligned guard >= dil

    # ---- lane-pad channels, cast matmul operands to bf16 (BN pre-folded) ----
    # fc1 bias is folded into the matmul as an extra input row (ones channel).
    w1a = jnp.concatenate([w1, b1.reshape(1, Cm)], axis=0)          # (C+1, Cm)
    w1p = _pad_axis(w1a, 1, Cmp).astype(jnp.bfloat16)
    w2p = _pad_axis(_pad_axis(w2, 3, Cmp), 2, Cmp).astype(jnp.bfloat16)
    b2p = _pad_axis(b2.reshape(1, Cm), 1, Cmp).astype(jnp.float32)
    w3p = _pad_axis(_pad_axis(w3, 0, Cmp), 1, Cop).astype(jnp.bfloat16)
    b3p = _pad_axis(b3.reshape(1, Co), 1, Cop).astype(jnp.float32)

    # ---- NCHW -> NHWC, append ones channel, spatial zero-pad, bf16, --------
    # ---- pre-tile into overlapping (TH + 2d) row windows --------------------
    # TODO(synk): keep the surrounding model NHWC to drop this transpose pass.
    x_nhwc = jnp.transpose(x_nchw, (0, 2, 3, 1))
    ones = jnp.ones((N, H, W, 1), x_nhwc.dtype)
    x_aug = jnp.concatenate([x_nhwc, ones], axis=-1)                # (N,H,W,C+1)
    x_pad = jnp.pad(x_aug, ((0, 0), (d, d + extra), (d, d), (0, 0)))
    x_pad = x_pad.astype(jnp.bfloat16)
    rows = (jnp.arange(nh)[:, None] * TH + jnp.arange(THd)[None, :]).reshape(-1)
    x_tiles = jnp.take(x_pad, rows, axis=1)                # (N, nh*THd, Wf, C+1)
    x_tiles = x_tiles.reshape(N, nh, THd * Wf, C + 1)

    # ---- VMEM working-set estimate (lane padding + internal scratch incl.) ----
    est = (2 * THd * Wf * _round_up(C + 1, lane) * 2       # x window (x2 bufs)
           + 2 * TH * Wf * Cop * out_isz                   # out block (x2 bufs)
           + 2 * (((C + 1) * Cmp + 9 * Cmp * Cmp + Cmp * Cop) * 2
                  + (Cmp + Cop) * 4)                       # weights/biases (x2)
           + (2 * lead + THd * Wf) * Cmp * 2               # pad scratch (bf16)
           + 4 * 2 ** 20)                                  # Mosaic internal scratch
    assert est <= vmem_budget, (
        f"per-step working set {est / 2 ** 20:.1f} MiB exceeds VMEM budget "
        f"{vmem_budget / 2 ** 20:.1f} MiB; lower block_h")
    vmem_limit = int(min(vmem_budget, max(32 * 2 ** 20, 2 * est)))

    kernel = functools.partial(_spatialwise_kernel, dil=d, block_h=TH,
                               w_pad=Wf, lead=lead)

    out_tiles = pl.pallas_call(
        kernel,
        out_shape=jax.ShapeDtypeStruct((N, nh, TH * Wf, Cop), out_dtype),
        grid_spec=pltpu.PrefetchScalarGridSpec(
            num_scalar_prefetch=0,
            grid=(N, nh),
            in_specs=[
                # overlapping, pre-tiled row window (tile + dil halo):
                # per-step VMEM is independent of the full image size.
                pl.BlockSpec((None, None, THd * Wf, C + 1),
                             lambda n, h: (n, h, 0, 0)),
                # weights / biases: resident via constant index_maps.
                # TODO(synk): pipeline_mode=pl.Buffered(1) would drop their
                # redundant second buffer once universally supported.
                pl.BlockSpec((C + 1, Cmp), lambda n, h: (0, 0)),
                pl.BlockSpec((3, 3, Cmp, Cmp), lambda n, h: (0, 0, 0, 0)),
                pl.BlockSpec((1, Cmp), lambda n, h: (0, 0)),
                pl.BlockSpec((Cmp, Cop), lambda n, h: (0, 0)),
                pl.BlockSpec((1, Cop), lambda n, h: (0, 0)),
            ],
            out_specs=pl.BlockSpec((None, None, TH * Wf, Cop),
                                   lambda n, h: (n, h, 0, 0)),
            scratch_shapes=[
                pltpu.VMEM((2 * lead + THd * Wf, Cmp), jnp.bfloat16),
            ],
        ),
        compiler_params=pltpu.CompilerParams(
            dimension_semantics=("parallel", "parallel"),
            vmem_limit_bytes=vmem_limit),
    )(x_tiles, w1p, w2p, b2p, w3p, b3p)

    # drop bottom filler rows, padded border columns and padded out channels
    out = out_tiles.reshape(N, nh * TH, Wf, Cop)[:, :H, d:d + W, :Co]
    return jnp.transpose(out, (0, 3, 1, 2))


# -------------------- parameter setup (deterministic, synthetic) ------------

def _fold_bn(w, b, gamma, beta, mean, var, eps=1e-5):
    """Fold eval-mode BatchNorm into a conv with out-channels on the LAST axis."""
    s = gamma / jnp.sqrt(var + eps)
    return w * s, b * s + beta - mean * s


def make_params(key, inplanes, r, M):
    Cm = inplanes // r
    Co = inplanes * M
    ks = jax.random.split(key, 12)
    std = 0.01

    w1 = std * jax.random.normal(ks[0], (inplanes, Cm), jnp.float32)
    b1 = 0.01 * jax.random.normal(ks[1], (Cm,), jnp.float32)
    w2 = std * jax.random.normal(ks[2], (3, 3, Cm, Cm), jnp.float32)
    b2 = 0.01 * jax.random.normal(ks[3], (Cm,), jnp.float32)
    w3 = std * jax.random.normal(ks[4], (Cm, Co), jnp.float32)
    b3 = 0.01 * jax.random.normal(ks[5], (Co,), jnp.float32)

    def bn(k, n):
        k1, k2, k3, k4 = jax.random.split(k, 4)
        gamma = 1.0 + 0.1 * jax.random.normal(k1, (n,), jnp.float32)
        beta = 0.1 * jax.random.normal(k2, (n,), jnp.float32)
        mean = 0.1 * jax.random.normal(k3, (n,), jnp.float32)
        var = 1.0 + 0.1 * jnp.abs(jax.random.normal(k4, (n,), jnp.float32))
        return gamma, beta, mean, var

    w1, b1 = _fold_bn(w1, b1, *bn(ks[6], Cm))
    w2, b2 = _fold_bn(w2, b2, *bn(ks[7], Cm))
    w3, b3 = _fold_bn(w3, b3, *bn(ks[8], Co))
    return w1, b1, w2, b2, w3, b3


# -------------------- pure-JAX reference (for correctness check) ------------

def spatialwise_ref(x_nchw, params, *, dil):
    w1, b1, w2, b2, w3, b3 = params
    bf = jnp.bfloat16
    x = jnp.transpose(x_nchw, (0, 2, 3, 1)).astype(bf)               # NHWC
    h1 = jax.nn.relu(jnp.einsum('nhwc,cd->nhwd', x, w1.astype(bf),
                                preferred_element_type=jnp.float32) + b1)
    h2 = lax.conv_general_dilated(
        h1.astype(bf), w2.astype(bf), window_strides=(1, 1),
        padding=[(dil, dil), (dil, dil)], rhs_dilation=(dil, dil),
        dimension_numbers=('NHWC', 'HWIO', 'NHWC'),
        preferred_element_type=jnp.float32) + b2
    h2 = jax.nn.relu(h2)
    h3 = jax.nn.relu(jnp.einsum('nhwc,cd->nhwd', h2.astype(bf), w3.astype(bf),
                                preferred_element_type=jnp.float32) + b3)
    return jnp.transpose(h3, (0, 3, 1, 2))


if __name__ == "__main__":
    inplanes, r, M = 8, 2, 2
    key = jax.random.PRNGKey(0)
    kx, kp = jax.random.split(key)
    params = make_params(kp, inplanes, r, M)

    # --- test 1: dilation 2, block_h divides H (halo / border-wrap path) ---
    N, H, W, dil1 = 2, 16, 16, 2
    x = jax.random.normal(kx, (N, inplanes, H, W), jnp.float32)      # NCHW
    out = jax.block_until_ready(spatialwise_pallas(x, params, dil=dil1,
                                                   block_h=8))
    ref = jax.block_until_ready(spatialwise_ref(x, params, dil=dil1))
    assert out.shape == (N, inplanes * M, H, W)
    err1 = float(jnp.max(jnp.abs(out - ref)))
    assert jnp.allclose(out, ref, rtol=2e-2, atol=3e-4), err1

    # --- test 2: dilation 1, block_h does NOT divide H, bf16 output path ---
    H2, W2, d2 = 10, 12, 1
    x2 = jax.random.normal(jax.random.fold_in(kx, 1),
                           (1, inplanes, H2, W2), jnp.float32)
    out2 = jax.block_until_ready(spatialwise_pallas(
        x2, params, dil=d2, block_h=4, out_dtype=jnp.bfloat16))
    ref2 = jax.block_until_ready(spatialwise_ref(x2, params, dil=d2))
    assert out2.shape == (1, inplanes * M, H2, W2)
    err2 = float(jnp.max(jnp.abs(out2.astype(jnp.float32) - ref2)))
    assert jnp.allclose(out2.astype(jnp.float32), ref2,
                        rtol=3e-2, atol=5e-3), err2

    print("KERNEL_OK")
</pallas_src>

<mosaic_0001>
module attributes {stable_mosaic.version = 11 : i64} {
  func.func @_spatialwise_kernel(%arg0: i32, %arg1: i32, %arg2: memref<1x1x240x9xbf16, #tpu.memory_space<vmem>>, %arg3: memref<9x128xbf16, #tpu.memory_space<vmem>>, %arg4: memref<3x3x128x128xbf16, #tpu.memory_space<vmem>>, %arg5: memref<1x128xf32, #tpu.memory_space<vmem>>, %arg6: memref<128x128xbf16, #tpu.memory_space<vmem>>, %arg7: memref<1x128xf32, #tpu.memory_space<vmem>>, %arg8: memref<1x1x160x128xf32, #tpu.memory_space<vmem>>, %arg9: memref<272x128xbf16, #tpu.memory_space<vmem>>) attributes {dimension_semantics = [#tpu.dimension_semantics<parallel>, #tpu.dimension_semantics<parallel>], iteration_bounds = array<i64: 2, 2>, scalar_prefetch = 0 : i64, scratch_operands = 1 : i64, tpu.core_type = #tpu.core_type<tc>, window_params = [{transform_indices = @transform_0, window_bounds = array<i64: 1, 1, 240, 9>}, {pipeline_mode = #tpu.pipeline_mode<synchronous>, transform_indices = @transform_1, window_bounds = array<i64: 9, 128>}, {pipeline_mode = #tpu.pipeline_mode<synchronous>, transform_indices = @transform_2, window_bounds = array<i64: 3, 3, 128, 128>}, {pipeline_mode = #tpu.pipeline_mode<synchronous>, transform_indices = @transform_3, window_bounds = array<i64: 1, 128>}, {pipeline_mode = #tpu.pipeline_mode<synchronous>, transform_indices = @transform_4, window_bounds = array<i64: 128, 128>}, {pipeline_mode = #tpu.pipeline_mode<synchronous>, transform_indices = @transform_5, window_bounds = array<i64: 1, 128>}, {transform_indices = @transform_6, window_bounds = array<i64: 1, 1, 160, 128>}]} {
    %c0 = arith.constant 0 : index
    %c0_0 = arith.constant 0 : index
    %c0_1 = arith.constant 0 : index
    %c0_2 = arith.constant 0 : index
    %0 = vector.load %arg2[%c0, %c0_0, %c0_1, %c0_2] : memref<1x1x240x9xbf16, #tpu.memory_space<vmem>>, vector<1x1x240x9xbf16>
    %1 = vector.shape_cast %0 : vector<1x1x240x9xbf16> to vector<240x9xbf16>
    %c0_3 = arith.constant 0 : index
    %c0_4 = arith.constant 0 : index
    %2 = vector.load %arg3[%c0_3, %c0_4] : memref<9x128xbf16, #tpu.memory_space<vmem>>, vector<9x128xbf16>
    %cst = arith.constant dense<0.000000e+00> : vector<240x128xf32>
    %3 = tpu.matmul %1, %2, %cst {dimension_numbers = #tpu.dot_dimension_numbers<[1], [0], [0], [1], [0, 0, 1, 1], [], []>} : vector<240x9xbf16>, vector<9x128xbf16>, vector<240x128xf32> -> vector<240x128xf32>
    %cst_5 = arith.constant 0.000000e+00 : f32
    %4 = vector.broadcast %cst_5 : f32 to vector<240x128xf32>
    %5 = arith.maximumf %3, %4 : vector<240x128xf32>
    %6 = arith.truncf %5 : vector<240x128xf32> to vector<240x128xbf16>
    %c16 = arith.constant 16 : index
    %c0_6 = arith.constant 0 : index
    %7 = vector.load %arg9[%c16, %c0_6] : memref<272x128xbf16, #tpu.memory_space<vmem>>, vector<240x128xbf16>
    tpu.vector_store %arg9[%c16, %c0_6], %6 {strides = array<i32>} : memref<272x128xbf16, #tpu.memory_space<vmem>>, vector<240x128xbf16>,
    %cst_7 = arith.constant 0.000000e+00 : bf16
    %8 = vector.broadcast %cst_7 : bf16 to vector<16x128xbf16>
    %c0_8 = arith.constant 0 : index
    %c0_9 = arith.constant 0 : index
    %9 = vector.load %arg9[%c0_8, %c0_9] : memref<272x128xbf16, #tpu.memory_space<vmem>>, vector<16x128xbf16>
    tpu.vector_store %arg9[%c0_8, %c0_9], %8 {strides = array<i32>} : memref<272x128xbf16, #tpu.memory_space<vmem>>, vector<16x128xbf16>,
    %cst_10 = arith.constant 0.000000e+00 : bf16
    %10 = vector.broadcast %cst_10 : bf16 to vector<16x128xbf16>
    %c256 = arith.constant 256 : index
    %c0_11 = arith.constant 0 : index
    %11 = vector.load %arg9[%c256, %c0_11] : memref<272x128xbf16, #tpu.memory_space<vmem>>, vector<16x128xbf16>
    tpu.vector_store %arg9[%c256, %c0_11], %10 {strides = array<i32>} : memref<272x128xbf16, #tpu.memory_space<vmem>>, vector<16x128xbf16>,
    %c14 = arith.constant 14 : index
    %c0_12 = arith.constant 0 : index
    %12 = vector.load %arg9[%c14, %c0_12] : memref<272x128xbf16, #tpu.memory_space<vmem>>, vector<160x128xbf16>
    %c0_13 = arith.constant 0 : index
    %c0_14 = arith.constant 0 : index
    %c0_15 = arith.constant 0 : index
    %c0_16 = arith.constant 0 : index
    %13 = vector.load %arg4[%c0_13, %c0_14, %c0_15, %c0_16] : memref<3x3x128x128xbf16, #tpu.memory_space<vmem>>, vector<1x1x128x128xbf16>
    %14 = vector.shape_cast %13 : vector<1x1x128x128xbf16> to vector<128x128xbf16>
    %cst_17 = arith.constant dense<0.000000e+00> : vector<160x128xf32>
    %15 = tpu.matmul %12, %14, %cst_17 {dimension_numbers = #tpu.dot_dimension_numbers<[1], [0], [0], [1], [0, 0, 1, 1], [], []>} : vector<160x128xbf16>, vector<128x128xbf16>, vector<160x128xf32> -> vector<160x128xf32>
    %c16_18 = arith.constant 16 : index
    %c0_19 = arith.constant 0 : index
    %16 = vector.load %arg9[%c16_18, %c0_19] : memref<272x128xbf16, #tpu.memory_space<vmem>>, vector<160x128xbf16>
    %c0_20 = arith.constant 0 : index
    %c1 = arith.constant 1 : index
    %c0_21 = arith.constant 0 : index
    %c0_22 = arith.constant 0 : index
    %17 = vector.load %arg4[%c0_20, %c1, %c0_21, %c0_22] : memref<3x3x128x128xbf16, #tpu.memory_space<vmem>>, vector<1x1x128x128xbf16>
    %18 = vector.shape_cast %17 : vector<1x1x128x128xbf16> to vector<128x128xbf16>
    %cst_23 = arith.constant dense<0.000000e+00> : vector<160x128xf32>
    %19 = tpu.matmul %16, %18, %cst_23 {dimension_numbers = #tpu.dot_dimension_numbers<[1], [0], [0], [1], [0, 0, 1, 1], [], []>} : vector<160x128xbf16>, vector<128x128xbf16>, vector<160x128xf32> -> vector<160x128xf32>
    %20 = arith.addf %15, %19 : vector<160x128xf32>
    %c18 = arith.constant 18 : index
    %c0_24 = arith.constant 0 : index
    %21 = vector.load %arg9[%c18, %c0_24] : memref<272x128xbf16, #tpu.memory_space<vmem>>, vector<160x128xbf16>
    %c0_25 = arith.constant 0 : index
    %c2 = arith.constant 2 : index
    %c0_26 = arith.constant 0 : index
    %c0_27 = arith.constant 0 : index
    %22 = vector.load %arg4[%c0_25, %c2, %c0_26, %c0_27] : memref<3x3x128x128xbf16, #tpu.memory_space<vmem>>, vector<1x1x128x128xbf16>
    %23 = vector.shape_cast %22 : vector<1x1x128x128xbf16> to vector<128x128xbf16>
    %cst_28 = arith.constant dense<0.000000e+00> : vector<160x128xf32>
    %24 = tpu.matmul %21, %23, %cst_28 {dimension_numbers = #tpu.dot_dimension_numbers<[1], [0], [0], [1], [0, 0, 1, 1], [], []>} : vector<160x128xbf16>, vector<128x128xbf16>, vector<160x128xf32> -> vector<160x128xf32>
    %25 = arith.addf %20, %24 : vector<160x128xf32>
    %c54 = arith.constant 54 : index
    %c0_29 = arith.constant 0 : index
    %26 = vector.load %arg9[%c54, %c0_29] : memref<272x128xbf16, #tpu.memory_space<vmem>>, vector<160x128xbf16>
    %c1_30 = arith.constant 1 : index
    %c0_31 = arith.constant 0 : index
    %c0_32 = arith.constant 0 : index
    %c0_33 = arith.constant 0 : index
    %27 = vector.load %arg4[%c1_30, %c0_31, %c0_32, %c0_33] : memref<3x3x128x128xbf16, #tpu.memory_space<vmem>>, vector<1x1x128x128xbf16>
    %28 = vector.shape_cast %27 : vector<1x1x128x128xbf16> to vector<128x128xbf16>
    %cst_34 = arith.constant dense<0.000000e+00> : vector<160x128xf32>
    %29 = tpu.matmul %26, %28, %cst_34 {dimension_numbers = #tpu.dot_dimension_numbers<[1], [0], [0], [1], [0, 0, 1, 1], [], []>} : vector<160x128xbf16>, vector<128x128xbf16>, vector<160x128xf32> -> vector<160x128xf32>
    %30 = arith.addf %25, %29 : vector<160x128xf32>
    %c56 = arith.constant 56 : index
    %c0_35 = arith.constant 0 : index
    %31 = vector.load %arg9[%c56, %c0_35] : memref<272x128xbf16, #tpu.memory_space<vmem>>, vector<160x128xbf16>
    %c1_36 = arith.constant 1 : index
    %c1_37 = arith.constant 1 : index
    %c0_38 = arith.constant 0 : index
    %c0_39 = arith.constant 0 : index
    %32 = vector.load %arg4[%c1_36, %c1_37, %c0_38, %c0_39] : memref<3x3x128x128xbf16, #tpu.memory_space<vmem>>, vector<1x1x128x128xbf16>
    %33 = vector.shape_cast %32 : vector<1x1x128x128xbf16> to vector<128x128xbf16>
    %cst_40 = arith.constant dense<0.000000e+00> : vector<160x128xf32>
    %34 = tpu.matmul %31, %33, %cst_40 {dimension_numbers = #tpu.dot_dimension_numbers<[1], [0], [0], [1], [0, 0, 1, 1], [], []>} : vector<160x128xbf16>, vector<128x128xbf16>, vector<160x128xf32> -> vector<160x128xf32>
    %35 = arith.addf %30, %34 : vector<160x128xf32>
    %c58 = arith.constant 58 : index
    %c0_41 = arith.constant 0 : index
    %36 = vector.load %arg9[%c58, %c0_41] : memref<272x128xbf16, #tpu.memory_space<vmem>>, vector<160x128xbf16>
    %c1_42 = arith.constant 1 : index
    %c2_43 = arith.constant 2 : index
    %c0_44 = arith.constant 0 : index
    %c0_45 = arith.constant 0 : index
    %37 = vector.load %arg4[%c1_42, %c2_43, %c0_44, %c0_45] : memref<3x3x128x128xbf16, #tpu.memory_space<vmem>>, vector<1x1x128x128xbf16>
    %38 = vector.shape_cast %37 : vector<1x1x128x128xbf16> to vector<128x128xbf16>
    %cst_46 = arith.constant dense<0.000000e+00> : vector<160x128xf32>
    %39 = tpu.matmul %36, %38, %cst_46 {dimension_numbers = #tpu.dot_dimension_numbers<[1], [0], [0], [1], [0, 0, 1, 1], [], []>} : vector<160x128xbf16>, vector<128x128xbf16>, vector<160x128xf32> -> vector<160x128xf32>
    %40 = arith.addf %35, %39 : vector<160x128xf32>
    %c94 = arith.constant 94 : index
    %c0_47 = arith.constant 0 : index
    %41 = vector.load %arg9[%c94, %c0_47] : memref<272x128xbf16, #tpu.memory_space<vmem>>, vector<160x128xbf16>
    %c2_48 = arith.constant 2 : index
    %c0_49 = arith.constant 0 : index
    %c0_50 = arith.constant 0 : index
    %c0_51 = arith.constant 0 : index
    %42 = vector.load %arg4[%c2_48, %c0_49, %c0_50, %c0_51] : memref<3x3x128x128xbf16, #tpu.memory_space<vmem>>, vector<1x1x128x128xbf16>
    %43 = vector.shape_cast %42 : vector<1x1x128x128xbf16> to vector<128x128xbf16>
    %cst_52 = arith.constant dense<0.000000e+00> : vector<160x128xf32>
    %44 = tpu.matmul %41, %43, %cst_52 {dimension_numbers = #tpu.dot_dimension_numbers<[1], [0], [0], [1], [0, 0, 1, 1], [], []>} : vector<160x128xbf16>, vector<128x128xbf16>, vector<160x128xf32> -> vector<160x128xf32>
    %45 = arith.addf %40, %44 : vector<160x128xf32>
    %c96 = arith.constant 96 : index
    %c0_53 = arith.constant 0 : index
    %46 = vector.load %arg9[%c96, %c0_53] : memref<272x128xbf16, #tpu.memory_space<vmem>>, vector<160x128xbf16>
    %c2_54 = arith.constant 2 : index
    %c1_55 = arith.constant 1 : index
    %c0_56 = arith.constant 0 : index
    %c0_57 = arith.constant 0 : index
    %47 = vector.load %arg4[%c2_54, %c1_55, %c0_56, %c0_57] : memref<3x3x128x128xbf16, #tpu.memory_space<vmem>>, vector<1x1x128x128xbf16>
    %48 = vector.shape_cast %47 : vector<1x1x128x128xbf16> to vector<128x128xbf16>
    %cst_58 = arith.constant dense<0.000000e+00> : vector<160x128xf32>
    %49 = tpu.matmul %46, %48, %cst_58 {dimension_numbers = #tpu.dot_dimension_numbers<[1], [0], [0], [1], [0, 0, 1, 1], [], []>} : vector<160x128xbf16>, vector<128x128xbf16>, vector<160x128xf32> -> vector<160x128xf32>
    %50 = arith.addf %45, %49 : vector<160x128xf32>
    %c98 = arith.constant 98 : index
    %c0_59 = arith.constant 0 : index
    %51 = vector.load %arg9[%c98, %c0_59] : memref<272x128xbf16, #tpu.memory_space<vmem>>, vector<160x128xbf16>
    %c2_60 = arith.constant 2 : index
    %c2_61 = arith.constant 2 : index
    %c0_62 = arith.constant 0 : index
    %c0_63 = arith.constant 0 : index
    %52 = vector.load %arg4[%c2_60, %c2_61, %c0_62, %c0_63] : memref<3x3x128x128xbf16, #tpu.memory_space<vmem>>, vector<1x1x128x128xbf16>
    %53 = vector.shape_cast %52 : vector<1x1x128x128xbf16> to vector<128x128xbf16>
    %cst_64 = arith.constant dense<0.000000e+00> : vector<160x128xf32>
    %54 = tpu.matmul %51, %53, %cst_64 {dimension_numbers = #tpu.dot_dimension_numbers<[1], [0], [0], [1], [0, 0, 1, 1], [], []>} : vector<160x128xbf16>, vector<128x128xbf16>, vector<160x128xf32> -> vector<160x128xf32>
    %55 = arith.addf %50, %54 : vector<160x128xf32>
    %c0_65 = arith.constant 0 : index
    %c0_66 = arith.constant 0 : index
    %56 = vector.load %arg5[%c0_65, %c0_66] : memref<1x128xf32, #tpu.memory_space<vmem>>, vector<1x128xf32>
    %57 = vector.broadcast %56 : vector<1x128xf32> to vector<160x128xf32>
    %58 = arith.addf %55, %57 : vector<160x128xf32>
    %cst_67 = arith.constant 0.000000e+00 : f32
    %59 = vector.broadcast %cst_67 : f32 to vector<160x128xf32>
    %60 = arith.maximumf %58, %59 : vector<160x128xf32>
    %61 = arith.truncf %60 : vector<160x128xf32> to vector<160x128xbf16>
    %c0_68 = arith.constant 0 : index
    %c0_69 = arith.constant 0 : index
    %62 = vector.load %arg6[%c0_68, %c0_69] : memref<128x128xbf16, #tpu.memory_space<vmem>>, vector<128x128xbf16>
    %cst_70 = arith.constant dense<0.000000e+00> : vector<160x128xf32>
    %63 = tpu.matmul %61, %62, %cst_70 {dimension_numbers = #tpu.dot_dimension_numbers<[1], [0], [0], [1], [0, 0, 1, 1], [], []>} : vector<160x128xbf16>, vector<128x128xbf16>, vector<160x128xf32> -> vector<160x128xf32>
    %c0_71 = arith.constant 0 : index
    %c0_72 = arith.constant 0 : index
    %64 = vector.load %arg7[%c0_71, %c0_72] : memref<1x128xf32, #tpu.memory_space<vmem>>, vector<1x128xf32>
    %65 = vector.broadcast %64 : vector<1x128xf32> to vector<160x128xf32>
    %66 = arith.addf %63, %65 : vector<160x128xf32>
    %cst_73 = arith.constant 0.000000e+00 : f32
    %67 = vector.broadcast %cst_73 : f32 to vector<160x128xf32>
    %68 = arith.maximumf %66, %67 : vector<160x128xf32>
    %c0_74 = arith.constant 0 : index
    %c0_75 = arith.constant 0 : index
    %c0_76 = arith.constant 0 : index
    %c0_77 = arith.constant 0 : index
    %69 = vector.load %arg8[%c0_74, %c0_75, %c0_76, %c0_77] : memref<1x1x160x128xf32, #tpu.memory_space<vmem>>, vector<1x1x160x128xf32>
    %70 = vector.shape_cast %69 : vector<1x1x160x128xf32> to vector<160x128xf32>
    %71 = vector.shape_cast %68 : vector<160x128xf32> to vector<1x1x160x128xf32>
    tpu.vector_store %arg8[%c0_74, %c0_75, %c0_76, %c0_77], %71 {strides = array<i32>} : memref<1x1x160x128xf32, #tpu.memory_space<vmem>>, vector<1x1x160x128xf32>,
    return
  }
  func.func @transform_0(%arg0: i32, %arg1: i32) -> (i32, i32, i32, i32) {
    %c0_i32 = arith.constant 0 : i32
    %c0_i32_0 = arith.constant 0 : i32
    %c0_i32_1 = arith.constant 0 : i32
    return %arg0, %arg1, %c0_i32, %c0_i32_0 : i32, i32, i32, i32
  }
  func.func @transform_1(%arg0: i32, %arg1: i32) -> (i32, i32) {
    %c0_i32 = arith.constant 0 : i32
    %c0_i32_0 = arith.constant 0 : i32
    %c0_i32_1 = arith.constant 0 : i32
    return %c0_i32, %c0_i32_0 : i32, i32
  }
  func.func @transform_2(%arg0: i32, %arg1: i32) -> (i32, i32, i32, i32) {
    %c0_i32 = arith.constant 0 : i32
    %c0_i32_0 = arith.constant 0 : i32
    %c0_i32_1 = arith.constant 0 : i32
    %c0_i32_2 = arith.constant 0 : i32
    %c0_i32_3 = arith.constant 0 : i32
    return %c0_i32, %c0_i32_0, %c0_i32_1, %c0_i32_2 : i32, i32, i32, i32
  }
  func.func @transform_3(%arg0: i32, %arg1: i32) -> (i32, i32) {
    %c0_i32 = arith.constant 0 : i32
    %c0_i32_0 = arith.constant 0 : i32
    %c0_i32_1 = arith.constant 0 : i32
    return %c0_i32, %c0_i32_0 : i32, i32
  }
  func.func @transform_4(%arg0: i32, %arg1: i32) -> (i32, i32) {
    %c0_i32 = arith.constant 0 : i32
    %c0_i32_0 = arith.constant 0 : i32
    %c0_i32_1 = arith.constant 0 : i32
    return %c0_i32, %c0_i32_0 : i32, i32
  }
  func.func @transform_5(%arg0: i32, %arg1: i32) -> (i32, i32) {
    %c0_i32 = arith.constant 0 : i32
    %c0_i32_0 = arith.constant 0 : i32
    %c0_i32_1 = arith.constant 0 : i32
    return %c0_i32, %c0_i32_0 : i32, i32
  }
  func.func @transform_6(%arg0: i32, %arg1: i32) -> (i32, i32, i32, i32) {
    %c0_i32 = arith.constant 0 : i32
    %c0_i32_0 = arith.constant 0 : i32
    %c0_i32_1 = arith.constant 0 : i32
    return %arg0, %arg1, %c0_i32, %c0_i32_0 : i32, i32, i32, i32
  }
}

</mosaic_0001>

<llo_original>
// kernel: tpu_custom_call.1
$region0: #{tpu_custom_call.1}
  #allocation0 [shape = 'u32[]', space=smem, size = 0x4, offset = 0x4, fixed_abs, tag = 'smem constant byte address 0x4 - core index']
  #allocation1 [shape = 'u32[144,128]{1,0:T(1,128)}', space=vmem, size = 0x12000, scoped, tag = 'internal scratch']
  #allocation2 [shape = 'bf16[272,128]{1,0:T(16,128)(2,1)}', space=vmem, size = 0x11000, scoped, tag = 'scratch operand']
  %s0 = inlined_call_operand.vmem [shape: bf16[2,2,240,9], index: 0, kind: input, shape index: {}]
  %s1 = inlined_call_operand.vmem [shape: bf16[9,128], index: 1, kind: input, shape index: {}]
  %s2 = inlined_call_operand.hbm [shape: bf16[3,3,128,128], index: 2, kind: input, shape index: {}]
  %s3 = inlined_call_operand.vmem [shape: f32[1,128], index: 3, kind: input, shape index: {}]
  %s4 = inlined_call_operand.vmem [shape: bf16[128,128], index: 4, kind: input, shape index: {}]
  %s5 = inlined_call_operand.vmem [shape: f32[1,128], index: 5, kind: input, shape index: {}]
  %s6 = inlined_call_operand.hbm [shape: f32[2,2,160,128], index: 6, kind: output, shape index: {}]
  %s7 = sld [smem:[#allocation0]]
  $region61: #{tpu_custom_call.1} parent=0
    _
  %s9 = ssub.s32 1, %s7
  %s10 = scalar_select 0, %s9, %s7
  $region1: #{tpu_custom_call.1} parent=0
    #allocation3 [shape = 'u8[294912]{0}', space=vmem, size = 0x48000, scoped, tag = 'input window, operand 2, single buffered']
    #allocation4 [shape = 's32[2]{0}', space=sflag, size = 0x8, scoped, tag = 'scoped memory for tpu_custom_call.1']
    #allocation5 [shape = 's32[2]{0}', space=sflag, size = 0x8, scoped, tag = 'scoped memory for tpu_custom_call.1']
    #allocation6 [shape = 'u8[163840]{0}', space=vmem, size = 0x28000, scoped, tag = 'output window, operand 0']
    %11 = vsyncpa [#allocation4], 0
    %12 = vsyncpa [#allocation5], 0
    %s13 = scalar_lea.sflag [#allocation5], 1
    %14 = vsyncpa %s13, 0
    loop: start=0, step=1, limit=6
    $region2: #{tpu_custom_call.1} parent=1 // loop_pre_header
      _
    $region3: #{tpu_custom_call.1} parent=1 // loop_header
      %s16 = sphi 0, %s20
      %p17 = scmp.ge.s32.totalorder %s16, 6
      %s23 = sphi 0, %s35
      %s24 = sphi 0, %s31
      %s25 = sphi 0, %s23
      %s26 = sphi 0, %s24
      %s27 = sphi 0, %s25
      %s28 = sphi 0, %s26
      %s40 = sphi 0, %s42
      %s43 = sphi 0, %s40
      %s44 = sphi 0, %s43
      %s60 = sphi 0, %s44
      %s64 = sphi 0, %s64
      %s66 = sphi 0, %s64
      %s67 = sphi 0, %s66
      %s81 = sphi 0, %s67
      %s85 = sphi 0, %s85
      %s87 = sphi 0, %s85
      %s88 = sphi 0, %s87
      %s102 = sphi 0, %s88
      %s106 = sphi 0, %s106
      %s108 = sphi 0, %s106
      %s109 = sphi 0, %s108
      %s123 = sphi 0, %s109
      %s127 = sphi 0, %s127
      %s129 = sphi 0, %s127
      %s130 = sphi 0, %s129
      %s144 = sphi 0, %s130
      %s148 = sphi 0, %s148
      %s150 = sphi 0, %s148
      %s151 = sphi 0, %s150
      %s165 = sphi 0, %s151
      %s173 = sphi 0, %s175
      %s176 = sphi 0, %s173
      %s177 = sphi 0, %s176
      %s193 = sphi 0, %s177
    $region4: #{tpu_custom_call.1} parent=1 // loop_header_branch
      %19 = sbr.rel (%p17) target = $region8
    $region5: #{tpu_custom_call.1} parent=1 // loop_body
      %s21 = ssub.s32 %s16, 1
      %s22 = ssub.s32 %s16, 2
      %s29 = sadd.s32 1, %s24
      %p30 = scmp.ge.s32.totalorder %s29, 2
      %s31 = scalar_select %p30, 0, %s29
      %s32 = sadd.s32 1, %s23
      %s33 = scalar_select %p30, %s32, %s23
      %p34 = scmp.ge.s32.totalorder %s33, 2
      %s35 = scalar_select %p34, 0, %s33
      %s36 = ssub.s32 %s23, %s35
      %s37 = ssub.s32 %s24, %s31
      %s38 = sor.u32 %s36, %s37
      %p39 = scmp.eq.s32.totalorder %s38, 0
      %s41 = sadd.s32 %s40, 1
      %s42 = scalar_select %p39, %s40, %s41
      %p45 = pneg %p39
      %p46 = scmp.eq.s32.totalorder %s16, 3
      %p47 = por %p45, %p46
      %p48 = scmp.ne.s32.totalorder %s40, %s43
      %p49 = scmp.eq.s32.totalorder %s16, 0
      %p50 = por %p48, %p49
      %p51 = scmp.ne.s32.totalorder %s40, %s43
      %p52 = scmp.eq.s32.totalorder %s21, 3
      %p53 = por %p51, %p52
      %p54 = scmp.ne.s32.totalorder %s43, %s44
      %p55 = scmp.eq.s32.totalorder %s21, 0
      %p56 = por %p54, %p55
      %p57 = scmp.ne.s32.totalorder %s43, %s44
      %p58 = scmp.eq.s32.totalorder %s22, 3
      %p59 = por %p57, %p58
      %p61 = scmp.ne.s32.totalorder %s44, %s60
      %p62 = scmp.eq.s32.totalorder %s22, 0
      %p63 = por %p61, %p62
      %s65 = sadd.s32 %s64, 1
      %p68 = scmp.eq.s32.totalorder %s16, 3
      %p69 = scmp.ne.s32.totalorder %s64, %s66
      %p70 = scmp.eq.s32.totalorder %s16, 0
      %p71 = por %p69, %p70
      %p72 = scmp.ne.s32.totalorder %s64, %s66
      %p73 = scmp.eq.s32.totalorder %s21, 3
      %p74 = por %p72, %p73
      %p75 = scmp.ne.s32.totalorder %s66, %s67
      %p76 = scmp.eq.s32.totalorder %s21, 0
      %p77 = por %p75, %p76
      %p78 = scmp.ne.s32.totalorder %s66, %s67
      %p79 = scmp.eq.s32.totalorder %s22, 3
      %p80 = por %p78, %p79
      %p82 = scmp.ne.s32.totalorder %s67, %s81
      %p83 = scmp.eq.s32.totalorder %s22, 0
      %p84 = por %p82, %p83
      %s86 = sadd.s32 %s85, 1
      %p89 = scmp.eq.s32.totalorder %s16, 3
      %p90 = scmp.ne.s32.totalorder %s85, %s87
      %p91 = scmp.eq.s32.totalorder %s16, 0
      %p92 = por %p90, %p91
      %p93 = scmp.ne.s32.totalorder %s85, %s87
      %p94 = scmp.eq.s32.totalorder %s21, 3
      %p95 = por %p93, %p94
      %p96 = scmp.ne.s32.totalorder %s87, %s88
      %p97 = scmp.eq.s32.totalorder %s21, 0
      %p98 = por %p96, %p97
      %p99 = scmp.ne.s32.totalorder %s87, %s88
      %p100 = scmp.eq.s32.totalorder %s22, 3
      %p101 = por %p99, %p100
      %p103 = scmp.ne.s32.totalorder %s88, %s102
      %p104 = scmp.eq.s32.totalorder %s22, 0
      %p105 = por %p103, %p104
      %s107 = sadd.s32 %s106, 1
      %p110 = scmp.eq.s32.totalorder %s16, 3
      %p111 = scmp.ne.s32.totalorder %s106, %s108
      %p112 = scmp.eq.s32.totalorder %s16, 0
      %p113 = por %p111, %p112
      %p114 = scmp.ne.s32.totalorder %s106, %s108
      %p115 = scmp.eq.s32.totalorder %s21, 3
      %p116 = por %p114, %p115
      %p117 = scmp.ne.s32.totalorder %s108, %s109
      %p118 = scmp.eq.s32.totalorder %s21, 0
      %p119 = por %p117, %p118
      %p120 = scmp.ne.s32.totalorder %s108, %s109
      %p121 = scmp.eq.s32.totalorder %s22, 3
      %p122 = por %p120, %p121
      %p124 = scmp.ne.s32.totalorder %s109, %s123
      %p125 = scmp.eq.s32.totalorder %s22, 0
      %p126 = por %p124, %p125
      %s128 = sadd.s32 %s127, 1
      %p131 = scmp.eq.s32.totalorder %s16, 3
      %p132 = scmp.ne.s32.totalorder %s127, %s129
      %p133 = scmp.eq.s32.totalorder %s16, 0
      %p134 = por %p132, %p133
      %p135 = scmp.ne.s32.totalorder %s127, %s129
      %p136 = scmp.eq.s32.totalorder %s21, 3
      %p137 = por %p135, %p136
      %p138 = scmp.ne.s32.totalorder %s129, %s130
      %p139 = scmp.eq.s32.totalorder %s21, 0
      %p140 = por %p138, %p139
      %p141 = scmp.ne.s32.totalorder %s129, %s130
      %p142 = scmp.eq.s32.totalorder %s22, 3
      %p143 = por %p141, %p142
      %p145 = scmp.ne.s32.totalorder %s130, %s144
      %p146 = scmp.eq.s32.totalorder %s22, 0
      %p147 = por %p145, %p146
      %s149 = sadd.s32 %s148, 1
      %p152 = scmp.eq.s32.totalorder %s16, 3
      %p153 = scmp.ne.s32.totalorder %s148, %s150
      %p154 = scmp.eq.s32.totalorder %s16, 0
      %p155 = por %p153, %p154
      %p156 = scmp.ne.s32.totalorder %s148, %s150
      %p157 = scmp.eq.s32.totalorder %s21, 3
      %p158 = por %p156, %p157
      %p159 = scmp.ne.s32.totalorder %s150, %s151
      %p160 = scmp.eq.s32.totalorder %s21, 0
      %p161 = por %p159, %p160
      %p162 = scmp.ne.s32.totalorder %s150, %s151
      %p163 = scmp.eq.s32.totalorder %s22, 3
      %p164 = por %p162, %p163
      %p166 = scmp.ne.s32.totalorder %s151, %s165
      %p167 = scmp.eq.s32.totalorder %s22, 0
      %p168 = por %p166, %p167
      %s169 = ssub.s32 %s23, %s35
      %s170 = ssub.s32 %s24, %s31
      %s171 = sor.u32 %s169, %s170
      %p172 = scmp.eq.s32.totalorder %s171, 0
      %s174 = sadd.s32 %s173, 1
      %s175 = scalar_select %p172, %s173, %s174
      %p178 = pneg %p172
      %p179 = scmp.eq.s32.totalorder %s16, 3
      %p180 = por %p178, %p179
      %p181 = scmp.ne.s32.totalorder %s173, %s176
      %p182 = scmp.eq.s32.totalorder %s16, 0
      %p183 = por %p181, %p182
      %p184 = scmp.ne.s32.totalorder %s173, %s176
      %p185 = scmp.eq.s32.totalorder %s21, 3
      %p186 = por %p184, %p185
      %p187 = scmp.ne.s32.totalorder %s176, %s177
      %p188 = scmp.eq.s32.totalorder %s21, 0
      %p189 = por %p187, %p188
      %p190 = scmp.ne.s32.totalorder %s176, %s177
      %p191 = scmp.eq.s32.totalorder %s22, 3
      %p192 = por %p190, %p191
      %p194 = scmp.ne.s32.totalorder %s177, %s193
      %p195 = scmp.eq.s32.totalorder %s22, 0
      %p196 = por %p194, %p195
      %p197 = scmp.le.s32.totalorder 1, %s16
      %p198 = scmp.lt.s32.totalorder %s16, 5
      %p199 = pnand %p197, %p198
      %p200 = pneg %p199
      // Predicated region
      $region9: #{tpu_custom_call.1} parent=5 // pred_check
        _
      $region10: #{tpu_custom_call.1} parent=5 // pred_check_branch
        %202 = sbr.rel (%p199) target = $region12
      $region11: #{tpu_custom_call.1} parent=5 // pred_region
        %s203 = ssub.s32 %s16, 1
        // Predicated region
        $region13: #{tpu_custom_call.1} parent=11 // pred_check
          %p204 = pneg %p77
        $region14: #{tpu_custom_call.1} parent=11 // pred_check_branch
          %206 = sbr.rel (%p204) target = $region16
        $region15: #{tpu_custom_call.1} parent=11 // pred_region
          _
        $region16: #{tpu_custom_call.1} parent=11 // pred_fallthru
          _
        // Predicated region
        $region17: #{tpu_custom_call.1} parent=11 // pred_check
          %p207 = pneg %p98
        $region18: #{tpu_custom_call.1} parent=11 // pred_check_branch
          %209 = sbr.rel (%p207) target = $region20
        $region19: #{tpu_custom_call.1} parent=11 // pred_region
          %s211 = ssub.s32 9216, 9216
          %212 = vsyncadd [#allocation4], %s211
          %s213 = sshll.u32 [#allocation3], 4
          %s214 = int_to_ptr.vmem [resolvable:$true] %s213
          %219 = dma.hbm_to_vmem [thread:$0]  %s2, 9216, %s214, [#allocation4], 64, 64, 4
        $region20: #{tpu_custom_call.1} parent=11 // pred_fallthru
          _
        // Predicated region
        $region21: #{tpu_custom_call.1} parent=11 // pred_check
          %p220 = pneg %p119
        $region22: #{tpu_custom_call.1} parent=11 // pred_check_branch
          %222 = sbr.rel (%p220) target = $region24
        $region23: #{tpu_custom_call.1} parent=11 // pred_region
          _
        $region24: #{tpu_custom_call.1} parent=11 // pred_fallthru
          _
        // Predicated region
        $region25: #{tpu_custom_call.1} parent=11 // pred_check
          %p223 = pneg %p140
        $region26: #{tpu_custom_call.1} parent=11 // pred_check_branch
          %225 = sbr.rel (%p223) target = $region28
        $region27: #{tpu_custom_call.1} parent=11 // pred_region
          _
        $region28: #{tpu_custom_call.1} parent=11 // pred_fallthru
          _
        // Predicated region
        $region29: #{tpu_custom_call.1} parent=11 // pred_check
          %p226 = pneg %p161
        $region30: #{tpu_custom_call.1} parent=11 // pred_check_branch
          %228 = sbr.rel (%p226) target = $region32
        $region31: #{tpu_custom_call.1} parent=11 // pred_region
          _
        $region32: #{tpu_custom_call.1} parent=11 // pred_fallthru
          _
      $region12: #{tpu_custom_call.1} parent=5 // pred_fallthru
        _
      %p229 = scmp.lt.s32.totalorder %s16, 4
      // Predicated region
      $region33: #{tpu_custom_call.1} parent=5 // pred_check
        %p230 = pneg %p229
      $region34: #{tpu_custom_call.1} parent=5 // pred_check_branch
        %232 = sbr.rel (%p230) target = $region36
      $region35: #{tpu_custom_call.1} parent=5 // pred_region
        // Predicated region
        $region37: #{tpu_custom_call.1} parent=35 // pred_check
          %p233 = pneg %p50
        $region38: #{tpu_custom_call.1} parent=35 // pred_check_branch
          %235 = sbr.rel (%p233) target = $region40
        $region39: #{tpu_custom_call.1} parent=35 // pred_region
          %p236 = scmp.lt.s32.totalorder %s23, 1
          %s237 = scalar_select %p236, %s23, 1
          %p238 = scmp.lt.s32.totalorder %s24, 1
          %s239 = scalar_select %p238, %s24, 1
          %s240 = smul.addr %s239, 30
          %s241 = smul.addr %s237, 60
          %s242 = sadd.s32 %s240, %s241
          %s243 = smul.addr %s242, 4
          %s244 = scalar_lea.vmem %s0, %s243
        $region40: #{tpu_custom_call.1} parent=35 // pred_fallthru
          _
      $region36: #{tpu_custom_call.1} parent=5 // pred_fallthru
        _
      %p245 = scmp.le.s32.totalorder 1, %s16
      %p246 = scmp.lt.s32.totalorder %s16, 5
      %p247 = pnand %p245, %p246
      %p248 = pneg %p247
      // Predicated region
      $region41: #{tpu_custom_call.1} parent=5 // pred_check
        _
      $region42: #{tpu_custom_call.1} parent=5 // pred_check_branch
        %250 = sbr.rel (%p247) target = $region44
      $region43: #{tpu_custom_call.1} parent=5 // pred_region
        %s251 = ssub.s32 %s16, 1
        // Predicated region
        $region45: #{tpu_custom_call.1} parent=43 // pred_check
          %p252 = pneg %p98
        $region46: #{tpu_custom_call.1} parent=43 // pred_check_branch
          %254 = sbr.rel (%p252) target = $region48
        $region47: #{tpu_custom_call.1} parent=43 // pred_region
          %255 = dma.done [#allocation4], 9216
        $region48: #{tpu_custom_call.1} parent=43 // pred_fallthru
          _
        %p256 = scmp.lt.s32.totalorder %s25, 1
        %s257 = scalar_select %p256, %s25, 1
        %p258 = scmp.lt.s32.totalorder %s26, 1
        %s259 = scalar_select %p258, %s26, 1
        %s260 = smul.addr %s259, 30
        %s261 = smul.addr %s257, 60
        %s262 = sadd.s32 %s260, %s261
        %s263 = smul.addr %s262, 4
        %s264 = scalar_lea.vmem %s0, %s263
        %p265 = pneg %p56
        %p266 = pneg %p53
        %p267 = pneg %p77
        %p268 = pneg %p74
        %p269 = pneg %p98
        %p270 = pneg %p95
        %p271 = pneg %p119
        %p272 = pneg %p116
        %p273 = pneg %p140
        %p274 = pneg %p137
        %p275 = pneg %p161
        %p276 = pneg %p158
        %p277 = pneg %p189
        %p278 = pneg %p186
        %s279 = sand.u32 %s176, 1
        %s280 = scalar_lea.sflag [#allocation5], %s279
        %s281 = sand.u32 %s176, 1
        %s282 = smul.addr %s281, 160
        %s283 = scalar_lea.vmem [#allocation6], %s282
        %p284 = scmp.lt.s32.totalorder %s25, 1
        %s285 = scalar_select %p284, %s25, 1
        %p286 = scmp.lt.s32.totalorder %s26, 1
        %s287 = scalar_select %p286, %s26, 1
        %s288 = smul.addr %s287, 30
        %s289 = smul.addr %s285, 60
        %s290 = sadd.s32 %s288, %s289
        %s291 = smul.addr %s290, 4
        %s292 = scalar_lea.vmem %s0, %s291
        %v294 = vld [vmem:[%s292] sm:$0xf]
        %v295 = vld [vmem:[%s292 + $0x4] sm:$0xf]
        %v296 = vld [vmem:[%s292 + $0x8] sm:$0xf]
        %v297 = vld [vmem:[%s292 + $0xc] sm:$0xf]
        %v298 = vld [vmem:[%s292 + $0x10] sm:$0xf]
        %v299 = vld [vmem:[%s292 + $0x14] sm:$0xf]
        %v300 = vld [vmem:[%s292 + $0x18] sm:$0xf]
        %v301 = vld [vmem:[%s292 + $0x1c] sm:$0xf]
        %v302 = vld [vmem:[%s292 + $0x20] sm:$0xf]
        %v303 = vld [vmem:[%s292 + $0x24] sm:$0xf]
        %v304 = vld [vmem:[%s292 + $0x28] sm:$0xf]
        %v305 = vld [vmem:[%s292 + $0x2c] sm:$0xf]
        %v306 = vld [vmem:[%s292 + $0x30] sm:$0xf]
        %v307 = vld [vmem:[%s292 + $0x34] sm:$0xf]
        %v308 = vld [vmem:[%s292 + $0x38] sm:$0xf]
        %v309 = vld [vmem:[%s292 + $0x3c] sm:$0xf]
        %v310 = vld [vmem:[%s292 + $0x40] sm:$0xf]
        %v311 = vld [vmem:[%s292 + $0x44] sm:$0xf]
        %v312 = vld [vmem:[%s292 + $0x48] sm:$0xf]
        %v313 = vld [vmem:[%s292 + $0x4c] sm:$0xf]
        %v314 = vld [vmem:[%s292 + $0x50] sm:$0xf]
        %v315 = vld [vmem:[%s292 + $0x54] sm:$0xf]
        %v316 = vld [vmem:[%s292 + $0x58] sm:$0xf]
        %v317 = vld [vmem:[%s292 + $0x5c] sm:$0xf]
        %v318 = vld [vmem:[%s292 + $0x60] sm:$0xf]
        %v319 = vld [vmem:[%s292 + $0x64] sm:$0xf]
        %v320 = vld [vmem:[%s292 + $0x68] sm:$0xf]
        %v321 = vld [vmem:[%s292 + $0x6c] sm:$0xf]
        %v322 = vld [vmem:[%s292 + $0x70] sm:$0xf]
        %v323 = vld [vmem:[%s292 + $0x74] sm:$0xf]
        %v324 = vld [vmem:[%s1] sm:$0xf]
        %v325 = vld [vmem:[%s1 + $0x4] sm:$0x1]
        %v356 = vunpack.c.l.b16 %v294
        %v357 = vunpack.c.l.b16 %v295
        %v358 = vunpack.c.l.b16 %v296
        %v359 = vunpack.c.l.b16 %v297
        %v360 = vunpack.c.l.b16 %v298
        %v361 = vunpack.c.l.b16 %v299
        %v362 = vunpack.c.l.b16 %v300
        %v363 = vunpack.c.l.b16 %v301
        %v364 = vunpack.c.l.b16 %v302
        %v365 = vunpack.c.l.b16 %v303
        %v366 = vunpack.c.l.b16 %v304
        %v367 = vunpack.c.l.b16 %v305
        %v368 = vunpack.c.l.b16 %v306
        %v369 = vunpack.c.l.b16 %v307
        %v370 = vunpack.c.l.b16 %v308
        %v371 = vunpack.c.l.b16 %v309
        %v372 = vunpack.c.l.b16 %v310
        %v373 = vunpack.c.l.b16 %v311
        %v374 = vunpack.c.l.b16 %v312
        %v375 = vunpack.c.l.b16 %v313
        %v376 = vunpack.c.l.b16 %v314
        %v377 = vunpack.c.l.b16 %v315
        %v378 = vunpack.c.l.b16 %v316
        %v379 = vunpack.c.l.b16 %v317
        %v380 = vunpack.c.l.b16 %v318
        %v381 = vunpack.c.l.b16 %v319
        %v382 = vunpack.c.l.b16 %v320
        %v383 = vunpack.c.l.b16 %v321
        %v384 = vunpack.c.l.b16 %v322
        %v385 = vunpack.c.l.b16 %v323
        %v386 = vpack.c.b16 %v357, %v356
        %v387 = vpack.c.b16 %v359, %v358
        %v388 = vpack.c.b16 %v361, %v360
        %v389 = vpack.c.b16 %v363, %v362
        %v390 = vpack.c.b16 %v365, %v364
        %v391 = vpack.c.b16 %v367, %v366
        %v392 = vpack.c.b16 %v369, %v368
        %v393 = vpack.c.b16 %v371, %v370
        %v394 = vpack.c.b16 %v373, %v372
        %v395 = vpack.c.b16 %v375, %v374
        %v396 = vpack.c.b16 %v377, %v376
        %v397 = vpack.c.b16 %v379, %v378
        %v398 = vpack.c.b16 %v381, %v380
        %v399 = vpack.c.b16 %v383, %v382
        %v400 = vpack.c.b16 %v385, %v384
        %v403 = vunpack.c.l.b16 %v324
        %v404 = vunpack.c.l.b16 %v325
        %v405 = vpack.c.b16 %v404, %v403
        %vm406 = vcmask 72704
        %v408 = vsel %vm406, %v386, 0
        %v411 = vsel %vm406, %v387, 0
        %v414 = vsel %vm406, %v388, 0
        %v417 = vsel %vm406, %v389, 0
        %v420 = vsel %vm406, %v390, 0
        %v423 = vsel %vm406, %v391, 0
        %v426 = vsel %vm406, %v392, 0
        %v429 = vsel %vm406, %v393, 0
        %v432 = vsel %vm406, %v394, 0
        %v435 = vsel %vm406, %v395, 0
        %v438 = vsel %vm406, %v396, 0
        %v441 = vsel %vm406, %v397, 0
        %v444 = vsel %vm406, %v398, 0
        %v447 = vsel %vm406, %v399, 0
        %v450 = vsel %vm406, %v400, 0
        %vm452 = vcmask 1043456
        %vm453 = vcmask 1044480
        %v454 = vsel %vm452, 4294967295, 65535
        %v455 = vsel %vm453, %v454, 0
        %v457 = vand.u32 %v405, %v455
        %459 = vmatprep.subr.bf16.mxu0 0
        %460 = vmatpush1.bf16.msra.mxu0 %v457
        %461 = vmatprep.subr.bf16.mxu0 0
        %462 = vmatpush1.bf16.msra.mxu0 0
        %463 = vmatprep.subr.bf16.mxu0 0
        %464 = vmatpush1.bf16.msra.mxu0 0
        %465 = vmatprep.subr.bf16.mxu0 0
        %466 = vmatpush1.bf16.msra.mxu0 0
        %467 = vmatprep.subr.bf16.mxu0 0
        %468 = vmatpush1.bf16.msra.mxu0 0
        %469 = vmatprep.subr.bf16.mxu0 0
        %470 = vmatpush1.bf16.msra.mxu0 0
        %471 = vmatprep.subr.bf16.mxu0 0
        %472 = vmatpush1.bf16.msra.mxu0 0
        %473 = vmatprep.subr.bf16.mxu0 0
        %474 = vmatpush1.bf16.msra.mxu0 0
        %475 = vmatprep.subr.bf16.mxu0 0
        %476 = vmatpush1.bf16.msra.mxu0 0
        %477 = vmatprep.subr.bf16.mxu0 0
        %478 = vmatpush1.bf16.msra.mxu0 0
        %479 = vmatprep.subr.bf16.mxu0 0
        %480 = vmatpush1.bf16.msra.mxu0 0
        %481 = vmatprep.subr.bf16.mxu0 0
        %482 = vmatpush1.bf16.msra.mxu0 0
        %483 = vmatprep.subr.bf16.mxu0 0
        %484 = vmatpush1.bf16.msra.mxu0 0
        %485 = vmatprep.subr.bf16.mxu0 0
        %486 = vmatpush1.bf16.msra.mxu0 0
        %487 = vmatprep.subr.bf16.mxu0 0
        %488 = vmatpush1.bf16.msra.mxu0 0
        %489 = vmatprep.subr.bf16.mxu0 0
        %490 = vmatpush1.bf16.msra.mxu0 0
        %491 = vmatprep.mubr.bf16.mxu0 0
        %492 = vmatmul.mubr.bf16.gmra.mrb[0].mxu0 %v408
        %v493 = vpop.f32.mrb[0].mxu0
        %v494 = vadd.f32 0.0, %v493
        %v495 = vpop.f32.mrb[0].mxu0
        %v496 = vpop.f32.mrb[0].mxu0
        %v497 = vadd.f32 0.0, %v496
        %v498 = vpop.f32.mrb[0].mxu0
        %499 = vmatprep.mubr.bf16.mxu0 0
        %500 = vmatmul.mubr.bf16.gmra.mrb[0].mxu0 %v411
        %v501 = vpop.f32.mrb[0].mxu0
        %v502 = vadd.f32 0.0, %v501
        %v503 = vpop.f32.mrb[0].mxu0
        %v504 = vpop.f32.mrb[0].mxu0
        %v505 = vadd.f32 0.0, %v504
        %v506 = vpop.f32.mrb[0].mxu0
        %507 = vmatprep.mubr.bf16.mxu0 0
        %508 = vmatmul.mubr.bf16.gmra.mrb[0].mxu0 %v414
        %v509 = vpop.f32.mrb[0].mxu0
        %v510 = vadd.f32 0.0, %v509
        %v511 = vpop.f32.mrb[0].mxu0
        %v512 = vpop.f32.mrb[0].mxu0
        %v513 = vadd.f32 0.0, %v512
        %v514 = vpop.f32.mrb[0].mxu0
        %515 = vmatprep.mubr.bf16.mxu0 0
        %516 = vmatmul.mubr.bf16.gmra.mrb[0].mxu0 %v417
        %v517 = vpop.f32.mrb[0].mxu0
        %v518 = vadd.f32 0.0, %v517
        %v519 = vpop.f32.mrb[0].mxu0
        %v520 = vpop.f32.mrb[0].mxu0
        %v521 = vadd.f32 0.0, %v520
        %v522 = vpop.f32.mrb[0].mxu0
        %523 = vmatprep.mubr.bf16.mxu0 0
        %524 = vmatmul.mubr.bf16.gmra.mrb[0].mxu0 %v420
        %v525 = vpop.f32.mrb[0].mxu0
        %v526 = vadd.f32 0.0, %v525
        %v527 = vpop.f32.mrb[0].mxu0
        %v528 = vpop.f32.mrb[0].mxu0
        %v529 = vadd.f32 0.0, %v528
        %v530 = vpop.f32.mrb[0].mxu0
        %531 = vmatprep.mubr.bf16.mxu0 0
        %532 = vmatmul.mubr.bf16.gmra.mrb[0].mxu0 %v423
        %v533 = vpop.f32.mrb[0].mxu0
        %v534 = vadd.f32 0.0, %v533
        %v535 = vpop.f32.mrb[0].mxu0
        %v536 = vpop.f32.mrb[0].mxu0
        %v537 = vadd.f32 0.0, %v536
        %v538 = vpop.f32.mrb[0].mxu0
        %539 = vmatprep.mubr.bf16.mxu0 0
        %540 = vmatmul.mubr.bf16.gmra.mrb[0].mxu0 %v426
        %v541 = vpop.f32.mrb[0].mxu0
        %v542 = vadd.f32 0.0, %v541
        %v543 = vpop.f32.mrb[0].mxu0
        %v544 = vpop.f32.mrb[0].mxu0
        %v545 = vadd.f32 0.0, %v544
        %v546 = vpop.f32.mrb[0].mxu0
        %547 = vmatprep.mubr.bf16.mxu0 0
        %548 = vmatmul.mubr.bf16.gmra.mrb[0].mxu0 %v429
        %v549 = vpop.f32.mrb[0].mxu0
        %v550 = vadd.f32 0.0, %v549
        %v551 = vpop.f32.mrb[0].mxu0
        %v552 = vpop.f32.mrb[0].mxu0
        %v553 = vadd.f32 0.0, %v552
        %v554 = vpop.f32.mrb[0].mxu0
        %555 = vmatprep.mubr.bf16.mxu0 0
        %556 = vmatmul.mubr.bf16.gmra.mrb[0].mxu0 %v432
        %v557 = vpop.f32.mrb[0].mxu0
        %v558 = vadd.f32 0.0, %v557
        %v559 = vpop.f32.mrb[0].mxu0
        %v560 = vpop.f32.mrb[0].mxu0
        %v561 = vadd.f32 0.0, %v560
        %v562 = vpop.f32.mrb[0].mxu0
        %563 = vmatprep.mubr.bf16.mxu0 0
        %564 = vmatmul.mubr.bf16.gmra.mrb[0].mxu0 %v435
        %v565 = vpop.f32.mrb[0].mxu0
        %v566 = vadd.f32 0.0, %v565
        %v567 = vpop.f32.mrb[0].mxu0
        %v568 = vpop.f32.mrb[0].mxu0
        %v569 = vadd.f32 0.0, %v568
        %v570 = vpop.f32.mrb[0].mxu0
        %571 = vmatprep.mubr.bf16.mxu0 0
        %572 = vmatmul.mubr.bf16.gmra.mrb[0].mxu0 %v438
        %v573 = vpop.f32.mrb[0].mxu0
        %v574 = vadd.f32 0.0, %v573
        %v575 = vpop.f32.mrb[0].mxu0
        %v576 = vpop.f32.mrb[0].mxu0
        %v577 = vadd.f32 0.0, %v576
        %v578 = vpop.f32.mrb[0].mxu0
        %579 = vmatprep.mubr.bf16.mxu0 0
        %580 = vmatmul.mubr.bf16.gmra.mrb[0].mxu0 %v441
        %v581 = vpop.f32.mrb[0].mxu0
        %v582 = vadd.f32 0.0, %v581
        %v583 = vpop.f32.mrb[0].mxu0
        %v584 = vpop.f32.mrb[0].mxu0
        %v585 = vadd.f32 0.0, %v584
        %v586 = vpop.f32.mrb[0].mxu0
        %587 = vmatprep.mubr.bf16.mxu0 0
        %588 = vmatmul.mubr.bf16.gmra.mrb[0].mxu0 %v444
        %v589 = vpop.f32.mrb[0].mxu0
        %v590 = vadd.f32 0.0, %v589
        %v591 = vpop.f32.mrb[0].mxu0
        %v592 = vpop.f32.mrb[0].mxu0
        %v593 = vadd.f32 0.0, %v592
        %v594 = vpop.f32.mrb[0].mxu0
        %595 = vmatprep.mubr.bf16.mxu0 0
        %596 = vmatmul.mubr.bf16.gmra.mrb[0].mxu0 %v447
        %v597 = vpop.f32.mrb[0].mxu0
        %v598 = vadd.f32 0.0, %v597
        %v599 = vpop.f32.mrb[0].mxu0
        %v600 = vpop.f32.mrb[0].mxu0
        %v601 = vadd.f32 0.0, %v600
        %v602 = vpop.f32.mrb[0].mxu0
        %603 = vmatprep.mubr.bf16.mxu0 0
        %604 = vmatmul.mubr.bf16.gmra.mrb[0].mxu0 %v450
        %v605 = vpop.f32.mrb[0].mxu0
        %v606 = vadd.f32 0.0, %v605
        %v607 = vpop.f32.mrb[0].mxu0
        %v608 = vpop.f32.mrb[0].mxu0
        %v609 = vadd.f32 0.0, %v608
        %v610 = vpop.f32.mrb[0].mxu0
        %611 = vdwg.mxu0
        %v612 = vmax.f32 %v494, 0.0
        %v613 = vmax.f32 %v497, 0.0
        %v614 = vmax.f32 %v502, 0.0
        %v615 = vmax.f32 %v505, 0.0
        %v616 = vmax.f32 %v510, 0.0
        %v617 = vmax.f32 %v513, 0.0
        %v618 = vmax.f32 %v518, 0.0
        %v619 = vmax.f32 %v521, 0.0
        %v620 = vmax.f32 %v526, 0.0
        %v621 = vmax.f32 %v529, 0.0
        %v622 = vmax.f32 %v534, 0.0
        %v623 = vmax.f32 %v537, 0.0
        %v624 = vmax.f32 %v542, 0.0
        %v625 = vmax.f32 %v545, 0.0
        %v626 = vmax.f32 %v550, 0.0
        %v627 = vmax.f32 %v553, 0.0
        %v628 = vmax.f32 %v558, 0.0
        %v629 = vmax.f32 %v561, 0.0
        %v630 = vmax.f32 %v566, 0.0
        %v631 = vmax.f32 %v569, 0.0
        %v632 = vmax.f32 %v574, 0.0
        %v633 = vmax.f32 %v577, 0.0
        %v634 = vmax.f32 %v582, 0.0
        %v635 = vmax.f32 %v585, 0.0
        %v636 = vmax.f32 %v590, 0.0
        %v637 = vmax.f32 %v593, 0.0
        %v638 = vmax.f32 %v598, 0.0
        %v639 = vmax.f32 %v601, 0.0
        %v640 = vmax.f32 %v606, 0.0
        %v641 = vmax.f32 %v609, 0.0
        %v642 = vpack.c.bf16 %v613, %v612
        %v643 = vpack.c.bf16 %v615, %v614
        %v644 = vpack.c.bf16 %v617, %v616
        %v645 = vpack.c.bf16 %v619, %v618
        %v646 = vpack.c.bf16 %v621, %v620
        %v647 = vpack.c.bf16 %v623, %v622
        %v648 = vpack.c.bf16 %v625, %v624
        %v649 = vpack.c.bf16 %v627, %v626
        %v650 = vpack.c.bf16 %v629, %v628
        %v651 = vpack.c.bf16 %v631, %v630
        %v652 = vpack.c.bf16 %v633, %v632
        %v653 = vpack.c.bf16 %v635, %v634
        %v654 = vpack.c.bf16 %v637, %v636
        %v655 = vpack.c.bf16 %v639, %v638
        %v656 = vpack.c.bf16 %v641, %v640
        %657 = vst [vmem:[#allocation2 + $0x8] sm:$0xff] %v642
        %658 = vst [vmem:[#allocation2 + $0x10] sm:$0xff] %v643
        %659 = vst [vmem:[#allocation2 + $0x18] sm:$0xff] %v644
        %660 = vst [vmem:[#allocation2 + $0x20] sm:$0xff] %v645
        %661 = vst [vmem:[#allocation2 + $0x28] sm:$0xff] %v646
        %662 = vst [vmem:[#allocation2 + $0x30] sm:$0xff] %v647
        %663 = vst [vmem:[#allocation2 + $0x38] sm:$0xff] %v648
        %664 = vst [vmem:[#allocation2 + $0x40] sm:$0xff] %v649
        %665 = vst [vmem:[#allocation2 + $0x48] sm:$0xff] %v650
        %666 = vst [vmem:[#allocation2 + $0x50] sm:$0xff] %v651
        %667 = vst [vmem:[#allocation2 + $0x58] sm:$0xff] %v652
        %668 = vst [vmem:[#allocation2 + $0x60] sm:$0xff] %v653
        %669 = vst [vmem:[#allocation2 + $0x68] sm:$0xff] %v654
        %670 = vst [vmem:[#allocation2 + $0x70] sm:$0xff] %v655
        %671 = vst [vmem:[#allocation2 + $0x78] sm:$0xff] %v656
        %672 = vst [vmem:[#allocation2] sm:$0xff] 0
        %673 = vst [vmem:[#allocation2 + $0x80] sm:$0xff] 0
        %v674 = vld [vmem:[#allocation2] sm:$0x80]
        %v675 = vld [vmem:[#allocation2 + $0x8] sm:$0xff]
        %v676 = vld [vmem:[#allocation2 + $0x10] sm:$0xff]
        %v677 = vld [vmem:[#allocation2 + $0x18] sm:$0xff]
        %v678 = vld [vmem:[#allocation2 + $0x20] sm:$0xff]
        %v679 = vld [vmem:[#allocation2 + $0x28] sm:$0xff]
        %v680 = vld [vmem:[#allocation2 + $0x30] sm:$0xff]
        %v681 = vld [vmem:[#allocation2 + $0x38] sm:$0xff]
        %v682 = vld [vmem:[#allocation2 + $0x40] sm:$0xff]
        %v683 = vld [vmem:[#allocation2 + $0x48] sm:$0xff]
        %v684 = vld [vmem:[#allocation2 + $0x50] sm:$0x7f]
        %v685 = vld [vmem:[#allocation3] sm:$0xf]
        %v686 = vld [vmem:[#allocation3 + $0x4] sm:$0xf]
        %v687 = vld [vmem:[#allocation3 + $0x8] sm:$0xf]
        %v688 = vld [vmem:[#allocation3 + $0xc] sm:$0xf]
        %v689 = vld [vmem:[#allocation3 + $0x10] sm:$0xf]
        %v690 = vld [vmem:[#allocation3 + $0x14] sm:$0xf]
        %v691 = vld [vmem:[#allocation3 + $0x18] sm:$0xf]
        %v692 = vld [vmem:[#allocation3 + $0x1c] sm:$0xf]
        %v693 = vld [vmem:[#allocation3 + $0x20] sm:$0xf]
        %v694 = vld [vmem:[#allocation3 + $0x24] sm:$0xf]
        %v695 = vld [vmem:[#allocation3 + $0x28] sm:$0xf]
        %v696 = vld [vmem:[#allocation3 + $0x2c] sm:$0xf]
        %v697 = vld [vmem:[#allocation3 + $0x30] sm:$0xf]
        %v698 = vld [vmem:[#allocation3 + $0x34] sm:$0xf]
        %v699 = vld [vmem:[#allocation3 + $0x38] sm:$0xf]
        %v700 = vld [vmem:[#allocation3 + $0x3c] sm:$0xf]
        %v701 = vld [vmem:[#allocation2 + $0x50] sm:$0xff]
        %s702 = scalar_lea.vmem [#allocation3], 64
        %v703 = vld [vmem:[%s702] sm:$0xf]
        %v704 = vld [vmem:[%s702 + $0x4] sm:$0xf]
        %v705 = vld [vmem:[%s702 + $0x8] sm:$0xf]
        %v706 = vld [vmem:[%s702 + $0xc] sm:$0xf]
        %v707 = vld [vmem:[%s702 + $0x10] sm:$0xf]
        %v708 = vld [vmem:[%s702 + $0x14] sm:$0xf]
        %v709 = vld [vmem:[%s702 + $0x18] sm:$0xf]
        %v710 = vld [vmem:[%s702 + $0x1c] sm:$0xf]
        %v711 = vld [vmem:[%s702 + $0x20] sm:$0xf]
        %v712 = vld [vmem:[%s702 + $0x24] sm:$0xf]
        %v713 = vld [vmem:[%s702 + $0x28] sm:$0xf]
        %v714 = vld [vmem:[%s702 + $0x2c] sm:$0xf]
        %v715 = vld [vmem:[%s702 + $0x30] sm:$0xf]
        %v716 = vld [vmem:[%s702 + $0x34] sm:$0xf]
        %v717 = vld [vmem:[%s702 + $0x38] sm:$0xf]
        %v718 = vld [vmem:[%s702 + $0x3c] sm:$0xf]
        %v735 = vunpack.c.l.b16 %v703
        %v736 = vunpack.c.l.b16 %v704
        %v737 = vunpack.c.l.b16 %v705
        %v738 = vunpack.c.l.b16 %v706
        %v739 = vunpack.c.l.b16 %v707
        %v740 = vunpack.c.l.b16 %v708
        %v741 = vunpack.c.l.b16 %v709
        %v742 = vunpack.c.l.b16 %v710
        %v743 = vunpack.c.l.b16 %v711
        %v744 = vunpack.c.l.b16 %v712
        %v745 = vunpack.c.l.b16 %v713
        %v746 = vunpack.c.l.b16 %v714
        %v747 = vunpack.c.l.b16 %v715
        %v748 = vunpack.c.l.b16 %v716
        %v749 = vunpack.c.l.b16 %v717
        %v750 = vunpack.c.l.b16 %v718
        %v751 = vpack.c.b16 %v736, %v735
        %v752 = vpack.c.b16 %v738, %v737
        %v753 = vpack.c.b16 %v740, %v739
        %v754 = vpack.c.b16 %v742, %v741
        %v755 = vpack.c.b16 %v744, %v743
        %v756 = vpack.c.b16 %v746, %v745
        %v757 = vpack.c.b16 %v748, %v747
        %v758 = vpack.c.b16 %v750, %v749
        %767 = vmatprep.subr.bf16.mxu0 0
        %768 = vmatpush1.bf16.msra.mxu0 %v751
        %769 = vmatprep.subr.bf16.mxu0 0
        %770 = vmatpush1.bf16.msra.mxu0 %v752
        %771 = vmatprep.subr.bf16.mxu0 0
        %772 = vmatpush1.bf16.msra.mxu0 %v753
        %773 = vmatprep.subr.bf16.mxu0 0
        %774 = vmatpush1.bf16.msra.mxu0 %v754
        %775 = vmatprep.subr.bf16.mxu0 0
        %776 = vmatpush1.bf16.msra.mxu0 %v755
        %777 = vmatprep.subr.bf16.mxu0 0
        %778 = vmatpush1.bf16.msra.mxu0 %v756
        %779 = vmatprep.subr.bf16.mxu0 0
        %780 = vmatpush1.bf16.msra.mxu0 %v757
        %781 = vmatprep.subr.bf16.mxu0 0
        %782 = vmatpush1.bf16.msra.mxu0 %v758
        %783 = vmatprep.subr.bf16.mxu0 0
        %784 = vmatpush1.bf16.msra.mxu0 0
        %785 = vmatprep.subr.bf16.mxu0 0
        %786 = vmatpush1.bf16.msra.mxu0 0
        %787 = vmatprep.subr.bf16.mxu0 0
        %788 = vmatpush1.bf16.msra.mxu0 0
        %789 = vmatprep.subr.bf16.mxu0 0
        %790 = vmatpush1.bf16.msra.mxu0 0
        %791 = vmatprep.subr.bf16.mxu0 0
        %792 = vmatpush1.bf16.msra.mxu0 0
        %793 = vmatprep.subr.bf16.mxu0 0
        %794 = vmatpush1.bf16.msra.mxu0 0
        %795 = vmatprep.subr.bf16.mxu0 0
        %796 = vmatpush1.bf16.msra.mxu0 0
        %797 = vmatprep.subr.bf16.mxu0 0
        %798 = vmatpush1.bf16.msra.mxu0 0
        %799 = vmatprep.mubr.bf16.mxu0 0
        %800 = vmatmul.mubr.bf16.gmra.mrb[0].mxu0 %v675
        %v801 = vpop.f32.mrb[0].mxu0
        %v802 = vadd.f32 0.0, %v801
        %v803 = vpop.f32.mrb[0].mxu0
        %v804 = vpop.f32.mrb[0].mxu0
        %v805 = vadd.f32 0.0, %v804
        %v806 = vpop.f32.mrb[0].mxu0
        %807 = vmatprep.mubr.bf16.mxu0 0
        %808 = vmatmul.mubr.bf16.gmra.mrb[0].mxu0 %v676
        %v809 = vpop.f32.mrb[0].mxu0
        %v810 = vadd.f32 0.0, %v809
        %v811 = vpop.f32.mrb[0].mxu0
        %v812 = vpop.f32.mrb[0].mxu0
        %v813 = vadd.f32 0.0, %v812
        %v814 = vpop.f32.mrb[0].mxu0
        %815 = vmatprep.mubr.bf16.mxu0 0
        %816 = vmatmul.mubr.bf16.gmra.mrb[0].mxu0 %v677
        %v817 = vpop.f32.mrb[0].mxu0
        %v818 = vadd.f32 0.0, %v817
        %v819 = vpop.f32.mrb[0].mxu0
        %v820 = vpop.f32.mrb[0].mxu0
        %v821 = vadd.f32 0.0, %v820
        %v822 = vpop.f32.mrb[0].mxu0
        %823 = vmatprep.mubr.bf16.mxu0 0
        %824 = vmatmul.mubr.bf16.gmra.mrb[0].mxu0 %v678
        %v825 = vpop.f32.mrb[0].mxu0
        %v826 = vadd.f32 0.0, %v825
        %v827 = vpop.f32.mrb[0].mxu0
        %v828 = vpop.f32.mrb[0].mxu0
        %v829 = vadd.f32 0.0, %v828
        %v830 = vpop.f32.mrb[0].mxu0
        %831 = vmatprep.mubr.bf16.mxu0 0
        %832 = vmatmul.mubr.bf16.gmra.mrb[0].mxu0 %v679
        %v833 = vpop.f32.mrb[0].mxu0
        %v834 = vadd.f32 0.0, %v833
        %v835 = vpop.f32.mrb[0].mxu0
        %v836 = vpop.f32.mrb[0].mxu0
        %v837 = vadd.f32 0.0, %v836
        %v838 = vpop.f32.mrb[0].mxu0
        %839 = vmatprep.mubr.bf16.mxu0 0
        %840 = vmatmul.mubr.bf16.gmra.mrb[0].mxu0 %v680
        %v841 = vpop.f32.mrb[0].mxu0
        %v842 = vadd.f32 0.0, %v841
        %v843 = vpop.f32.mrb[0].mxu0
        %v844 = vpop.f32.mrb[0].mxu0
        %v845 = vadd.f32 0.0, %v844
        %v846 = vpop.f32.mrb[0].mxu0
        %847 = vmatprep.mubr.bf16.mxu0 0
        %848 = vmatmul.mubr.bf16.gmra.mrb[0].mxu0 %v681
        %v849 = vpop.f32.mrb[0].mxu0
        %v850 = vadd.f32 0.0, %v849
        %v851 = vpop.f32.mrb[0].mxu0
        %v852 = vpop.f32.mrb[0].mxu0
        %v853 = vadd.f32 0.0, %v852
        %v854 = vpop.f32.mrb[0].mxu0
        %855 = vmatprep.mubr.bf16.mxu0 0
        %856 = vmatmul.mubr.bf16.gmra.mrb[0].mxu0 %v682
        %v857 = vpop.f32.mrb[0].mxu0
        %v858 = vadd.f32 0.0, %v857
        %v859 = vpop.f32.mrb[0].mxu0
        %v860 = vpop.f32.mrb[0].mxu0
        %v861 = vadd.f32 0.0, %v860
        %v862 = vpop.f32.mrb[0].mxu0
        %863 = vmatprep.mubr.bf16.mxu0 0
        %864 = vmatmul.mubr.bf16.gmra.mrb[0].mxu0 %v683
        %v865 = vpop.f32.mrb[0].mxu0
        %v866 = vadd.f32 0.0, %v865
        %v867 = vpop.f32.mrb[0].mxu0
        %v868 = vpop.f32.mrb[0].mxu0
        %v869 = vadd.f32 0.0, %v868
        %v870 = vpop.f32.mrb[0].mxu0
        %871 = vmatprep.mubr.bf16.mxu0 0
        %872 = vmatmul.mubr.bf16.gmra.mrb[0].mxu0 %v701
        %v873 = vpop.f32.mrb[0].mxu0
        %v874 = vadd.f32 0.0, %v873
        %v875 = vpop.f32.mrb[0].mxu0
        %v876 = vpop.f32.mrb[0].mxu0
        %v877 = vadd.f32 0.0, %v876
        %v878 = vpop.f32.mrb[0].mxu0
        %879 = vdwg.mxu0
        %vm891 = vcmask 1040384
        %v892 = vrot.slane %v674, 7
        %v893 = vrot.slane %v675, 7
        %v894 = vsel %vm891, %v892, %v893
        %v895 = vrot.slane %v676, 7
        %v896 = vsel %vm891, %v893, %v895
        %v897 = vrot.slane %v677, 7
        %v898 = vsel %vm891, %v895, %v897
        %v899 = vrot.slane %v678, 7
        %v900 = vsel %vm891, %v897, %v899
        %v901 = vrot.slane %v679, 7
        %v902 = vsel %vm891, %v899, %v901
        %v903 = vrot.slane %v680, 7
        %v904 = vsel %vm891, %v901, %v903
        %v905 = vrot.slane %v681, 7
        %v906 = vsel %vm891, %v903, %v905
        %v907 = vrot.slane %v682, 7
        %v908 = vsel %vm891, %v905, %v907
        %v909 = vrot.slane %v683, 7
        %v910 = vsel %vm891, %v907, %v909
        %v911 = vrot.slane %v684, 7
        %v912 = vsel %vm891, %v909, %v911
        %v939 = vunpack.c.l.b16 %v685
        %v940 = vunpack.c.l.b16 %v686
        %v941 = vunpack.c.l.b16 %v687
        %v942 = vunpack.c.l.b16 %v688
        %v943 = vunpack.c.l.b16 %v689
        %v944 = vunpack.c.l.b16 %v690
        %v945 = vunpack.c.l.b16 %v691
        %v946 = vunpack.c.l.b16 %v692
        %v947 = vunpack.c.l.b16 %v693
        %v948 = vunpack.c.l.b16 %v694
        %v949 = vunpack.c.l.b16 %v695
        %v950 = vunpack.c.l.b16 %v696
        %v951 = vunpack.c.l.b16 %v697
        %v952 = vunpack.c.l.b16 %v698
        %v953 = vunpack.c.l.b16 %v699
        %v954 = vunpack.c.l.b16 %v700
        %v955 = vpack.c.b16 %v940, %v939
        %v956 = vpack.c.b16 %v942, %v941
        %v957 = vpack.c.b16 %v944, %v943
        %v958 = vpack.c.b16 %v946, %v945
        %v959 = vpack.c.b16 %v948, %v947
        %v960 = vpack.c.b16 %v950, %v949
        %v961 = vpack.c.b16 %v952, %v951
        %v962 = vpack.c.b16 %v954, %v953
        %971 = vmatprep.subr.bf16.mxu0 0
        %972 = vmatpush1.bf16.msra.mxu0 %v955
        %973 = vmatprep.subr.bf16.mxu0 0
        %974 = vmatpush1.bf16.msra.mxu0 %v956
        %975 = vmatprep.subr.bf16.mxu0 0
        %976 = vmatpush1.bf16.msra.mxu0 %v957
        %977 = vmatprep.subr.bf16.mxu0 0
        %978 = vmatpush1.bf16.msra.mxu0 %v958
        %979 = vmatprep.subr.bf16.mxu0 0
        %980 = vmatpush1.bf16.msra.mxu0 %v959
        %981 = vmatprep.subr.bf16.mxu0 0
        %982 = vmatpush1.bf16.msra.mxu0 %v960
        %983 = vmatprep.subr.bf16.mxu0 0
        %984 = vmatpush1.bf16.msra.mxu0 %v961
        %985 = vmatprep.subr.bf16.mxu0 0
        %986 = vmatpush1.bf16.msra.mxu0 %v962
        %987 = vmatprep.subr.bf16.mxu0 0
        %988 = vmatpush1.bf16.msra.mxu0 0
        %989 = vmatprep.subr.bf16.mxu0 0
        %990 = vmatpush1.bf16.msra.mxu0 0
        %991 = vmatprep.subr.bf16.mxu0 0
        %992 = vmatpush1.bf16.msra.mxu0 0
        %993 = vmatprep.subr.bf16.mxu0 0
        %994 = vmatpush1.bf16.msra.mxu0 0
        %995 = vmatprep.subr.bf16.mxu0 0
        %996 = vmatpush1.bf16.msra.mxu0 0
        %997 = vmatprep.subr.bf16.mxu0 0
        %998 = vmatpush1.bf16.msra.mxu0 0
        %999 = vmatprep.subr.bf16.mxu0 0
        %1000 = vmatpush1.bf16.msra.mxu0 0
        %1001 = vmatprep.subr.bf16.mxu0 0
        %1002 = vmatpush1.bf16.msra.mxu0 0
        %1003 = vmatprep.mubr.bf16.mxu0 0
        %1004 = vmatmul.mubr.bf16.gmra.mrb[0].mxu0 %v894
        %v1005 = vpop.f32.mrb[0].mxu0
        %v1006 = vadd.f32 %v802, %v1005
        %v1007 = vpop.f32.mrb[0].mxu0
        %v1008 = vpop.f32.mrb[0].mxu0
        %v1009 = vadd.f32 %v805, %v1008
        %v1010 = vpop.f32.mrb[0].mxu0
        %1011 = vmatprep.mubr.bf16.mxu0 0
        %1012 = vmatmul.mubr.bf16.gmra.mrb[0].mxu0 %v896
        %v1013 = vpop.f32.mrb[0].mxu0
        %v1014 = vadd.f32 %v810, %v1013
        %v1015 = vpop.f32.mrb[0].mxu0
        %v1016 = vpop.f32.mrb[0].mxu0
        %v1017 = vadd.f32 %v813, %v1016
        %v1018 = vpop.f32.mrb[0].mxu0
        %1019 = vmatprep.mubr.bf16.mxu0 0
        %1020 = vmatmul.mubr.bf16.gmra.mrb[0].mxu0 %v898
        %v1021 = vpop.f32.mrb[0].mxu0
        %v1022 = vadd.f32 %v818, %v1021
        %v1023 = vpop.f32.mrb[0].mxu0
        %v1024 = vpop.f32.mrb[0].mxu0
        %v1025 = vadd.f32 %v821, %v1024
        %v1026 = vpop.f32.mrb[0].mxu0
        %1027 = vmatprep.mubr.bf16.mxu0 0
        %1028 = vmatmul.mubr.bf16.gmra.mrb[0].mxu0 %v900
        %v1029 = vpop.f32.mrb[0].mxu0
        %v1030 = vadd.f32 %v826, %v1029
        %v1031 = vpop.f32.mrb[0].mxu0
        %v1032 = vpop.f32.mrb[0].mxu0
        %v1033 = vadd.f32 %v829, %v1032
        %v1034 = vpop.f32.mrb[0].mxu0
        %1035 = vmatprep.mubr.bf16.mxu0 0
        %1036 = vmatmul.mubr.bf16.gmra.mrb[0].mxu0 %v902
        %v1037 = vpop.f32.mrb[0].mxu0
        %v1038 = vadd.f32 %v834, %v1037
        %v1039 = vpop.f32.mrb[0].mxu0
        %v1040 = vpop.f32.mrb[0].mxu0
        %v1041 = vadd.f32 %v837, %v1040
        %v1042 = vpop.f32.mrb[0].mxu0
        %1043 = vmatprep.mubr.bf16.mxu0 0
        %1044 = vmatmul.mubr.bf16.gmra.mrb[0].mxu0 %v904
        %v1045 = vpop.f32.mrb[0].mxu0
        %v1046 = vadd.f32 %v842, %v1045
        %v1047 = vpop.f32.mrb[0].mxu0
        %v1048 = vpop.f32.mrb[0].mxu0
        %v1049 = vadd.f32 %v845, %v1048
        %v1050 = vpop.f32.mrb[0].mxu0
        %1051 = vmatprep.mubr.bf16.mxu0 0
        %1052 = vmatmul.mubr.bf16.gmra.mrb[0].mxu0 %v906
        %v1053 = vpop.f32.mrb[0].mxu0
        %v1054 = vadd.f32 %v850, %v1053
        %v1055 = vpop.f32.mrb[0].mxu0
        %v1056 = vpop.f32.mrb[0].mxu0
        %v1057 = vadd.f32 %v853, %v1056
        %v1058 = vpop.f32.mrb[0].mxu0
        %1059 = vmatprep.mubr.bf16.mxu0 0
        %1060 = vmatmul.mubr.bf16.gmra.mrb[0].mxu0 %v908
        %v1061 = vpop.f32.mrb[0].mxu0
        %v1062 = vadd.f32 %v858, %v1061
        %v1063 = vpop.f32.mrb[0].mxu0
        %v1064 = vpop.f32.mrb[0].mxu0
        %v1065 = vadd.f32 %v861, %v1064
        %v1066 = vpop.f32.mrb[0].mxu0
        %1067 = vmatprep.mubr.bf16.mxu0 0
        %1068 = vmatmul.mubr.bf16.gmra.mrb[0].mxu0 %v910
        %v1069 = vpop.f32.mrb[0].mxu0
        %v1070 = vadd.f32 %v866, %v1069
        %v1071 = vpop.f32.mrb[0].mxu0
        %v1072 = vpop.f32.mrb[0].mxu0
        %v1073 = vadd.f32 %v869, %v1072
        %v1074 = vpop.f32.mrb[0].mxu0
        %1075 = vmatprep.mubr.bf16.mxu0 0
        %1076 = vmatmul.mubr.bf16.gmra.mrb[0].mxu0 %v912
        %v1077 = vpop.f32.mrb[0].mxu0
        %v1078 = vadd.f32 %v874, %v1077
        %v1079 = vpop.f32.mrb[0].mxu0
        %v1080 = vpop.f32.mrb[0].mxu0
        %v1081 = vadd.f32 %v877, %v1080
        %v1082 = vpop.f32.mrb[0].mxu0
        %1083 = vdwg.mxu0
        %v1084 = vld [vmem:[#allocation2 + $0x8] sm:$0xfe]
        %v1085 = vld [vmem:[#allocation2 + $0x10] sm:$0xff]
        %v1086 = vld [vmem:[#allocation2 + $0x18] sm:$0xff]
        %v1087 = vld [vmem:[#allocation2 + $0x20] sm:$0xff]
        %v1088 = vld [vmem:[#allocation2 + $0x28] sm:$0xff]
        %v1089 = vld [vmem:[#allocation2 + $0x30] sm:$0xff]
        %v1090 = vld [vmem:[#allocation2 + $0x38] sm:$0xff]
        %v1091 = vld [vmem:[#allocation2 + $0x40] sm:$0xff]
        %v1092 = vld [vmem:[#allocation2 + $0x48] sm:$0xff]
        %v1093 = vld [vmem:[#allocation2 + $0x50] sm:$0xff]
        %v1094 = vld [vmem:[#allocation2 + $0x58] sm:$0x1]
        %s1095 = scalar_lea.vmem [#allocation3], 128
        %v1096 = vld [vmem:[%s1095] sm:$0xf]
        %v1097 = vld [vmem:[%s1095 + $0x4] sm:$0xf]
        %v1098 = vld [vmem:[%s1095 + $0x8] sm:$0xf]
        %v1099 = vld [vmem:[%s1095 + $0xc] sm:$0xf]
        %v1100 = vld [vmem:[%s1095 + $0x10] sm:$0xf]
        %v1101 = vld [vmem:[%s1095 + $0x14] sm:$0xf]
        %v1102 = vld [vmem:[%s1095 + $0x18] sm:$0xf]
        %v1103 = vld [vmem:[%s1095 + $0x1c] sm:$0xf]
        %v1104 = vld [vmem:[%s1095 + $0x20] sm:$0xf]
        %v1105 = vld [vmem:[%s1095 + $0x24] sm:$0xf]
        %v1106 = vld [vmem:[%s1095 + $0x28] sm:$0xf]
        %v1107 = vld [vmem:[%s1095 + $0x2c] sm:$0xf]
        %v1108 = vld [vmem:[%s1095 + $0x30] sm:$0xf]
        %v1109 = vld [vmem:[%s1095 + $0x34] sm:$0xf]
        %v1110 = vld [vmem:[%s1095 + $0x38] sm:$0xf]
        %v1111 = vld [vmem:[%s1095 + $0x3c] sm:$0xf]
        %vm1123 = vcmask 1046528
        %v1124 = vrot.slane %v1084, 1
        %v1125 = vrot.slane %v1085, 1
        %v1126 = vsel %vm1123, %v1124, %v1125
        %v1127 = vrot.slane %v1086, 1
        %v1128 = vsel %vm1123, %v1125, %v1127
        %v1129 = vrot.slane %v1087, 1
        %v1130 = vsel %vm1123, %v1127, %v1129
        %v1131 = vrot.slane %v1088, 1
        %v1132 = vsel %vm1123, %v1129, %v1131
        %v1133 = vrot.slane %v1089, 1
        %v1134 = vsel %vm1123, %v1131, %v1133
        %v1135 = vrot.slane %v1090, 1
        %v1136 = vsel %vm1123, %v1133, %v1135
        %v1137 = vrot.slane %v1091, 1
        %v1138 = vsel %vm1123, %v1135, %v1137
        %v1139 = vrot.slane %v1092, 1
        %v1140 = vsel %vm1123, %v1137, %v1139
        %v1141 = vrot.slane %v1093, 1
        %v1142 = vsel %vm1123, %v1139, %v1141
        %v1143 = vrot.slane %v1094, 1
        %v1144 = vsel %vm1123, %v1141, %v1143
        %v1171 = vunpack.c.l.b16 %v1096
        %v1172 = vunpack.c.l.b16 %v1097
        %v1173 = vunpack.c.l.b16 %v1098
        %v1174 = vunpack.c.l.b16 %v1099
        %v1175 = vunpack.c.l.b16 %v1100
        %v1176 = vunpack.c.l.b16 %v1101
        %v1177 = vunpack.c.l.b16 %v1102
        %v1178 = vunpack.c.l.b16 %v1103
        %v1179 = vunpack.c.l.b16 %v1104
        %v1180 = vunpack.c.l.b16 %v1105
        %v1181 = vunpack.c.l.b16 %v1106
        %v1182 = vunpack.c.l.b16 %v1107
        %v1183 = vunpack.c.l.b16 %v1108
        %v1184 = vunpack.c.l.b16 %v1109
        %v1185 = vunpack.c.l.b16 %v1110
        %v1186 = vunpack.c.l.b16 %v1111
        %v1187 = vpack.c.b16 %v1172, %v1171
        %v1188 = vpack.c.b16 %v1174, %v1173
        %v1189 = vpack.c.b16 %v1176, %v1175
        %v1190 = vpack.c.b16 %v1178, %v1177
        %v1191 = vpack.c.b16 %v1180, %v1179
        %v1192 = vpack.c.b16 %v1182, %v1181
        %v1193 = vpack.c.b16 %v1184, %v1183
        %v1194 = vpack.c.b16 %v1186, %v1185
        %1203 = vmatprep.subr.bf16.mxu0 0
        %1204 = vmatpush1.bf16.msra.mxu0 %v1187
        %1205 = vmatprep.subr.bf16.mxu0 0
        %1206 = vmatpush1.bf16.msra.mxu0 %v1188
        %1207 = vmatprep.subr.bf16.mxu0 0
        %1208 = vmatpush1.bf16.msra.mxu0 %v1189
        %1209 = vmatprep.subr.bf16.mxu0 0
        %1210 = vmatpush1.bf16.msra.mxu0 %v1190
        %1211 = vmatprep.subr.bf16.mxu0 0
        %1212 = vmatpush1.bf16.msra.mxu0 %v1191
        %1213 = vmatprep.subr.bf16.mxu0 0
        %1214 = vmatpush1.bf16.msra.mxu0 %v1192
        %1215 = vmatprep.subr.bf16.mxu0 0
        %1216 = vmatpush1.bf16.msra.mxu0 %v1193
        %1217 = vmatprep.subr.bf16.mxu0 0
        %1218 = vmatpush1.bf16.msra.mxu0 %v1194
        %1219 = vmatprep.subr.bf16.mxu0 0
        %1220 = vmatpush1.bf16.msra.mxu0 0
        %1221 = vmatprep.subr.bf16.mxu0 0
        %1222 = vmatpush1.bf16.msra.mxu0 0
        %1223 = vmatprep.subr.bf16.mxu0 0
        %1224 = vmatpush1.bf16.msra.mxu0 0
        %1225 = vmatprep.subr.bf16.mxu0 0
        %1226 = vmatpush1.bf16.msra.mxu0 0
        %1227 = vmatprep.subr.bf16.mxu0 0
        %1228 = vmatpush1.bf16.msra.mxu0 0
        %1229 = vmatprep.subr.bf16.mxu0 0
        %1230 = vmatpush1.bf16.msra.mxu0 0
        %1231 = vmatprep.subr.bf16.mxu0 0
        %1232 = vmatpush1.bf16.msra.mxu0 0
        %1233 = vmatprep.subr.bf16.mxu0 0
        %1234 = vmatpush1.bf16.msra.mxu0 0
        %1235 = vmatprep.mubr.bf16.mxu0 0
        %1236 = vmatmul.mubr.bf16.gmra.mrb[0].mxu0 %v1126
        %v1237 = vpop.f32.mrb[0].mxu0
        %v1238 = vadd.f32 0.0, %v1237
        %v1239 = vpop.f32.mrb[0].mxu0
        %v1240 = vpop.f32.mrb[0].mxu0
        %v1241 = vadd.f32 0.0, %v1240
        %v1242 = vpop.f32.mrb[0].mxu0
        %1243 = vmatprep.mubr.bf16.mxu0 0
        %1244 = vmatmul.mubr.bf16.gmra.mrb[0].mxu0 %v1128
        %v1245 = vpop.f32.mrb[0].mxu0
        %v1246 = vadd.f32 0.0, %v1245
        %v1247 = vpop.f32.mrb[0].mxu0
        %v1248 = vpop.f32.mrb[0].mxu0
        %v1249 = vadd.f32 0.0, %v1248
        %v1250 = vpop.f32.mrb[0].mxu0
        %1251 = vmatprep.mubr.bf16.mxu0 0
        %1252 = vmatmul.mubr.bf16.gmra.mrb[0].mxu0 %v1130
        %v1253 = vpop.f32.mrb[0].mxu0
        %v1254 = vadd.f32 0.0, %v1253
        %v1255 = vpop.f32.mrb[0].mxu0
        %v1256 = vpop.f32.mrb[0].mxu0
        %v1257 = vadd.f32 0.0, %v1256
        %v1258 = vpop.f32.mrb[0].mxu0
        %1259 = vmatprep.mubr.bf16.mxu0 0
        %1260 = vmatmul.mubr.bf16.gmra.mrb[0].mxu0 %v1132
        %v1261 = vpop.f32.mrb[0].mxu0
        %v1262 = vadd.f32 0.0, %v1261
        %v1263 = vpop.f32.mrb[0].mxu0
        %v1264 = vpop.f32.mrb[0].mxu0
        %v1265 = vadd.f32 0.0, %v1264
        %v1266 = vpop.f32.mrb[0].mxu0
        %1267 = vmatprep.mubr.bf16.mxu0 0
        %1268 = vmatmul.mubr.bf16.gmra.mrb[0].mxu0 %v1134
        %v1269 = vpop.f32.mrb[0].mxu0
        %v1270 = vadd.f32 0.0, %v1269
        %v1271 = vpop.f32.mrb[0].mxu0
        %v1272 = vpop.f32.mrb[0].mxu0
        %v1273 = vadd.f32 0.0, %v1272
        %v1274 = vpop.f32.mrb[0].mxu0
        %1275 = vmatprep.mubr.bf16.mxu0 0
        %1276 = vmatmul.mubr.bf16.gmra.mrb[0].mxu0 %v1136
        %v1277 = vpop.f32.mrb[0].mxu0
        %v1278 = vadd.f32 0.0, %v1277
        %v1279 = vpop.f32.mrb[0].mxu0
        %v1280 = vpop.f32.mrb[0].mxu0
        %v1281 = vadd.f32 0.0, %v1280
        %v1282 = vpop.f32.mrb[0].mxu0
        %1283 = vmatprep.mubr.bf16.mxu0 0
        %1284 = vmatmul.mubr.bf16.gmra.mrb[0].mxu0 %v1138
        %v1285 = vpop.f32.mrb[0].mxu0
        %v1286 = vadd.f32 0.0, %v1285
        %v1287 = vpop.f32.mrb[0].mxu0
        %v1288 = vpop.f32.mrb[0].mxu0
        %v1289 = vadd.f32 0.0, %v1288
        %v1290 = vpop.f32.mrb[0].mxu0
        %1291 = vmatprep.mubr.bf16.mxu0 0
        %1292 = vmatmul.mubr.bf16.gmra.mrb[0].mxu0 %v1140
        %v1293 = vpop.f32.mrb[0].mxu0
        %v1294 = vadd.f32 0.0, %v1293
        %v1295 = vpop.f32.mrb[0].mxu0
        %v1296 = vpop.f32.mrb[0].mxu0
        %v1297 = vadd.f32 0.0, %v1296
        %v1298 = vpop.f32.mrb[0].mxu0
        %1299 = vmatprep.mubr.bf16.mxu0 0
        %1300 = vmatmul.mubr.bf16.gmra.mrb[0].mxu0 %v1142
        %v1301 = vpop.f32.mrb[0].mxu0
        %v1302 = vadd.f32 0.0, %v1301
        %v1303 = vpop.f32.mrb[0].mxu0
        %v1304 = vpop.f32.mrb[0].mxu0
        %v1305 = vadd.f32 0.0, %v1304
        %v1306 = vpop.f32.mrb[0].mxu0
        %1307 = vmatprep.mubr.bf16.mxu0 0
        %1308 = vmatmul.mubr.bf16.gmra.mrb[0].mxu0 %v1144
        %v1309 = vpop.f32.mrb[0].mxu0
        %v1310 = vadd.f32 0.0, %v1309
        %v1311 = vpop.f32.mrb[0].mxu0
        %v1312 = vpop.f32.mrb[0].mxu0
        %v1313 = vadd.f32 0.0, %v1312
        %v1314 = vpop.f32.mrb[0].mxu0
        %1315 = vdwg.mxu0
        %v1316 = vadd.f32 %v1006, %v1238
        %v1317 = vadd.f32 %v1009, %v1241
        %v1318 = vadd.f32 %v1014, %v1246
        %v1319 = vadd.f32 %v1017, %v1249
        %v1320 = vadd.f32 %v1022, %v1254
        %v1321 = vadd.f32 %v1025, %v1257
        %v1322 = vadd.f32 %v1030, %v1262
        %v1323 = vadd.f32 %v1033, %v1265
        %v1324 = vadd.f32 %v1038, %v1270
        %v1325 = vadd.f32 %v1041, %v1273
        %v1326 = vadd.f32 %v1046, %v1278
        %v1327 = vadd.f32 %v1049, %v1281
        %v1328 = vadd.f32 %v1054, %v1286
        %v1329 = vadd.f32 %v1057, %v1289
        %v1330 = vadd.f32 %v1062, %v1294
        %v1331 = vadd.f32 %v1065, %v1297
        %v1332 = vadd.f32 %v1070, %v1302
        %v1333 = vadd.f32 %v1073, %v1305
        %v1334 = vadd.f32 %v1078, %v1310
        %v1335 = vadd.f32 %v1081, %v1313
        %v1336 = vld [vmem:[#allocation2 + $0x18] sm:$0xf8]
        %v1337 = vld [vmem:[#allocation2 + $0x20] sm:$0xff]
        %v1338 = vld [vmem:[#allocation2 + $0x28] sm:$0xff]
        %v1339 = vld [vmem:[#allocation2 + $0x30] sm:$0xff]
        %v1340 = vld [vmem:[#allocation2 + $0x38] sm:$0xff]
        %v1341 = vld [vmem:[#allocation2 + $0x40] sm:$0xff]
        %v1342 = vld [vmem:[#allocation2 + $0x48] sm:$0xff]
        %v1343 = vld [vmem:[#allocation2 + $0x50] sm:$0xff]
        %v1344 = vld [vmem:[#allocation2 + $0x58] sm:$0xff]
        %v1345 = vld [vmem:[#allocation2 + $0x60] sm:$0xff]
        %v1346 = vld [vmem:[#allocation2 + $0x68] sm:$0x7]
        %s1347 = scalar_lea.vmem [#allocation3], 192
        %v1348 = vld [vmem:[%s1347] sm:$0xf]
        %v1349 = vld [vmem:[%s1347 + $0x4] sm:$0xf]
        %v1350 = vld [vmem:[%s1347 + $0x8] sm:$0xf]
        %v1351 = vld [vmem:[%s1347 + $0xc] sm:$0xf]
        %v1352 = vld [vmem:[%s1347 + $0x10] sm:$0xf]
        %v1353 = vld [vmem:[%s1347 + $0x14] sm:$0xf]
        %v1354 = vld [vmem:[%s1347 + $0x18] sm:$0xf]
        %v1355 = vld [vmem:[%s1347 + $0x1c] sm:$0xf]
        %v1356 = vld [vmem:[%s1347 + $0x20] sm:$0xf]
        %v1357 = vld [vmem:[%s1347 + $0x24] sm:$0xf]
        %v1358 = vld [vmem:[%s1347 + $0x28] sm:$0xf]
        %v1359 = vld [vmem:[%s1347 + $0x2c] sm:$0xf]
        %v1360 = vld [vmem:[%s1347 + $0x30] sm:$0xf]
        %v1361 = vld [vmem:[%s1347 + $0x34] sm:$0xf]
        %v1362 = vld [vmem:[%s1347 + $0x38] sm:$0xf]
        %v1363 = vld [vmem:[%s1347 + $0x3c] sm:$0xf]
        %vm1375 = vcmask 1044480
        %v1376 = vrot.slane %v1336, 3
        %v1377 = vrot.slane %v1337, 3
        %v1378 = vsel %vm1375, %v1376, %v1377
        %v1379 = vrot.slane %v1338, 3
        %v1380 = vsel %vm1375, %v1377, %v1379
        %v1381 = vrot.slane %v1339, 3
        %v1382 = vsel %vm1375, %v1379, %v1381
        %v1383 = vrot.slane %v1340, 3
        %v1384 = vsel %vm1375, %v1381, %v1383
        %v1385 = vrot.slane %v1341, 3
        %v1386 = vsel %vm1375, %v1383, %v1385
        %v1387 = vrot.slane %v1342, 3
        %v1388 = vsel %vm1375, %v1385, %v1387
        %v1389 = vrot.slane %v1343, 3
        %v1390 = vsel %vm1375, %v1387, %v1389
        %v1391 = vrot.slane %v1344, 3
        %v1392 = vsel %vm1375, %v1389, %v1391
        %v1393 = vrot.slane %v1345, 3
        %v1394 = vsel %vm1375, %v1391, %v1393
        %v1395 = vrot.slane %v1346, 3
        %v1396 = vsel %vm1375, %v1393, %v1395
        %v1423 = vunpack.c.l.b16 %v1348
        %v1424 = vunpack.c.l.b16 %v1349
        %v1425 = vunpack.c.l.b16 %v1350
        %v1426 = vunpack.c.l.b16 %v1351
        %v1427 = vunpack.c.l.b16 %v1352
        %v1428 = vunpack.c.l.b16 %v1353
        %v1429 = vunpack.c.l.b16 %v1354
        %v1430 = vunpack.c.l.b16 %v1355
        %v1431 = vunpack.c.l.b16 %v1356
        %v1432 = vunpack.c.l.b16 %v1357
        %v1433 = vunpack.c.l.b16 %v1358
        %v1434 = vunpack.c.l.b16 %v1359
        %v1435 = vunpack.c.l.b16 %v1360
        %v1436 = vunpack.c.l.b16 %v1361
        %v1437 = vunpack.c.l.b16 %v1362
        %v1438 = vunpack.c.l.b16 %v1363
        %v1439 = vpack.c.b16 %v1424, %v1423
        %v1440 = vpack.c.b16 %v1426, %v1425
        %v1441 = vpack.c.b16 %v1428, %v1427
        %v1442 = vpack.c.b16 %v1430, %v1429
        %v1443 = vpack.c.b16 %v1432, %v1431
        %v1444 = vpack.c.b16 %v1434, %v1433
        %v1445 = vpack.c.b16 %v1436, %v1435
        %v1446 = vpack.c.b16 %v1438, %v1437
        %1455 = vmatprep.subr.bf16.mxu0 0
        %1456 = vmatpush1.bf16.msra.mxu0 %v1439
        %1457 = vmatprep.subr.bf16.mxu0 0
        %1458 = vmatpush1.bf16.msra.mxu0 %v1440
        %1459 = vmatprep.subr.bf16.mxu0 0
        %1460 = vmatpush1.bf16.msra.mxu0 %v1441
        %1461 = vmatprep.subr.bf16.mxu0 0
        %1462 = vmatpush1.bf16.msra.mxu0 %v1442
        %1463 = vmatprep.subr.bf16.mxu0 0
        %1464 = vmatpush1.bf16.msra.mxu0 %v1443
        %1465 = vmatprep.subr.bf16.mxu0 0
        %1466 = vmatpush1.bf16.msra.mxu0 %v1444
        %1467 = vmatprep.subr.bf16.mxu0 0
        %1468 = vmatpush1.bf16.msra.mxu0 %v1445
        %1469 = vmatprep.subr.bf16.mxu0 0
        %1470 = vmatpush1.bf16.msra.mxu0 %v1446
        %1471 = vmatprep.subr.bf16.mxu0 0
        %1472 = vmatpush1.bf16.msra.mxu0 0
        %1473 = vmatprep.subr.bf16.mxu0 0
        %1474 = vmatpush1.bf16.msra.mxu0 0
        %1475 = vmatprep.subr.bf16.mxu0 0
        %1476 = vmatpush1.bf16.msra.mxu0 0
        %1477 = vmatprep.subr.bf16.mxu0 0
        %1478 = vmatpush1.bf16.msra.mxu0 0
        %1479 = vmatprep.subr.bf16.mxu0 0
        %1480 = vmatpush1.bf16.msra.mxu0 0
        %1481 = vmatprep.subr.bf16.mxu0 0
        %1482 = vmatpush1.bf16.msra.mxu0 0
        %1483 = vmatprep.subr.bf16.mxu0 0
        %1484 = vmatpush1.bf16.msra.mxu0 0
        %1485 = vmatprep.subr.bf16.mxu0 0
        %1486 = vmatpush1.bf16.msra.mxu0 0
        %1487 = vmatprep.mubr.bf16.mxu0 0
        %1488 = vmatmul.mubr.bf16.gmra.mrb[0].mxu0 %v1378
        %v1489 = vpop.f32.mrb[0].mxu0
        %v1490 = vadd.f32 0.0, %v1489
        %v1491 = vpop.f32.mrb[0].mxu0
        %v1492 = vpop.f32.mrb[0].mxu0
        %v1493 = vadd.f32 0.0, %v1492
        %v1494 = vpop.f32.mrb[0].mxu0
        %1495 = vmatprep.mubr.bf16.mxu0 0
        %1496 = vmatmul.mubr.bf16.gmra.mrb[0].mxu0 %v1380
        %v1497 = vpop.f32.mrb[0].mxu0
        %v1498 = vadd.f32 0.0, %v1497
        %v1499 = vpop.f32.mrb[0].mxu0
        %v1500 = vpop.f32.mrb[0].mxu0
        %v1501 = vadd.f32 0.0, %v1500
        %v1502 = vpop.f32.mrb[0].mxu0
        %1503 = vmatprep.mubr.bf16.mxu0 0
        %1504 = vmatmul.mubr.bf16.gmra.mrb[0].mxu0 %v1382
        %v1505 = vpop.f32.mrb[0].mxu0
        %v1506 = vadd.f32 0.0, %v1505
        %v1507 = vpop.f32.mrb[0].mxu0
        %v1508 = vpop.f32.mrb[0].mxu0
        %v1509 = vadd.f32 0.0, %v1508
        %v1510 = vpop.f32.mrb[0].mxu0
        %1511 = vmatprep.mubr.bf16.mxu0 0
        %1512 = vmatmul.mubr.bf16.gmra.mrb[0].mxu0 %v1384
        %v1513 = vpop.f32.mrb[0].mxu0
        %v1514 = vadd.f32 0.0, %v1513
        %v1515 = vpop.f32.mrb[0].mxu0
        %v1516 = vpop.f32.mrb[0].mxu0
        %v1517 = vadd.f32 0.0, %v1516
        %v1518 = vpop.f32.mrb[0].mxu0
        %1519 = vmatprep.mubr.bf16.mxu0 0
        %1520 = vmatmul.mubr.bf16.gmra.mrb[0].mxu0 %v1386
        %v1521 = vpop.f32.mrb[0].mxu0
        %v1522 = vadd.f32 0.0, %v1521
        %v1523 = vpop.f32.mrb[0].mxu0
        %v1524 = vpop.f32.mrb[0].mxu0
        %v1525 = vadd.f32 0.0, %v1524
        %v1526 = vpop.f32.mrb[0].mxu0
        %1527 = vmatprep.mubr.bf16.mxu0 0
        %1528 = vmatmul.mubr.bf16.gmra.mrb[0].mxu0 %v1388
        %v1529 = vpop.f32.mrb[0].mxu0
        %v1530 = vadd.f32 0.0, %v1529
        %v1531 = vpop.f32.mrb[0].mxu0
        %v1532 = vpop.f32.mrb[0].mxu0
        %v1533 = vadd.f32 0.0, %v1532
        %v1534 = vpop.f32.mrb[0].mxu0
        %1535 = vmatprep.mubr.bf16.mxu0 0
        %1536 = vmatmul.mubr.bf16.gmra.mrb[0].mxu0 %v1390
        %v1537 = vpop.f32.mrb[0].mxu0
        %v1538 = vadd.f32 0.0, %v1537
        %v1539 = vpop.f32.mrb[0].mxu0
        %v1540 = vpop.f32.mrb[0].mxu0
        %v1541 = vadd.f32 0.0, %v1540
        %v1542 = vpop.f32.mrb[0].mxu0
        %1543 = vmatprep.mubr.bf16.mxu0 0
        %1544 = vmatmul.mubr.bf16.gmra.mrb[0].mxu0 %v1392
        %v1545 = vpop.f32.mrb[0].mxu0
        %v1546 = vadd.f32 0.0, %v1545
        %v1547 = vpop.f32.mrb[0].mxu0
        %v1548 = vpop.f32.mrb[0].mxu0
        %v1549 = vadd.f32 0.0, %v1548
        %v1550 = vpop.f32.mrb[0].mxu0
        %1551 = vmatprep.mubr.bf16.mxu0 0
        %1552 = vmatmul.mubr.bf16.gmra.mrb[0].mxu0 %v1394
        %v1553 = vpop.f32.mrb[0].mxu0
        %v1554 = vadd.f32 0.0, %v1553
        %v1555 = vpop.f32.mrb[0].mxu0
        %v1556 = vpop.f32.mrb[0].mxu0
        %v1557 = vadd.f32 0.0, %v1556
        %v1558 = vpop.f32.mrb[0].mxu0
        %1559 = vmatprep.mubr.bf16.mxu0 0
        %1560 = vmatmul.mubr.bf16.gmra.mrb[0].mxu0 %v1396
        %v1561 = vpop.f32.mrb[0].mxu0
        %v1562 = vadd.f32 0.0, %v1561
        %v1563 = vpop.f32.mrb[0].mxu0
        %v1564 = vpop.f32.mrb[0].mxu0
        %v1565 = vadd.f32 0.0, %v1564
        %v1566 = vpop.f32.mrb[0].mxu0
        %1567 = vdwg.mxu0
        %v1568 = vadd.f32 %v1316, %v1490
        %v1569 = vadd.f32 %v1317, %v1493
        %v1570 = vadd.f32 %v1318, %v1498
        %v1571 = vadd.f32 %v1319, %v1501
        %v1572 = vadd.f32 %v1320, %v1506
        %v1573 = vadd.f32 %v1321, %v1509
        %v1574 = vadd.f32 %v1322, %v1514
        %v1575 = vadd.f32 %v1323, %v1517
        %v1576 = vadd.f32 %v1324, %v1522
        %v1577 = vadd.f32 %v1325, %v1525
        %v1578 = vadd.f32 %v1326, %v1530
        %v1579 = vadd.f32 %v1327, %v1533
        %v1580 = vadd.f32 %v1328, %v1538
        %v1581 = vadd.f32 %v1329, %v1541
        %v1582 = vadd.f32 %v1330, %v1546
        %v1583 = vadd.f32 %v1331, %v1549
        %v1584 = vadd.f32 %v1332, %v1554
        %v1585 = vadd.f32 %v1333, %v1557
        %v1586 = vadd.f32 %v1334, %v1562
        %v1587 = vadd.f32 %v1335, %v1565
        %v1588 = vld [vmem:[#allocation2 + $0x18] sm:$0xf0]
        %v1589 = vld [vmem:[#allocation2 + $0x68] sm:$0xf]
        %s1590 = scalar_lea.vmem [#allocation3], 256
        %v1591 = vld [vmem:[%s1590] sm:$0xf]
        %v1592 = vld [vmem:[%s1590 + $0x4] sm:$0xf]
        %v1593 = vld [vmem:[%s1590 + $0x8] sm:$0xf]
        %v1594 = vld [vmem:[%s1590 + $0xc] sm:$0xf]
        %v1595 = vld [vmem:[%s1590 + $0x10] sm:$0xf]
        %v1596 = vld [vmem:[%s1590 + $0x14] sm:$0xf]
        %v1597 = vld [vmem:[%s1590 + $0x18] sm:$0xf]
        %v1598 = vld [vmem:[%s1590 + $0x1c] sm:$0xf]
        %v1599 = vld [vmem:[%s1590 + $0x20] sm:$0xf]
        %v1600 = vld [vmem:[%s1590 + $0x24] sm:$0xf]
        %v1601 = vld [vmem:[%s1590 + $0x28] sm:$0xf]
        %v1602 = vld [vmem:[%s1590 + $0x2c] sm:$0xf]
        %v1603 = vld [vmem:[%s1590 + $0x30] sm:$0xf]
        %v1604 = vld [vmem:[%s1590 + $0x34] sm:$0xf]
        %v1605 = vld [vmem:[%s1590 + $0x38] sm:$0xf]
        %v1606 = vld [vmem:[%s1590 + $0x3c] sm:$0xf]
        %vm1609 = vcmask 1043456
        %v1610 = vrot.slane %v1588, 4
        %v1611 = vrot.slane %v1337, 4
        %v1612 = vsel %vm1609, %v1610, %v1611
        %v1613 = vrot.slane %v1338, 4
        %v1614 = vsel %vm1609, %v1611, %v1613
        %v1615 = vrot.slane %v1339, 4
        %v1616 = vsel %vm1609, %v1613, %v1615
        %v1617 = vrot.slane %v1340, 4
        %v1618 = vsel %vm1609, %v1615, %v1617
        %v1619 = vrot.slane %v1341, 4
        %v1620 = vsel %vm1609, %v1617, %v1619
        %v1621 = vrot.slane %v1342, 4
        %v1622 = vsel %vm1609, %v1619, %v1621
        %v1623 = vrot.slane %v1343, 4
        %v1624 = vsel %vm1609, %v1621, %v1623
        %v1625 = vrot.slane %v1344, 4
        %v1626 = vsel %vm1609, %v1623, %v1625
        %v1627 = vrot.slane %v1345, 4
        %v1628 = vsel %vm1609, %v1625, %v1627
        %v1629 = vrot.slane %v1589, 4
        %v1630 = vsel %vm1609, %v1627, %v1629
        %v1657 = vunpack.c.l.b16 %v1591
        %v1658 = vunpack.c.l.b16 %v1592
        %v1659 = vunpack.c.l.b16 %v1593
        %v1660 = vunpack.c.l.b16 %v1594
        %v1661 = vunpack.c.l.b16 %v1595
        %v1662 = vunpack.c.l.b16 %v1596
        %v1663 = vunpack.c.l.b16 %v1597
        %v1664 = vunpack.c.l.b16 %v1598
        %v1665 = vunpack.c.l.b16 %v1599
        %v1666 = vunpack.c.l.b16 %v1600
        %v1667 = vunpack.c.l.b16 %v1601
        %v1668 = vunpack.c.l.b16 %v1602
        %v1669 = vunpack.c.l.b16 %v1603
        %v1670 = vunpack.c.l.b16 %v1604
        %v1671 = vunpack.c.l.b16 %v1605
        %v1672 = vunpack.c.l.b16 %v1606
        %v1673 = vpack.c.b16 %v1658, %v1657
        %v1674 = vpack.c.b16 %v1660, %v1659
        %v1675 = vpack.c.b16 %v1662, %v1661
        %v1676 = vpack.c.b16 %v1664, %v1663
        %v1677 = vpack.c.b16 %v1666, %v1665
        %v1678 = vpack.c.b16 %v1668, %v1667
        %v1679 = vpack.c.b16 %v1670, %v1669
        %v1680 = vpack.c.b16 %v1672, %v1671
        %1689 = vmatprep.subr.bf16.mxu0 0
        %1690 = vmatpush1.bf16.msra.mxu0 %v1673
        %1691 = vmatprep.subr.bf16.mxu0 0
        %1692 = vmatpush1.bf16.msra.mxu0 %v1674
        %1693 = vmatprep.subr.bf16.mxu0 0
        %1694 = vmatpush1.bf16.msra.mxu0 %v1675
        %1695 = vmatprep.subr.bf16.mxu0 0
        %1696 = vmatpush1.bf16.msra.mxu0 %v1676
        %1697 = vmatprep.subr.bf16.mxu0 0
        %1698 = vmatpush1.bf16.msra.mxu0 %v1677
        %1699 = vmatprep.subr.bf16.mxu0 0
        %1700 = vmatpush1.bf16.msra.mxu0 %v1678
        %1701 = vmatprep.subr.bf16.mxu0 0
        %1702 = vmatpush1.bf16.msra.mxu0 %v1679
        %1703 = vmatprep.subr.bf16.mxu0 0
        %1704 = vmatpush1.bf16.msra.mxu0 %v1680
        %1705 = vmatprep.subr.bf16.mxu0 0
        %1706 = vmatpush1.bf16.msra.mxu0 0
        %1707 = vmatprep.subr.bf16.mxu0 0
        %1708 = vmatpush1.bf16.msra.mxu0 0
        %1709 = vmatprep.subr.bf16.mxu0 0
        %1710 = vmatpush1.bf16.msra.mxu0 0
        %1711 = vmatprep.subr.bf16.mxu0 0
        %1712 = vmatpush1.bf16.msra.mxu0 0
        %1713 = vmatprep.subr.bf16.mxu0 0
        %1714 = vmatpush1.bf16.msra.mxu0 0
        %1715 = vmatprep.subr.bf16.mxu0 0
        %1716 = vmatpush1.bf16.msra.mxu0 0
        %1717 = vmatprep.subr.bf16.mxu0 0
        %1718 = vmatpush1.bf16.msra.mxu0 0
        %1719 = vmatprep.subr.bf16.mxu0 0
        %1720 = vmatpush1.bf16.msra.mxu0 0
        %1721 = vmatprep.mubr.bf16.mxu0 0
        %1722 = vmatmul.mubr.bf16.gmra.mrb[0].mxu0 %v1612
        %v1723 = vpop.f32.mrb[0].mxu0
        %v1724 = vadd.f32 0.0, %v1723
        %v1725 = vpop.f32.mrb[0].mxu0
        %v1726 = vpop.f32.mrb[0].mxu0
        %v1727 = vadd.f32 0.0, %v1726
        %v1728 = vpop.f32.mrb[0].mxu0
        %1729 = vmatprep.mubr.bf16.mxu0 0
        %1730 = vmatmul.mubr.bf16.gmra.mrb[0].mxu0 %v1614
        %v1731 = vpop.f32.mrb[0].mxu0
        %v1732 = vadd.f32 0.0, %v1731
        %v1733 = vpop.f32.mrb[0].mxu0
        %v1734 = vpop.f32.mrb[0].mxu0
        %v1735 = vadd.f32 0.0, %v1734
        %v1736 = vpop.f32.mrb[0].mxu0
        %1737 = vmatprep.mubr.bf16.mxu0 0
        %1738 = vmatmul.mubr.bf16.gmra.mrb[0].mxu0 %v1616
        %v1739 = vpop.f32.mrb[0].mxu0
        %v1740 = vadd.f32 0.0, %v1739
        %v1741 = vpop.f32.mrb[0].mxu0
        %v1742 = vpop.f32.mrb[0].mxu0
        %v1743 = vadd.f32 0.0, %v1742
        %v1744 = vpop.f32.mrb[0].mxu0
        %1745 = vmatprep.mubr.bf16.mxu0 0
        %1746 = vmatmul.mubr.bf16.gmra.mrb[0].mxu0 %v1618
        %v1747 = vpop.f32.mrb[0].mxu0
        %v1748 = vadd.f32 0.0, %v1747
        %v1749 = vpop.f32.mrb[0].mxu0
        %v1750 = vpop.f32.mrb[0].mxu0
        %v1751 = vadd.f32 0.0, %v1750
        %v1752 = vpop.f32.mrb[0].mxu0
        %1753 = vmatprep.mubr.bf16.mxu0 0
        %1754 = vmatmul.mubr.bf16.gmra.mrb[0].mxu0 %v1620
        %v1755 = vpop.f32.mrb[0].mxu0
        %v1756 = vadd.f32 0.0, %v1755
        %v1757 = vpop.f32.mrb[0].mxu0
        %v1758 = vpop.f32.mrb[0].mxu0
        %v1759 = vadd.f32 0.0, %v1758
        %v1760 = vpop.f32.mrb[0].mxu0
        %1761 = vmatprep.mubr.bf16.mxu0 0
        %1762 = vmatmul.mubr.bf16.gmra.mrb[0].mxu0 %v1622
        %v1763 = vpop.f32.mrb[0].mxu0
        %v1764 = vadd.f32 0.0, %v1763
        %v1765 = vpop.f32.mrb[0].mxu0
        %v1766 = vpop.f32.mrb[0].mxu0
        %v1767 = vadd.f32 0.0, %v1766
        %v1768 = vpop.f32.mrb[0].mxu0
        %1769 = vmatprep.mubr.bf16.mxu0 0
        %1770 = vmatmul.mubr.bf16.gmra.mrb[0].mxu0 %v1624
        %v1771 = vpop.f32.mrb[0].mxu0
        %v1772 = vadd.f32 0.0, %v1771
        %v1773 = vpop.f32.mrb[0].mxu0
        %v1774 = vpop.f32.mrb[0].mxu0
        %v1775 = vadd.f32 0.0, %v1774
        %v1776 = vpop.f32.mrb[0].mxu0
        %1777 = vmatprep.mubr.bf16.mxu0 0
        %1778 = vmatmul.mubr.bf16.gmra.mrb[0].mxu0 %v1626
        %v1779 = vpop.f32.mrb[0].mxu0
        %v1780 = vadd.f32 0.0, %v1779
        %v1781 = vpop.f32.mrb[0].mxu0
        %v1782 = vpop.f32.mrb[0].mxu0
        %v1783 = vadd.f32 0.0, %v1782
        %v1784 = vpop.f32.mrb[0].mxu0
        %1785 = vmatprep.mubr.bf16.mxu0 0
        %1786 = vmatmul.mubr.bf16.gmra.mrb[0].mxu0 %v1628
        %v1787 = vpop.f32.mrb[0].mxu0
        %v1788 = vadd.f32 0.0, %v1787
        %v1789 = vpop.f32.mrb[0].mxu0
        %v1790 = vpop.f32.mrb[0].mxu0
        %v1791 = vadd.f32 0.0, %v1790
        %v1792 = vpop.f32.mrb[0].mxu0
        %1793 = vmatprep.mubr.bf16.mxu0 0
        %1794 = vmatmul.mubr.bf16.gmra.mrb[0].mxu0 %v1630
        %v1795 = vpop.f32.mrb[0].mxu0
        %v1796 = vadd.f32 0.0, %v1795
        %v1797 = vpop.f32.mrb[0].mxu0
        %v1798 = vpop.f32.mrb[0].mxu0
        %v1799 = vadd.f32 0.0, %v1798
        %v1800 = vpop.f32.mrb[0].mxu0
        %1801 = vdwg.mxu0
        %v1802 = vadd.f32 %v1568, %v1724
        %v1803 = vadd.f32 %v1569, %v1727
        %v1804 = vadd.f32 %v1570, %v1732
        %v1805 = vadd.f32 %v1571, %v1735
        %v1806 = vadd.f32 %v1572, %v1740
        %v1807 = vadd.f32 %v1573, %v1743
        %v1808 = vadd.f32 %v1574, %v1748
        %v1809 = vadd.f32 %v1575, %v1751
        %v1810 = vadd.f32 %v1576, %v1756
        %v1811 = vadd.f32 %v1577, %v1759
        %v1812 = vadd.f32 %v1578, %v1764
        %v1813 = vadd.f32 %v1579, %v1767
        %v1814 = vadd.f32 %v1580, %v1772
        %v1815 = vadd.f32 %v1581, %v1775
        %v1816 = vadd.f32 %v1582, %v1780
        %v1817 = vadd.f32 %v1583, %v1783
        %v1818 = vadd.f32 %v1584, %v1788
        %v1819 = vadd.f32 %v1585, %v1791
        %v1820 = vadd.f32 %v1586, %v1796
        %v1821 = vadd.f32 %v1587, %v1799
        %v1822 = vld [vmem:[#allocation2 + $0x18] sm:$0xe0]
        %v1823 = vld [vmem:[#allocation2 + $0x68] sm:$0x1f]
        %s1824 = scalar_lea.vmem [#allocation3], 320
        %v1825 = vld [vmem:[%s1824] sm:$0xf]
        %v1826 = vld [vmem:[%s1824 + $0x4] sm:$0xf]
        %v1827 = vld [vmem:[%s1824 + $0x8] sm:$0xf]
        %v1828 = vld [vmem:[%s1824 + $0xc] sm:$0xf]
        %v1829 = vld [vmem:[%s1824 + $0x10] sm:$0xf]
        %v1830 = vld [vmem:[%s1824 + $0x14] sm:$0xf]
        %v1831 = vld [vmem:[%s1824 + $0x18] sm:$0xf]
        %v1832 = vld [vmem:[%s1824 + $0x1c] sm:$0xf]
        %v1833 = vld [vmem:[%s1824 + $0x20] sm:$0xf]
        %v1834 = vld [vmem:[%s1824 + $0x24] sm:$0xf]
        %v1835 = vld [vmem:[%s1824 + $0x28] sm:$0xf]
        %v1836 = vld [vmem:[%s1824 + $0x2c] sm:$0xf]
        %v1837 = vld [vmem:[%s1824 + $0x30] sm:$0xf]
        %v1838 = vld [vmem:[%s1824 + $0x34] sm:$0xf]
        %v1839 = vld [vmem:[%s1824 + $0x38] sm:$0xf]
        %v1840 = vld [vmem:[%s1824 + $0x3c] sm:$0xf]
        %vm1843 = vcmask 1042432
        %v1844 = vrot.slane %v1822, 5
        %v1845 = vrot.slane %v1337, 5
        %v1846 = vsel %vm1843, %v1844, %v1845
        %v1847 = vrot.slane %v1338, 5
        %v1848 = vsel %vm1843, %v1845, %v1847
        %v1849 = vrot.slane %v1339, 5
        %v1850 = vsel %vm1843, %v1847, %v1849
        %v1851 = vrot.slane %v1340, 5
        %v1852 = vsel %vm1843, %v1849, %v1851
        %v1853 = vrot.slane %v1341, 5
        %v1854 = vsel %vm1843, %v1851, %v1853
        %v1855 = vrot.slane %v1342, 5
        %v1856 = vsel %vm1843, %v1853, %v1855
        %v1857 = vrot.slane %v1343, 5
        %v1858 = vsel %vm1843, %v1855, %v1857
        %v1859 = vrot.slane %v1344, 5
        %v1860 = vsel %vm1843, %v1857, %v1859
        %v1861 = vrot.slane %v1345, 5
        %v1862 = vsel %vm1843, %v1859, %v1861
        %v1863 = vrot.slane %v1823, 5
        %v1864 = vsel %vm1843, %v1861, %v1863
        %v1891 = vunpack.c.l.b16 %v1825
        %v1892 = vunpack.c.l.b16 %v1826
        %v1893 = vunpack.c.l.b16 %v1827
        %v1894 = vunpack.c.l.b16 %v1828
        %v1895 = vunpack.c.l.b16 %v1829
        %v1896 = vunpack.c.l.b16 %v1830
        %v1897 = vunpack.c.l.b16 %v1831
        %v1898 = vunpack.c.l.b16 %v1832
        %v1899 = vunpack.c.l.b16 %v1833
        %v1900 = vunpack.c.l.b16 %v1834
        %v1901 = vunpack.c.l.b16 %v1835
        %v1902 = vunpack.c.l.b16 %v1836
        %v1903 = vunpack.c.l.b16 %v1837
        %v1904 = vunpack.c.l.b16 %v1838
        %v1905 = vunpack.c.l.b16 %v1839
        %v1906 = vunpack.c.l.b16 %v1840
        %v1907 = vpack.c.b16 %v1892, %v1891
        %v1908 = vpack.c.b16 %v1894, %v1893
        %v1909 = vpack.c.b16 %v1896, %v1895
        %v1910 = vpack.c.b16 %v1898, %v1897
        %v1911 = vpack.c.b16 %v1900, %v1899
        %v1912 = vpack.c.b16 %v1902, %v1901
        %v1913 = vpack.c.b16 %v1904, %v1903
        %v1914 = vpack.c.b16 %v1906, %v1905
        %1923 = vmatprep.subr.bf16.mxu0 0
        %1924 = vmatpush1.bf16.msra.mxu0 %v1907
        %1925 = vmatprep.subr.bf16.mxu0 0
        %1926 = vmatpush1.bf16.msra.mxu0 %v1908
        %1927 = vmatprep.subr.bf16.mxu0 0
        %1928 = vmatpush1.bf16.msra.mxu0 %v1909
        %1929 = vmatprep.subr.bf16.mxu0 0
        %1930 = vmatpush1.bf16.msra.mxu0 %v1910
        %1931 = vmatprep.subr.bf16.mxu0 0
        %1932 = vmatpush1.bf16.msra.mxu0 %v1911
        %1933 = vmatprep.subr.bf16.mxu0 0
        %1934 = vmatpush1.bf16.msra.mxu0 %v1912
        %1935 = vmatprep.subr.bf16.mxu0 0
        %1936 = vmatpush1.bf16.msra.mxu0 %v1913
        %1937 = vmatprep.subr.bf16.mxu0 0
        %1938 = vmatpush1.bf16.msra.mxu0 %v1914
        %1939 = vmatprep.subr.bf16.mxu0 0
        %1940 = vmatpush1.bf16.msra.mxu0 0
        %1941 = vmatprep.subr.bf16.mxu0 0
        %1942 = vmatpush1.bf16.msra.mxu0 0
        %1943 = vmatprep.subr.bf16.mxu0 0
        %1944 = vmatpush1.bf16.msra.mxu0 0
        %1945 = vmatprep.subr.bf16.mxu0 0
        %1946 = vmatpush1.bf16.msra.mxu0 0
        %1947 = vmatprep.subr.bf16.mxu0 0
        %1948 = vmatpush1.bf16.msra.mxu0 0
        %1949 = vmatprep.subr.bf16.mxu0 0
        %1950 = vmatpush1.bf16.msra.mxu0 0
        %1951 = vmatprep.subr.bf16.mxu0 0
        %1952 = vmatpush1.bf16.msra.mxu0 0
        %1953 = vmatprep.subr.bf16.mxu0 0
        %1954 = vmatpush1.bf16.msra.mxu0 0
        %1955 = vmatprep.mubr.bf16.mxu0 0
        %1956 = vmatmul.mubr.bf16.gmra.mrb[0].mxu0 %v1846
        %v1957 = vpop.f32.mrb[0].mxu0
        %v1958 = vadd.f32 0.0, %v1957
        %v1959 = vpop.f32.mrb[0].mxu0
        %v1960 = vpop.f32.mrb[0].mxu0
        %v1961 = vadd.f32 0.0, %v1960
        %v1962 = vpop.f32.mrb[0].mxu0
        %1963 = vmatprep.mubr.bf16.mxu0 0
        %1964 = vmatmul.mubr.bf16.gmra.mrb[0].mxu0 %v1848
        %v1965 = vpop.f32.mrb[0].mxu0
        %v1966 = vadd.f32 0.0, %v1965
        %v1967 = vpop.f32.mrb[0].mxu0
        %v1968 = vpop.f32.mrb[0].mxu0
        %v1969 = vadd.f32 0.0, %v1968
        %v1970 = vpop.f32.mrb[0].mxu0
        %1971 = vmatprep.mubr.bf16.mxu0 0
        %1972 = vmatmul.mubr.bf16.gmra.mrb[0].mxu0 %v1850
        %v1973 = vpop.f32.mrb[0].mxu0
        %v1974 = vadd.f32 0.0, %v1973
        %v1975 = vpop.f32.mrb[0].mxu0
        %v1976 = vpop.f32.mrb[0].mxu0
        %v1977 = vadd.f32 0.0, %v1976
        %v1978 = vpop.f32.mrb[0].mxu0
        %1979 = vmatprep.mubr.bf16.mxu0 0
        %1980 = vmatmul.mubr.bf16.gmra.mrb[0].mxu0 %v1852
        %v1981 = vpop.f32.mrb[0].mxu0
        %v1982 = vadd.f32 0.0, %v1981
        %v1983 = vpop.f32.mrb[0].mxu0
        %v1984 = vpop.f32.mrb[0].mxu0
        %v1985 = vadd.f32 0.0, %v1984
        %v1986 = vpop.f32.mrb[0].mxu0
        %1987 = vmatprep.mubr.bf16.mxu0 0
        %1988 = vmatmul.mubr.bf16.gmra.mrb[0].mxu0 %v1854
        %v1989 = vpop.f32.mrb[0].mxu0
        %v1990 = vadd.f32 0.0, %v1989
        %v1991 = vpop.f32.mrb[0].mxu0
        %v1992 = vpop.f32.mrb[0].mxu0
        %v1993 = vadd.f32 0.0, %v1992
        %v1994 = vpop.f32.mrb[0].mxu0
        %1995 = vmatprep.mubr.bf16.mxu0 0
        %1996 = vmatmul.mubr.bf16.gmra.mrb[0].mxu0 %v1856
        %v1997 = vpop.f32.mrb[0].mxu0
        %v1998 = vadd.f32 0.0, %v1997
        %v1999 = vpop.f32.mrb[0].mxu0
        %v2000 = vpop.f32.mrb[0].mxu0
        %v2001 = vadd.f32 0.0, %v2000
        %v2002 = vpop.f32.mrb[0].mxu0
        %2003 = vmatprep.mubr.bf16.mxu0 0
        %2004 = vmatmul.mubr.bf16.gmra.mrb[0].mxu0 %v1858
        %v2005 = vpop.f32.mrb[0].mxu0
        %v2006 = vadd.f32 0.0, %v2005
        %v2007 = vpop.f32.mrb[0].mxu0
        %v2008 = vpop.f32.mrb[0].mxu0
        %v2009 = vadd.f32 0.0, %v2008
        %v2010 = vpop.f32.mrb[0].mxu0
        %2011 = vmatprep.mubr.bf16.mxu0 0
        %2012 = vmatmul.mubr.bf16.gmra.mrb[0].mxu0 %v1860
        %v2013 = vpop.f32.mrb[0].mxu0
        %v2014 = vadd.f32 0.0, %v2013
        %v2015 = vpop.f32.mrb[0].mxu0
        %v2016 = vpop.f32.mrb[0].mxu0
        %v2017 = vadd.f32 0.0, %v2016
        %v2018 = vpop.f32.mrb[0].mxu0
        %2019 = vmatprep.mubr.bf16.mxu0 0
        %2020 = vmatmul.mubr.bf16.gmra.mrb[0].mxu0 %v1862
        %v2021 = vpop.f32.mrb[0].mxu0
        %v2022 = vadd.f32 0.0, %v2021
        %v2023 = vpop.f32.mrb[0].mxu0
        %v2024 = vpop.f32.mrb[0].mxu0
        %v2025 = vadd.f32 0.0, %v2024
        %v2026 = vpop.f32.mrb[0].mxu0
        %2027 = vmatprep.mubr.bf16.mxu0 0
        %2028 = vmatmul.mubr.bf16.gmra.mrb[0].mxu0 %v1864
        %v2029 = vpop.f32.mrb[0].mxu0
        %v2030 = vadd.f32 0.0, %v2029
        %v2031 = vpop.f32.mrb[0].mxu0
        %v2032 = vpop.f32.mrb[0].mxu0
        %v2033 = vadd.f32 0.0, %v2032
        %v2034 = vpop.f32.mrb[0].mxu0
        %2035 = vdwg.mxu0
        %v2036 = vadd.f32 %v1802, %v1958
        %v2037 = vadd.f32 %v1803, %v1961
        %v2038 = vadd.f32 %v1804, %v1966
        %v2039 = vadd.f32 %v1805, %v1969
        %v2040 = vadd.f32 %v1806, %v1974
        %v2041 = vadd.f32 %v1807, %v1977
        %v2042 = vadd.f32 %v1808, %v1982
        %v2043 = vadd.f32 %v1809, %v1985
        %v2044 = vadd.f32 %v1810, %v1990
        %v2045 = vadd.f32 %v1811, %v1993
        %v2046 = vadd.f32 %v1812, %v1998
        %v2047 = vadd.f32 %v1813, %v2001
        %v2048 = vadd.f32 %v1814, %v2006
        %v2049 = vadd.f32 %v1815, %v2009
        %v2050 = vadd.f32 %v1816, %v2014
        %v2051 = vadd.f32 %v1817, %v2017
        %v2052 = vadd.f32 %v1818, %v2022
        %v2053 = vadd.f32 %v1819, %v2025
        %v2054 = vadd.f32 %v1820, %v2030
        %v2055 = vadd.f32 %v1821, %v2033
        %v2056 = vld [vmem:[#allocation2 + $0x28] sm:$0x80]
        %v2057 = vld [vmem:[#allocation2 + $0x30] sm:$0xff]
        %v2058 = vld [vmem:[#allocation2 + $0x38] sm:$0xff]
        %v2059 = vld [vmem:[#allocation2 + $0x40] sm:$0xff]
        %v2060 = vld [vmem:[#allocation2 + $0x48] sm:$0xff]
        %v2061 = vld [vmem:[#allocation2 + $0x50] sm:$0xff]
        %v2062 = vld [vmem:[#allocation2 + $0x58] sm:$0xff]
        %v2063 = vld [vmem:[#allocation2 + $0x60] sm:$0xff]
        %v2064 = vld [vmem:[#allocation2 + $0x68] sm:$0xff]
        %v2065 = vld [vmem:[#allocation2 + $0x70] sm:$0xff]
        %v2066 = vld [vmem:[#allocation2 + $0x78] sm:$0x7f]
        %s2067 = scalar_lea.vmem [#allocation3], 384
        %v2068 = vld [vmem:[%s2067] sm:$0xf]
        %v2069 = vld [vmem:[%s2067 + $0x4] sm:$0xf]
        %v2070 = vld [vmem:[%s2067 + $0x8] sm:$0xf]
        %v2071 = vld [vmem:[%s2067 + $0xc] sm:$0xf]
        %v2072 = vld [vmem:[%s2067 + $0x10] sm:$0xf]
        %v2073 = vld [vmem:[%s2067 + $0x14] sm:$0xf]
        %v2074 = vld [vmem:[%s2067 + $0x18] sm:$0xf]
        %v2075 = vld [vmem:[%s2067 + $0x1c] sm:$0xf]
        %v2076 = vld [vmem:[%s2067 + $0x20] sm:$0xf]
        %v2077 = vld [vmem:[%s2067 + $0x24] sm:$0xf]
        %v2078 = vld [vmem:[%s2067 + $0x28] sm:$0xf]
        %v2079 = vld [vmem:[%s2067 + $0x2c] sm:$0xf]
        %v2080 = vld [vmem:[%s2067 + $0x30] sm:$0xf]
        %v2081 = vld [vmem:[%s2067 + $0x34] sm:$0xf]
        %v2082 = vld [vmem:[%s2067 + $0x38] sm:$0xf]
        %v2083 = vld [vmem:[%s2067 + $0x3c] sm:$0xf]
        %v2095 = vrot.slane %v2056, 7
        %v2096 = vrot.slane %v2057, 7
        %v2097 = vsel %vm891, %v2095, %v2096
        %v2098 = vrot.slane %v2058, 7
        %v2099 = vsel %vm891, %v2096, %v2098
        %v2100 = vrot.slane %v2059, 7
        %v2101 = vsel %vm891, %v2098, %v2100
        %v2102 = vrot.slane %v2060, 7
        %v2103 = vsel %vm891, %v2100, %v2102
        %v2104 = vrot.slane %v2061, 7
        %v2105 = vsel %vm891, %v2102, %v2104
        %v2106 = vrot.slane %v2062, 7
        %v2107 = vsel %vm891, %v2104, %v2106
        %v2108 = vrot.slane %v2063, 7
        %v2109 = vsel %vm891, %v2106, %v2108
        %v2110 = vrot.slane %v2064, 7
        %v2111 = vsel %vm891, %v2108, %v2110
        %v2112 = vrot.slane %v2065, 7
        %v2113 = vsel %vm891, %v2110, %v2112
        %v2114 = vrot.slane %v2066, 7
        %v2115 = vsel %vm891, %v2112, %v2114
        %v2142 = vunpack.c.l.b16 %v2068
        %v2143 = vunpack.c.l.b16 %v2069
        %v2144 = vunpack.c.l.b16 %v2070
        %v2145 = vunpack.c.l.b16 %v2071
        %v2146 = vunpack.c.l.b16 %v2072
        %v2147 = vunpack.c.l.b16 %v2073
        %v2148 = vunpack.c.l.b16 %v2074
        %v2149 = vunpack.c.l.b16 %v2075
        %v2150 = vunpack.c.l.b16 %v2076
        %v2151 = vunpack.c.l.b16 %v2077
        %v2152 = vunpack.c.l.b16 %v2078
        %v2153 = vunpack.c.l.b16 %v2079
        %v2154 = vunpack.c.l.b16 %v2080
        %v2155 = vunpack.c.l.b16 %v2081
        %v2156 = vunpack.c.l.b16 %v2082
        %v2157 = vunpack.c.l.b16 %v2083
        %v2158 = vpack.c.b16 %v2143, %v2142
        %v2159 = vpack.c.b16 %v2145, %v2144
        %v2160 = vpack.c.b16 %v2147, %v2146
        %v2161 = vpack.c.b16 %v2149, %v2148
        %v2162 = vpack.c.b16 %v2151, %v2150
        %v2163 = vpack.c.b16 %v2153, %v2152
        %v2164 = vpack.c.b16 %v2155, %v2154
        %v2165 = vpack.c.b16 %v2157, %v2156
        %2174 = vmatprep.subr.bf16.mxu0 0
        %2175 = vmatpush1.bf16.msra.mxu0 %v2158
        %2176 = vmatprep.subr.bf16.mxu0 0
        %2177 = vmatpush1.bf16.msra.mxu0 %v2159
        %2178 = vmatprep.subr.bf16.mxu0 0
        %2179 = vmatpush1.bf16.msra.mxu0 %v2160
        %2180 = vmatprep.subr.bf16.mxu0 0
        %2181 = vmatpush1.bf16.msra.mxu0 %v2161
        %2182 = vmatprep.subr.bf16.mxu0 0
        %2183 = vmatpush1.bf16.msra.mxu0 %v2162
        %2184 = vmatprep.subr.bf16.mxu0 0
        %2185 = vmatpush1.bf16.msra.mxu0 %v2163
        %2186 = vmatprep.subr.bf16.mxu0 0
        %2187 = vmatpush1.bf16.msra.mxu0 %v2164
        %2188 = vmatprep.subr.bf16.mxu0 0
        %2189 = vmatpush1.bf16.msra.mxu0 %v2165
        %2190 = vmatprep.subr.bf16.mxu0 0
        %2191 = vmatpush1.bf16.msra.mxu0 0
        %2192 = vmatprep.subr.bf16.mxu0 0
        %2193 = vmatpush1.bf16.msra.mxu0 0
        %2194 = vmatprep.subr.bf16.mxu0 0
        %2195 = vmatpush1.bf16.msra.mxu0 0
        %2196 = vmatprep.subr.bf16.mxu0 0
        %2197 = vmatpush1.bf16.msra.mxu0 0
        %2198 = vmatprep.subr.bf16.mxu0 0
        %2199 = vmatpush1.bf16.msra.mxu0 0
        %2200 = vmatprep.subr.bf16.mxu0 0
        %2201 = vmatpush1.bf16.msra.mxu0 0
        %2202 = vmatprep.subr.bf16.mxu0 0
        %2203 = vmatpush1.bf16.msra.mxu0 0
        %2204 = vmatprep.subr.bf16.mxu0 0
        %2205 = vmatpush1.bf16.msra.mxu0 0
        %2206 = vmatprep.mubr.bf16.mxu0 0
        %2207 = vmatmul.mubr.bf16.gmra.mrb[0].mxu0 %v2097
        %v2208 = vpop.f32.mrb[0].mxu0
        %v2209 = vadd.f32 0.0, %v2208
        %v2210 = vpop.f32.mrb[0].mxu0
        %v2211 = vpop.f32.mrb[0].mxu0
        %v2212 = vadd.f32 0.0, %v2211
        %v2213 = vpop.f32.mrb[0].mxu0
        %2214 = vmatprep.mubr.bf16.mxu0 0
        %2215 = vmatmul.mubr.bf16.gmra.mrb[0].mxu0 %v2099
        %v2216 = vpop.f32.mrb[0].mxu0
        %v2217 = vadd.f32 0.0, %v2216
        %v2218 = vpop.f32.mrb[0].mxu0
        %v2219 = vpop.f32.mrb[0].mxu0
        %v2220 = vadd.f32 0.0, %v2219
        %v2221 = vpop.f32.mrb[0].mxu0
        %2222 = vmatprep.mubr.bf16.mxu0 0
        %2223 = vmatmul.mubr.bf16.gmra.mrb[0].mxu0 %v2101
        %v2224 = vpop.f32.mrb[0].mxu0
        %v2225 = vadd.f32 0.0, %v2224
        %v2226 = vpop.f32.mrb[0].mxu0
        %v2227 = vpop.f32.mrb[0].mxu0
        %v2228 = vadd.f32 0.0, %v2227
        %v2229 = vpop.f32.mrb[0].mxu0
        %2230 = vmatprep.mubr.bf16.mxu0 0
        %2231 = vmatmul.mubr.bf16.gmra.mrb[0].mxu0 %v2103
        %v2232 = vpop.f32.mrb[0].mxu0
        %v2233 = vadd.f32 0.0, %v2232
        %v2234 = vpop.f32.mrb[0].mxu0
        %v2235 = vpop.f32.mrb[0].mxu0
        %v2236 = vadd.f32 0.0, %v2235
        %v2237 = vpop.f32.mrb[0].mxu0
        %2238 = vmatprep.mubr.bf16.mxu0 0
        %2239 = vmatmul.mubr.bf16.gmra.mrb[0].mxu0 %v2105
        %v2240 = vpop.f32.mrb[0].mxu0
        %v2241 = vadd.f32 0.0, %v2240
        %v2242 = vpop.f32.mrb[0].mxu0
        %v2243 = vpop.f32.mrb[0].mxu0
        %v2244 = vadd.f32 0.0, %v2243
        %v2245 = vpop.f32.mrb[0].mxu0
        %2246 = vmatprep.mubr.bf16.mxu0 0
        %2247 = vmatmul.mubr.bf16.gmra.mrb[0].mxu0 %v2107
        %v2248 = vpop.f32.mrb[0].mxu0
        %v2249 = vadd.f32 0.0, %v2248
        %v2250 = vpop.f32.mrb[0].mxu0
        %v2251 = vpop.f32.mrb[0].mxu0
        %v2252 = vadd.f32 0.0, %v2251
        %v2253 = vpop.f32.mrb[0].mxu0
        %2254 = vmatprep.mubr.bf16.mxu0 0
        %2255 = vmatmul.mubr.bf16.gmra.mrb[0].mxu0 %v2109
        %v2256 = vpop.f32.mrb[0].mxu0
        %v2257 = vadd.f32 0.0, %v2256
        %v2258 = vpop.f32.mrb[0].mxu0
        %v2259 = vpop.f32.mrb[0].mxu0
        %v2260 = vadd.f32 0.0, %v2259
        %v2261 = vpop.f32.mrb[0].mxu0
        %2262 = vmatprep.mubr.bf16.mxu0 0
        %2263 = vmatmul.mubr.bf16.gmra.mrb[0].mxu0 %v2111
        %v2264 = vpop.f32.mrb[0].mxu0
        %v2265 = vadd.f32 0.0, %v2264
        %v2266 = vpop.f32.mrb[0].mxu0
        %v2267 = vpop.f32.mrb[0].mxu0
        %v2268 = vadd.f32 0.0, %v2267
        %v2269 = vpop.f32.mrb[0].mxu0
        %2270 = vmatprep.mubr.bf16.mxu0 0
        %2271 = vmatmul.mubr.bf16.gmra.mrb[0].mxu0 %v2113
        %v2272 = vpop.f32.mrb[0].mxu0
        %v2273 = vadd.f32 0.0, %v2272
        %v2274 = vpop.f32.mrb[0].mxu0
        %v2275 = vpop.f32.mrb[0].mxu0
        %v2276 = vadd.f32 0.0, %v2275
        %v2277 = vpop.f32.mrb[0].mxu0
        %2278 = vmatprep.mubr.bf16.mxu0 0
        %2279 = vmatmul.mubr.bf16.gmra.mrb[0].mxu0 %v2115
        %v2280 = vpop.f32.mrb[0].mxu0
        %v2281 = vadd.f32 0.0, %v2280
        %v2282 = vpop.f32.mrb[0].mxu0
        %v2283 = vpop.f32.mrb[0].mxu0
        %v2284 = vadd.f32 0.0, %v2283
        %v2285 = vpop.f32.mrb[0].mxu0
        %2286 = vdwg.mxu0
        %v2287 = vadd.f32 %v2036, %v2209
        %v2288 = vadd.f32 %v2037, %v2212
        %v2289 = vadd.f32 %v2038, %v2217
        %v2290 = vadd.f32 %v2039, %v2220
        %v2291 = vadd.f32 %v2040, %v2225
        %v2292 = vadd.f32 %v2041, %v2228
        %v2293 = vadd.f32 %v2042, %v2233
        %v2294 = vadd.f32 %v2043, %v2236
        %v2295 = vadd.f32 %v2044, %v2241
        %v2296 = vadd.f32 %v2045, %v2244
        %v2297 = vadd.f32 %v2046, %v2249
        %v2298 = vadd.f32 %v2047, %v2252
        %v2299 = vadd.f32 %v2048, %v2257
        %v2300 = vadd.f32 %v2049, %v2260
        %v2301 = vadd.f32 %v2050, %v2265
        %v2302 = vadd.f32 %v2051, %v2268
        %v2303 = vadd.f32 %v2052, %v2273
        %v2304 = vadd.f32 %v2053, %v2276
        %v2305 = vadd.f32 %v2054, %v2281
        %v2306 = vadd.f32 %v2055, %v2284
        %v2307 = vld [vmem:[#allocation2 + $0x78] sm:$0xff]
        %s2308 = scalar_lea.vmem [#allocation3], 448
        %v2309 = vld [vmem:[%s2308] sm:$0xf]
        %v2310 = vld [vmem:[%s2308 + $0x4] sm:$0xf]
        %v2311 = vld [vmem:[%s2308 + $0x8] sm:$0xf]
        %v2312 = vld [vmem:[%s2308 + $0xc] sm:$0xf]
        %v2313 = vld [vmem:[%s2308 + $0x10] sm:$0xf]
        %v2314 = vld [vmem:[%s2308 + $0x14] sm:$0xf]
        %v2315 = vld [vmem:[%s2308 + $0x18] sm:$0xf]
        %v2316 = vld [vmem:[%s2308 + $0x1c] sm:$0xf]
        %v2317 = vld [vmem:[%s2308 + $0x20] sm:$0xf]
        %v2318 = vld [vmem:[%s2308 + $0x24] sm:$0xf]
        %v2319 = vld [vmem:[%s2308 + $0x28] sm:$0xf]
        %v2320 = vld [vmem:[%s2308 + $0x2c] sm:$0xf]
        %v2321 = vld [vmem:[%s2308 + $0x30] sm:$0xf]
        %v2322 = vld [vmem:[%s2308 + $0x34] sm:$0xf]
        %v2323 = vld [vmem:[%s2308 + $0x38] sm:$0xf]
        %v2324 = vld [vmem:[%s2308 + $0x3c] sm:$0xf]
        %v2341 = vunpack.c.l.b16 %v2309
        %v2342 = vunpack.c.l.b16 %v2310
        %v2343 = vunpack.c.l.b16 %v2311
        %v2344 = vunpack.c.l.b16 %v2312
        %v2345 = vunpack.c.l.b16 %v2313
        %v2346 = vunpack.c.l.b16 %v2314
        %v2347 = vunpack.c.l.b16 %v2315
        %v2348 = vunpack.c.l.b16 %v2316
        %v2349 = vunpack.c.l.b16 %v2317
        %v2350 = vunpack.c.l.b16 %v2318
        %v2351 = vunpack.c.l.b16 %v2319
        %v2352 = vunpack.c.l.b16 %v2320
        %v2353 = vunpack.c.l.b16 %v2321
        %v2354 = vunpack.c.l.b16 %v2322
        %v2355 = vunpack.c.l.b16 %v2323
        %v2356 = vunpack.c.l.b16 %v2324
        %v2357 = vpack.c.b16 %v2342, %v2341
        %v2358 = vpack.c.b16 %v2344, %v2343
        %v2359 = vpack.c.b16 %v2346, %v2345
        %v2360 = vpack.c.b16 %v2348, %v2347
        %v2361 = vpack.c.b16 %v2350, %v2349
        %v2362 = vpack.c.b16 %v2352, %v2351
        %v2363 = vpack.c.b16 %v2354, %v2353
        %v2364 = vpack.c.b16 %v2356, %v2355
        %2373 = vmatprep.subr.bf16.mxu0 0
        %2374 = vmatpush1.bf16.msra.mxu0 %v2357
        %2375 = vmatprep.subr.bf16.mxu0 0
        %2376 = vmatpush1.bf16.msra.mxu0 %v2358
        %2377 = vmatprep.subr.bf16.mxu0 0
        %2378 = vmatpush1.bf16.msra.mxu0 %v2359
        %2379 = vmatprep.subr.bf16.mxu0 0
        %2380 = vmatpush1.bf16.msra.mxu0 %v2360
        %2381 = vmatprep.subr.bf16.mxu0 0
        %2382 = vmatpush1.bf16.msra.mxu0 %v2361
        %2383 = vmatprep.subr.bf16.mxu0 0
        %2384 = vmatpush1.bf16.msra.mxu0 %v2362
        %2385 = vmatprep.subr.bf16.mxu0 0
        %2386 = vmatpush1.bf16.msra.mxu0 %v2363
        %2387 = vmatprep.subr.bf16.mxu0 0
        %2388 = vmatpush1.bf16.msra.mxu0 %v2364
        %2389 = vmatprep.subr.bf16.mxu0 0
        %2390 = vmatpush1.bf16.msra.mxu0 0
        %2391 = vmatprep.subr.bf16.mxu0 0
        %2392 = vmatpush1.bf16.msra.mxu0 0
        %2393 = vmatprep.subr.bf16.mxu0 0
        %2394 = vmatpush1.bf16.msra.mxu0 0
        %2395 = vmatprep.subr.bf16.mxu0 0
        %2396 = vmatpush1.bf16.msra.mxu0 0
        %2397 = vmatprep.subr.bf16.mxu0 0
        %2398 = vmatpush1.bf16.msra.mxu0 0
        %2399 = vmatprep.subr.bf16.mxu0 0
        %2400 = vmatpush1.bf16.msra.mxu0 0
        %2401 = vmatprep.subr.bf16.mxu0 0
        %2402 = vmatpush1.bf16.msra.mxu0 0
        %2403 = vmatprep.subr.bf16.mxu0 0
        %2404 = vmatpush1.bf16.msra.mxu0 0
        %2405 = vmatprep.mubr.bf16.mxu0 0
        %2406 = vmatmul.mubr.bf16.gmra.mrb[0].mxu0 %v2057
        %v2407 = vpop.f32.mrb[0].mxu0
        %v2408 = vadd.f32 0.0, %v2407
        %v2409 = vpop.f32.mrb[0].mxu0
        %v2410 = vpop.f32.mrb[0].mxu0
        %v2411 = vadd.f32 0.0, %v2410
        %v2412 = vpop.f32.mrb[0].mxu0
        %2413 = vmatprep.mubr.bf16.mxu0 0
        %2414 = vmatmul.mubr.bf16.gmra.mrb[0].mxu0 %v2058
        %v2415 = vpop.f32.mrb[0].mxu0
        %v2416 = vadd.f32 0.0, %v2415
        %v2417 = vpop.f32.mrb[0].mxu0
        %v2418 = vpop.f32.mrb[0].mxu0
        %v2419 = vadd.f32 0.0, %v2418
        %v2420 = vpop.f32.mrb[0].mxu0
        %2421 = vmatprep.mubr.bf16.mxu0 0
        %2422 = vmatmul.mubr.bf16.gmra.mrb[0].mxu0 %v2059
        %v2423 = vpop.f32.mrb[0].mxu0
        %v2424 = vadd.f32 0.0, %v2423
        %v2425 = vpop.f32.mrb[0].mxu0
        %v2426 = vpop.f32.mrb[0].mxu0
        %v2427 = vadd.f32 0.0, %v2426
        %v2428 = vpop.f32.mrb[0].mxu0
        %2429 = vmatprep.mubr.bf16.mxu0 0
        %2430 = vmatmul.mubr.bf16.gmra.mrb[0].mxu0 %v2060
        %v2431 = vpop.f32.mrb[0].mxu0
        %v2432 = vadd.f32 0.0, %v2431
        %v2433 = vpop.f32.mrb[0].mxu0
        %v2434 = vpop.f32.mrb[0].mxu0
        %v2435 = vadd.f32 0.0, %v2434
        %v2436 = vpop.f32.mrb[0].mxu0
        %2437 = vmatprep.mubr.bf16.mxu0 0
        %2438 = vmatmul.mubr.bf16.gmra.mrb[0].mxu0 %v2061
        %v2439 = vpop.f32.mrb[0].mxu0
        %v2440 = vadd.f32 0.0, %v2439
        %v2441 = vpop.f32.mrb[0].mxu0
        %v2442 = vpop.f32.mrb[0].mxu0
        %v2443 = vadd.f32 0.0, %v2442
        %v2444 = vpop.f32.mrb[0].mxu0
        %2445 = vmatprep.mubr.bf16.mxu0 0
        %2446 = vmatmul.mubr.bf16.gmra.mrb[0].mxu0 %v2062
        %v2447 = vpop.f32.mrb[0].mxu0
        %v2448 = vadd.f32 0.0, %v2447
        %v2449 = vpop.f32.mrb[0].mxu0
        %v2450 = vpop.f32.mrb[0].mxu0
        %v2451 = vadd.f32 0.0, %v2450
        %v2452 = vpop.f32.mrb[0].mxu0
        %2453 = vmatprep.mubr.bf16.mxu0 0
        %2454 = vmatmul.mubr.bf16.gmra.mrb[0].mxu0 %v2063
        %v2455 = vpop.f32.mrb[0].mxu0
        %v2456 = vadd.f32 0.0, %v2455
        %v2457 = vpop.f32.mrb[0].mxu0
        %v2458 = vpop.f32.mrb[0].mxu0
        %v2459 = vadd.f32 0.0, %v2458
        %v2460 = vpop.f32.mrb[0].mxu0
        %2461 = vmatprep.mubr.bf16.mxu0 0
        %2462 = vmatmul.mubr.bf16.gmra.mrb[0].mxu0 %v2064
        %v2463 = vpop.f32.mrb[0].mxu0
        %v2464 = vadd.f32 0.0, %v2463
        %v2465 = vpop.f32.mrb[0].mxu0
        %v2466 = vpop.f32.mrb[0].mxu0
        %v2467 = vadd.f32 0.0, %v2466
        %v2468 = vpop.f32.mrb[0].mxu0
        %2469 = vmatprep.mubr.bf16.mxu0 0
        %2470 = vmatmul.mubr.bf16.gmra.mrb[0].mxu0 %v2065
        %v2471 = vpop.f32.mrb[0].mxu0
        %v2472 = vadd.f32 0.0, %v2471
        %v2473 = vpop.f32.mrb[0].mxu0
        %v2474 = vpop.f32.mrb[0].mxu0
        %v2475 = vadd.f32 0.0, %v2474
        %v2476 = vpop.f32.mrb[0].mxu0
        %2477 = vmatprep.mubr.bf16.mxu0 0
        %2478 = vmatmul.mubr.bf16.gmra.mrb[0].mxu0 %v2307
        %v2479 = vpop.f32.mrb[0].mxu0
        %v2480 = vadd.f32 0.0, %v2479
        %v2481 = vpop.f32.mrb[0].mxu0
        %v2482 = vpop.f32.mrb[0].mxu0
        %v2483 = vadd.f32 0.0, %v2482
        %v2484 = vpop.f32.mrb[0].mxu0
        %2485 = vdwg.mxu0
        %v2486 = vadd.f32 %v2287, %v2408
        %v2487 = vadd.f32 %v2288, %v2411
        %v2488 = vadd.f32 %v2289, %v2416
        %v2489 = vadd.f32 %v2290, %v2419
        %v2490 = vadd.f32 %v2291, %v2424
        %v2491 = vadd.f32 %v2292, %v2427
        %v2492 = vadd.f32 %v2293, %v2432
        %v2493 = vadd.f32 %v2294, %v2435
        %v2494 = vadd.f32 %v2295, %v2440
        %v2495 = vadd.f32 %v2296, %v2443
        %v2496 = vadd.f32 %v2297, %v2448
        %v2497 = vadd.f32 %v2298, %v2451
        %v2498 = vadd.f32 %v2299, %v2456
        %v2499 = vadd.f32 %v2300, %v2459
        %v2500 = vadd.f32 %v2301, %v2464
        %v2501 = vadd.f32 %v2302, %v2467
        %v2502 = vadd.f32 %v2303, %v2472
        %v2503 = vadd.f32 %v2304, %v2475
        %v2504 = vadd.f32 %v2305, %v2480
        %v2505 = vadd.f32 %v2306, %v2483
        %v2506 = vld [vmem:[#allocation2 + $0x30] sm:$0xfe]
        %v2507 = vld [vmem:[#allocation2 + $0x38] sm:$0xff]
        %v2508 = vld [vmem:[#allocation2 + $0x40] sm:$0xff]
        %v2509 = vld [vmem:[#allocation2 + $0x48] sm:$0xff]
        %v2510 = vld [vmem:[#allocation2 + $0x50] sm:$0xff]
        %v2511 = vld [vmem:[#allocation2 + $0x58] sm:$0xff]
        %v2512 = vld [vmem:[#allocation2 + $0x60] sm:$0xff]
        %v2513 = vld [vmem:[#allocation2 + $0x68] sm:$0xff]
        %v2514 = vld [vmem:[#allocation2 + $0x70] sm:$0xff]
        %v2515 = vld [vmem:[#allocation2 + $0x78] sm:$0xff]
        %v2516 = vld [vmem:[#allocation2 + $0x80] sm:$0x1]
        %s2517 = scalar_lea.vmem [#allocation3], 512
        %v2518 = vld [vmem:[%s2517] sm:$0xf]
        %v2519 = vld [vmem:[%s2517 + $0x4] sm:$0xf]
        %v2520 = vld [vmem:[%s2517 + $0x8] sm:$0xf]
        %v2521 = vld [vmem:[%s2517 + $0xc] sm:$0xf]
        %v2522 = vld [vmem:[%s2517 + $0x10] sm:$0xf]
        %v2523 = vld [vmem:[%s2517 + $0x14] sm:$0xf]
        %v2524 = vld [vmem:[%s2517 + $0x18] sm:$0xf]
        %v2525 = vld [vmem:[%s2517 + $0x1c] sm:$0xf]
        %v2526 = vld [vmem:[%s2517 + $0x20] sm:$0xf]
        %v2527 = vld [vmem:[%s2517 + $0x24] sm:$0xf]
        %v2528 = vld [vmem:[%s2517 + $0x28] sm:$0xf]
        %v2529 = vld [vmem:[%s2517 + $0x2c] sm:$0xf]
        %v2530 = vld [vmem:[%s2517 + $0x30] sm:$0xf]
        %v2531 = vld [vmem:[%s2517 + $0x34] sm:$0xf]
        %v2532 = vld [vmem:[%s2517 + $0x38] sm:$0xf]
        %v2533 = vld [vmem:[%s2517 + $0x3c] sm:$0xf]
        %v2545 = vrot.slane %v2506, 1
        %v2546 = vrot.slane %v2507, 1
        %v2547 = vsel %vm1123, %v2545, %v2546
        %v2548 = vrot.slane %v2508, 1
        %v2549 = vsel %vm1123, %v2546, %v2548
        %v2550 = vrot.slane %v2509, 1
        %v2551 = vsel %vm1123, %v2548, %v2550
        %v2552 = vrot.slane %v2510, 1
        %v2553 = vsel %vm1123, %v2550, %v2552
        %v2554 = vrot.slane %v2511, 1
        %v2555 = vsel %vm1123, %v2552, %v2554
        %v2556 = vrot.slane %v2512, 1
        %v2557 = vsel %vm1123, %v2554, %v2556
        %v2558 = vrot.slane %v2513, 1
        %v2559 = vsel %vm1123, %v2556, %v2558
        %v2560 = vrot.slane %v2514, 1
        %v2561 = vsel %vm1123, %v2558, %v2560
        %v2562 = vrot.slane %v2515, 1
        %v2563 = vsel %vm1123, %v2560, %v2562
        %v2564 = vrot.slane %v2516, 1
        %v2565 = vsel %vm1123, %v2562, %v2564
        %v2592 = vunpack.c.l.b16 %v2518
        %v2593 = vunpack.c.l.b16 %v2519
        %v2594 = vunpack.c.l.b16 %v2520
        %v2595 = vunpack.c.l.b16 %v2521
        %v2596 = vunpack.c.l.b16 %v2522
        %v2597 = vunpack.c.l.b16 %v2523
        %v2598 = vunpack.c.l.b16 %v2524
        %v2599 = vunpack.c.l.b16 %v2525
        %v2600 = vunpack.c.l.b16 %v2526
        %v2601 = vunpack.c.l.b16 %v2527
        %v2602 = vunpack.c.l.b16 %v2528
        %v2603 = vunpack.c.l.b16 %v2529
        %v2604 = vunpack.c.l.b16 %v2530
        %v2605 = vunpack.c.l.b16 %v2531
        %v2606 = vunpack.c.l.b16 %v2532
        %v2607 = vunpack.c.l.b16 %v2533
        %v2608 = vpack.c.b16 %v2593, %v2592
        %v2609 = vpack.c.b16 %v2595, %v2594
        %v2610 = vpack.c.b16 %v2597, %v2596
        %v2611 = vpack.c.b16 %v2599, %v2598
        %v2612 = vpack.c.b16 %v2601, %v2600
        %v2613 = vpack.c.b16 %v2603, %v2602
        %v2614 = vpack.c.b16 %v2605, %v2604
        %v2615 = vpack.c.b16 %v2607, %v2606
        %2624 = vmatprep.subr.bf16.mxu0 0
        %2625 = vmatpush1.bf16.msra.mxu0 %v2608
        %2626 = vmatprep.subr.bf16.mxu0 0
        %2627 = vmatpush1.bf16.msra.mxu0 %v2609
        %2628 = vmatprep.subr.bf16.mxu0 0
        %2629 = vmatpush1.bf16.msra.mxu0 %v2610
        %2630 = vmatprep.subr.bf16.mxu0 0
        %2631 = vmatpush1.bf16.msra.mxu0 %v2611
        %2632 = vmatprep.subr.bf16.mxu0 0
        %2633 = vmatpush1.bf16.msra.mxu0 %v2612
        %2634 = vmatprep.subr.bf16.mxu0 0
        %2635 = vmatpush1.bf16.msra.mxu0 %v2613
        %2636 = vmatprep.subr.bf16.mxu0 0
        %2637 = vmatpush1.bf16.msra.mxu0 %v2614
        %2638 = vmatprep.subr.bf16.mxu0 0
        %2639 = vmatpush1.bf16.msra.mxu0 %v2615
        %2640 = vmatprep.subr.bf16.mxu0 0
        %2641 = vmatpush1.bf16.msra.mxu0 0
        %2642 = vmatprep.subr.bf16.mxu0 0
        %2643 = vmatpush1.bf16.msra.mxu0 0
        %2644 = vmatprep.subr.bf16.mxu0 0
        %2645 = vmatpush1.bf16.msra.mxu0 0
        %2646 = vmatprep.subr.bf16.mxu0 0
        %2647 = vmatpush1.bf16.msra.mxu0 0
        %2648 = vmatprep.subr.bf16.mxu0 0
        %2649 = vmatpush1.bf16.msra.mxu0 0
        %2650 = vmatprep.subr.bf16.mxu0 0
        %2651 = vmatpush1.bf16.msra.mxu0 0
        %2652 = vmatprep.subr.bf16.mxu0 0
        %2653 = vmatpush1.bf16.msra.mxu0 0
        %2654 = vmatprep.subr.bf16.mxu0 0
        %2655 = vmatpush1.bf16.msra.mxu0 0
        %2656 = vmatprep.mubr.bf16.mxu0 0
        %2657 = vmatmul.mubr.bf16.gmra.mrb[0].mxu0 %v2547
        %v2658 = vpop.f32.mrb[0].mxu0
        %v2659 = vadd.f32 0.0, %v2658
        %v2660 = vpop.f32.mrb[0].mxu0
        %v2661 = vpop.f32.mrb[0].mxu0
        %v2662 = vadd.f32 0.0, %v2661
        %v2663 = vpop.f32.mrb[0].mxu0
        %2664 = vmatprep.mubr.bf16.mxu0 0
        %2665 = vmatmul.mubr.bf16.gmra.mrb[0].mxu0 %v2549
        %v2666 = vpop.f32.mrb[0].mxu0
        %v2667 = vadd.f32 0.0, %v2666
        %v2668 = vpop.f32.mrb[0].mxu0
        %v2669 = vpop.f32.mrb[0].mxu0
        %v2670 = vadd.f32 0.0, %v2669
        %v2671 = vpop.f32.mrb[0].mxu0
        %2672 = vmatprep.mubr.bf16.mxu0 0
        %2673 = vmatmul.mubr.bf16.gmra.mrb[0].mxu0 %v2551
        %v2674 = vpop.f32.mrb[0].mxu0
        %v2675 = vadd.f32 0.0, %v2674
        %v2676 = vpop.f32.mrb[0].mxu0
        %v2677 = vpop.f32.mrb[0].mxu0
        %v2678 = vadd.f32 0.0, %v2677
        %v2679 = vpop.f32.mrb[0].mxu0
        %2680 = vmatprep.mubr.bf16.mxu0 0
        %2681 = vmatmul.mubr.bf16.gmra.mrb[0].mxu0 %v2553
        %v2682 = vpop.f32.mrb[0].mxu0
        %v2683 = vadd.f32 0.0, %v2682
        %v2684 = vpop.f32.mrb[0].mxu0
        %v2685 = vpop.f32.mrb[0].mxu0
        %v2686 = vadd.f32 0.0, %v2685
        %v2687 = vpop.f32.mrb[0].mxu0
        %2688 = vmatprep.mubr.bf16.mxu0 0
        %2689 = vmatmul.mubr.bf16.gmra.mrb[0].mxu0 %v2555
        %v2690 = vpop.f32.mrb[0].mxu0
        %v2691 = vadd.f32 0.0, %v2690
        %v2692 = vpop.f32.mrb[0].mxu0
        %v2693 = vpop.f32.mrb[0].mxu0
        %v2694 = vadd.f32 0.0, %v2693
        %v2695 = vpop.f32.mrb[0].mxu0
        %2696 = vmatprep.mubr.bf16.mxu0 0
        %2697 = vmatmul.mubr.bf16.gmra.mrb[0].mxu0 %v2557
        %v2698 = vpop.f32.mrb[0].mxu0
        %v2699 = vadd.f32 0.0, %v2698
        %v2700 = vpop.f32.mrb[0].mxu0
        %v2701 = vpop.f32.mrb[0].mxu0
        %v2702 = vadd.f32 0.0, %v2701
        %v2703 = vpop.f32.mrb[0].mxu0
        %2704 = vmatprep.mubr.bf16.mxu0 0
        %2705 = vmatmul.mubr.bf16.gmra.mrb[0].mxu0 %v2559
        %v2706 = vpop.f32.mrb[0].mxu0
        %v2707 = vadd.f32 0.0, %v2706
        %v2708 = vpop.f32.mrb[0].mxu0
        %v2709 = vpop.f32.mrb[0].mxu0
        %v2710 = vadd.f32 0.0, %v2709
        %v2711 = vpop.f32.mrb[0].mxu0
        %2712 = vmatprep.mubr.bf16.mxu0 0
        %2713 = vmatmul.mubr.bf16.gmra.mrb[0].mxu0 %v2561
        %v2714 = vpop.f32.mrb[0].mxu0
        %v2715 = vadd.f32 0.0, %v2714
        %v2716 = vpop.f32.mrb[0].mxu0
        %v2717 = vpop.f32.mrb[0].mxu0
        %v2718 = vadd.f32 0.0, %v2717
        %v2719 = vpop.f32.mrb[0].mxu0
        %2720 = vmatprep.mubr.bf16.mxu0 0
        %2721 = vmatmul.mubr.bf16.gmra.mrb[0].mxu0 %v2563
        %v2722 = vpop.f32.mrb[0].mxu0
        %v2723 = vadd.f32 0.0, %v2722
        %v2724 = vpop.f32.mrb[0].mxu0
        %v2725 = vpop.f32.mrb[0].mxu0
        %v2726 = vadd.f32 0.0, %v2725
        %v2727 = vpop.f32.mrb[0].mxu0
        %2728 = vmatprep.mubr.bf16.mxu0 0
        %2729 = vmatmul.mubr.bf16.gmra.mrb[0].mxu0 %v2565
        %v2730 = vpop.f32.mrb[0].mxu0
        %v2731 = vadd.f32 0.0, %v2730
        %v2732 = vpop.f32.mrb[0].mxu0
        %v2733 = vpop.f32.mrb[0].mxu0
        %v2734 = vadd.f32 0.0, %v2733
        %v2735 = vpop.f32.mrb[0].mxu0
        %2736 = vdwg.mxu0
        %v2737 = vadd.f32 %v2486, %v2659
        %v2738 = vadd.f32 %v2487, %v2662
        %v2739 = vadd.f32 %v2488, %v2667
        %v2740 = vadd.f32 %v2489, %v2670
        %v2741 = vadd.f32 %v2490, %v2675
        %v2742 = vadd.f32 %v2491, %v2678
        %v2743 = vadd.f32 %v2492, %v2683
        %v2744 = vadd.f32 %v2493, %v2686
        %v2745 = vadd.f32 %v2494, %v2691
        %v2746 = vadd.f32 %v2495, %v2694
        %v2747 = vadd.f32 %v2496, %v2699
        %v2748 = vadd.f32 %v2497, %v2702
        %v2749 = vadd.f32 %v2498, %v2707
        %v2750 = vadd.f32 %v2499, %v2710
        %v2751 = vadd.f32 %v2500, %v2715
        %v2752 = vadd.f32 %v2501, %v2718
        %v2753 = vadd.f32 %v2502, %v2723
        %v2754 = vadd.f32 %v2503, %v2726
        %v2755 = vadd.f32 %v2504, %v2731
        %v2756 = vadd.f32 %v2505, %v2734
        %v2757 = vld [vmem:[%s3] sm:$0x1]
        %v2759 = vlaneseq
        %v2760 = vshrl.u32 %v2759, 7
        %v2761 = vsub.s32 0, %v2760
        %v2762 = vrot.slane %v2757, %v2761
        %v2764 = vadd.f32 %v2737, %v2762
        %v2765 = vadd.f32 %v2738, %v2762
        %v2766 = vadd.f32 %v2739, %v2762
        %v2767 = vadd.f32 %v2740, %v2762
        %v2768 = vadd.f32 %v2741, %v2762
        %v2769 = vadd.f32 %v2742, %v2762
        %v2770 = vadd.f32 %v2743, %v2762
        %v2771 = vadd.f32 %v2744, %v2762
        %v2772 = vadd.f32 %v2745, %v2762
        %v2773 = vadd.f32 %v2746, %v2762
        %v2774 = vadd.f32 %v2747, %v2762
        %v2775 = vadd.f32 %v2748, %v2762
        %v2776 = vadd.f32 %v2749, %v2762
        %v2777 = vadd.f32 %v2750, %v2762
        %v2778 = vadd.f32 %v2751, %v2762
        %v2779 = vadd.f32 %v2752, %v2762
        %v2780 = vadd.f32 %v2753, %v2762
        %v2781 = vadd.f32 %v2754, %v2762
        %v2782 = vadd.f32 %v2755, %v2762
        %v2783 = vadd.f32 %v2756, %v2762
        %v2784 = vmax.f32 %v2764, 0.0
        %v2785 = vmax.f32 %v2765, 0.0
        %v2786 = vmax.f32 %v2766, 0.0
        %v2787 = vmax.f32 %v2767, 0.0
        %v2788 = vmax.f32 %v2768, 0.0
        %v2789 = vmax.f32 %v2769, 0.0
        %v2790 = vmax.f32 %v2770, 0.0
        %v2791 = vmax.f32 %v2771, 0.0
        %v2792 = vmax.f32 %v2772, 0.0
        %v2793 = vmax.f32 %v2773, 0.0
        %v2794 = vmax.f32 %v2774, 0.0
        %v2795 = vmax.f32 %v2775, 0.0
        %v2796 = vmax.f32 %v2776, 0.0
        %v2797 = vmax.f32 %v2777, 0.0
        %v2798 = vmax.f32 %v2778, 0.0
        %v2799 = vmax.f32 %v2779, 0.0
        %v2800 = vmax.f32 %v2780, 0.0
        %v2801 = vmax.f32 %v2781, 0.0
        %v2802 = vmax.f32 %v2782, 0.0
        %v2803 = vmax.f32 %v2783, 0.0
        %v2804 = vpack.c.bf16 %v2785, %v2784
        %v2805 = vpack.c.bf16 %v2787, %v2786
        %v2806 = vpack.c.bf16 %v2789, %v2788
        %v2807 = vpack.c.bf16 %v2791, %v2790
        %v2808 = vpack.c.bf16 %v2793, %v2792
        %v2809 = vpack.c.bf16 %v2795, %v2794
        %v2810 = vpack.c.bf16 %v2797, %v2796
        %v2811 = vpack.c.bf16 %v2799, %v2798
        %v2812 = vpack.c.bf16 %v2801, %v2800
        %v2813 = vpack.c.bf16 %v2803, %v2802
        %v2814 = vld [vmem:[%s4] sm:$0xf]
        %v2815 = vld [vmem:[%s4 + $0x4] sm:$0xf]
        %v2816 = vld [vmem:[%s4 + $0x8] sm:$0xf]
        %v2817 = vld [vmem:[%s4 + $0xc] sm:$0xf]
        %v2818 = vld [vmem:[%s4 + $0x10] sm:$0xf]
        %v2819 = vld [vmem:[%s4 + $0x14] sm:$0xf]
        %v2820 = vld [vmem:[%s4 + $0x18] sm:$0xf]
        %v2821 = vld [vmem:[%s4 + $0x1c] sm:$0xf]
        %v2822 = vld [vmem:[%s4 + $0x20] sm:$0xf]
        %v2823 = vld [vmem:[%s4 + $0x24] sm:$0xf]
        %v2824 = vld [vmem:[%s4 + $0x28] sm:$0xf]
        %v2825 = vld [vmem:[%s4 + $0x2c] sm:$0xf]
        %v2826 = vld [vmem:[%s4 + $0x30] sm:$0xf]
        %v2827 = vld [vmem:[%s4 + $0x34] sm:$0xf]
        %v2828 = vld [vmem:[%s4 + $0x38] sm:$0xf]
        %v2829 = vld [vmem:[%s4 + $0x3c] sm:$0xf]
        %v2830 = vld [vmem:[%s5] sm:$0x1]
        %v2832 = vlaneseq
        %v2833 = vshrl.u32 %v2832, 7
        %v2834 = vsub.s32 0, %v2833
        %v2835 = vrot.slane %v2830, %v2834
        %v2853 = vunpack.c.l.b16 %v2814
        %v2854 = vunpack.c.l.b16 %v2815
        %v2855 = vunpack.c.l.b16 %v2816
        %v2856 = vunpack.c.l.b16 %v2817
        %v2857 = vunpack.c.l.b16 %v2818
        %v2858 = vunpack.c.l.b16 %v2819
        %v2859 = vunpack.c.l.b16 %v2820
        %v2860 = vunpack.c.l.b16 %v2821
        %v2861 = vunpack.c.l.b16 %v2822
        %v2862 = vunpack.c.l.b16 %v2823
        %v2863 = vunpack.c.l.b16 %v2824
        %v2864 = vunpack.c.l.b16 %v2825
        %v2865 = vunpack.c.l.b16 %v2826
        %v2866 = vunpack.c.l.b16 %v2827
        %v2867 = vunpack.c.l.b16 %v2828
        %v2868 = vunpack.c.l.b16 %v2829
        %v2869 = vpack.c.b16 %v2854, %v2853
        %v2870 = vpack.c.b16 %v2856, %v2855
        %v2871 = vpack.c.b16 %v2858, %v2857
        %v2872 = vpack.c.b16 %v2860, %v2859
        %v2873 = vpack.c.b16 %v2862, %v2861
        %v2874 = vpack.c.b16 %v2864, %v2863
        %v2875 = vpack.c.b16 %v2866, %v2865
        %v2876 = vpack.c.b16 %v2868, %v2867
        %2885 = vmatprep.subr.bf16.mxu0 0
        %2886 = vmatpush1.bf16.msra.mxu0 %v2869
        %2887 = vmatprep.subr.bf16.mxu0 0
        %2888 = vmatpush1.bf16.msra.mxu0 %v2870
        %2889 = vmatprep.subr.bf16.mxu0 0
        %2890 = vmatpush1.bf16.msra.mxu0 %v2871
        %2891 = vmatprep.subr.bf16.mxu0 0
        %2892 = vmatpush1.bf16.msra.mxu0 %v2872
        %2893 = vmatprep.subr.bf16.mxu0 0
        %2894 = vmatpush1.bf16.msra.mxu0 %v2873
        %2895 = vmatprep.subr.bf16.mxu0 0
        %2896 = vmatpush1.bf16.msra.mxu0 %v2874
        %2897 = vmatprep.subr.bf16.mxu0 0
        %2898 = vmatpush1.bf16.msra.mxu0 %v2875
        %2899 = vmatprep.subr.bf16.mxu0 0
        %2900 = vmatpush1.bf16.msra.mxu0 %v2876
        %2901 = vmatprep.subr.bf16.mxu0 0
        %2902 = vmatpush1.bf16.msra.mxu0 0
        %2903 = vmatprep.subr.bf16.mxu0 0
        %2904 = vmatpush1.bf16.msra.mxu0 0
        %2905 = vmatprep.subr.bf16.mxu0 0
        %2906 = vmatpush1.bf16.msra.mxu0 0
        %2907 = vmatprep.subr.bf16.mxu0 0
        %2908 = vmatpush1.bf16.msra.mxu0 0
        %2909 = vmatprep.subr.bf16.mxu0 0
        %2910 = vmatpush1.bf16.msra.mxu0 0
        %2911 = vmatprep.subr.bf16.mxu0 0
        %2912 = vmatpush1.bf16.msra.mxu0 0
        %2913 = vmatprep.subr.bf16.mxu0 0
        %2914 = vmatpush1.bf16.msra.mxu0 0
        %2915 = vmatprep.subr.bf16.mxu0 0
        %2916 = vmatpush1.bf16.msra.mxu0 0
        %2917 = vmatprep.mubr.bf16.mxu0 0
        %2918 = vmatmul.mubr.bf16.gmra.mrb[0].mxu0 %v2804
        %v2919 = vpop.f32.mrb[0].mxu0
        %v2920 = vadd.f32 %v2835, %v2919
        %v2921 = vpop.f32.mrb[0].mxu0
        %v2922 = vpop.f32.mrb[0].mxu0
        %v2923 = vadd.f32 %v2835, %v2922
        %v2924 = vpop.f32.mrb[0].mxu0
        %2925 = vmatprep.mubr.bf16.mxu0 0
        %2926 = vmatmul.mubr.bf16.gmra.mrb[0].mxu0 %v2805
        %v2927 = vpop.f32.mrb[0].mxu0
        %v2928 = vadd.f32 %v2835, %v2927
        %v2929 = vpop.f32.mrb[0].mxu0
        %v2930 = vpop.f32.mrb[0].mxu0
        %v2931 = vadd.f32 %v2835, %v2930
        %v2932 = vpop.f32.mrb[0].mxu0
        %2933 = vmatprep.mubr.bf16.mxu0 0
        %2934 = vmatmul.mubr.bf16.gmra.mrb[0].mxu0 %v2806
        %v2935 = vpop.f32.mrb[0].mxu0
        %v2936 = vadd.f32 %v2835, %v2935
        %v2937 = vpop.f32.mrb[0].mxu0
        %v2938 = vpop.f32.mrb[0].mxu0
        %v2939 = vadd.f32 %v2835, %v2938
        %v2940 = vpop.f32.mrb[0].mxu0
        %2941 = vmatprep.mubr.bf16.mxu0 0
        %2942 = vmatmul.mubr.bf16.gmra.mrb[0].mxu0 %v2807
        %v2943 = vpop.f32.mrb[0].mxu0
        %v2944 = vadd.f32 %v2835, %v2943
        %v2945 = vpop.f32.mrb[0].mxu0
        %v2946 = vpop.f32.mrb[0].mxu0
        %v2947 = vadd.f32 %v2835, %v2946
        %v2948 = vpop.f32.mrb[0].mxu0
        %2949 = vmatprep.mubr.bf16.mxu0 0
        %2950 = vmatmul.mubr.bf16.gmra.mrb[0].mxu0 %v2808
        %v2951 = vpop.f32.mrb[0].mxu0
        %v2952 = vadd.f32 %v2835, %v2951
        %v2953 = vpop.f32.mrb[0].mxu0
        %v2954 = vpop.f32.mrb[0].mxu0
        %v2955 = vadd.f32 %v2835, %v2954
        %v2956 = vpop.f32.mrb[0].mxu0
        %2957 = vmatprep.mubr.bf16.mxu0 0
        %2958 = vmatmul.mubr.bf16.gmra.mrb[0].mxu0 %v2809
        %v2959 = vpop.f32.mrb[0].mxu0
        %v2960 = vadd.f32 %v2835, %v2959
        %v2961 = vpop.f32.mrb[0].mxu0
        %v2962 = vpop.f32.mrb[0].mxu0
        %v2963 = vadd.f32 %v2835, %v2962
        %v2964 = vpop.f32.mrb[0].mxu0
        %2965 = vmatprep.mubr.bf16.mxu0 0
        %2966 = vmatmul.mubr.bf16.gmra.mrb[0].mxu0 %v2810
        %v2967 = vpop.f32.mrb[0].mxu0
        %v2968 = vadd.f32 %v2835, %v2967
        %v2969 = vpop.f32.mrb[0].mxu0
        %v2970 = vpop.f32.mrb[0].mxu0
        %v2971 = vadd.f32 %v2835, %v2970
        %v2972 = vpop.f32.mrb[0].mxu0
        %2973 = vmatprep.mubr.bf16.mxu0 0
        %2974 = vmatmul.mubr.bf16.gmra.mrb[0].mxu0 %v2811
        %v2975 = vpop.f32.mrb[0].mxu0
        %v2976 = vadd.f32 %v2835, %v2975
        %v2977 = vpop.f32.mrb[0].mxu0
        %v2978 = vpop.f32.mrb[0].mxu0
        %v2979 = vadd.f32 %v2835, %v2978
        %v2980 = vpop.f32.mrb[0].mxu0
        %2981 = vmatprep.mubr.bf16.mxu0 0
        %2982 = vmatmul.mubr.bf16.gmra.mrb[0].mxu0 %v2812
        %v2983 = vpop.f32.mrb[0].mxu0
        %v2984 = vadd.f32 %v2835, %v2983
        %v2985 = vpop.f32.mrb[0].mxu0
        %v2986 = vpop.f32.mrb[0].mxu0
        %v2987 = vadd.f32 %v2835, %v2986
        %v2988 = vpop.f32.mrb[0].mxu0
        %2989 = vmatprep.mubr.bf16.mxu0 0
        %2990 = vmatmul.mubr.bf16.gmra.mrb[0].mxu0 %v2813
        %v2991 = vpop.f32.mrb[0].mxu0
        %v2992 = vadd.f32 %v2835, %v2991
        %v2993 = vpop.f32.mrb[0].mxu0
        %v2994 = vpop.f32.mrb[0].mxu0
        %v2995 = vadd.f32 %v2835, %v2994
        %v2996 = vpop.f32.mrb[0].mxu0
        %2997 = vdwg.mxu0
        %v2998 = vmax.f32 %v2920, 0.0
        %v2999 = vmax.f32 %v2923, 0.0
        %v3000 = vmax.f32 %v2928, 0.0
        %v3001 = vmax.f32 %v2931, 0.0
        %v3002 = vmax.f32 %v2936, 0.0
        %v3003 = vmax.f32 %v2939, 0.0
        %v3004 = vmax.f32 %v2944, 0.0
        %v3005 = vmax.f32 %v2947, 0.0
        %v3006 = vmax.f32 %v2952, 0.0
        %v3007 = vmax.f32 %v2955, 0.0
        %v3008 = vmax.f32 %v2960, 0.0
        %v3009 = vmax.f32 %v2963, 0.0
        %v3010 = vmax.f32 %v2968, 0.0
        %v3011 = vmax.f32 %v2971, 0.0
        %v3012 = vmax.f32 %v2976, 0.0
        %v3013 = vmax.f32 %v2979, 0.0
        %v3014 = vmax.f32 %v2984, 0.0
        %v3015 = vmax.f32 %v2987, 0.0
        %v3016 = vmax.f32 %v2992, 0.0
        %v3017 = vmax.f32 %v2995, 0.0
        %3018 = vst [vmem:[%s283] sm:$0xff] %v2998
        %3019 = vst [vmem:[%s283 + $0x8] sm:$0xff] %v2999
        %3020 = vst [vmem:[%s283 + $0x10] sm:$0xff] %v3000
        %3021 = vst [vmem:[%s283 + $0x18] sm:$0xff] %v3001
        %3022 = vst [vmem:[%s283 + $0x20] sm:$0xff] %v3002
        %3023 = vst [vmem:[%s283 + $0x28] sm:$0xff] %v3003
        %3024 = vst [vmem:[%s283 + $0x30] sm:$0xff] %v3004
        %3025 = vst [vmem:[%s283 + $0x38] sm:$0xff] %v3005
        %3026 = vst [vmem:[%s283 + $0x40] sm:$0xff] %v3006
        %3027 = vst [vmem:[%s283 + $0x48] sm:$0xff] %v3007
        %3028 = vst [vmem:[%s283 + $0x50] sm:$0xff] %v3008
        %3029 = vst [vmem:[%s283 + $0x58] sm:$0xff] %v3009
        %3030 = vst [vmem:[%s283 + $0x60] sm:$0xff] %v3010
        %3031 = vst [vmem:[%s283 + $0x68] sm:$0xff] %v3011
        %3032 = vst [vmem:[%s283 + $0x70] sm:$0xff] %v3012
        %3033 = vst [vmem:[%s283 + $0x78] sm:$0xff] %v3013
        %3034 = vst [vmem:[%s283 + $0x80] sm:$0xff] %v3014
        %3035 = vst [vmem:[%s283 + $0x88] sm:$0xff] %v3015
        %3036 = vst [vmem:[%s283 + $0x90] sm:$0xff] %v3016
        %3037 = vst [vmem:[%s283 + $0x98] sm:$0xff] %v3017
        %s3038 = sand.u32 %s176, 1
        %s3039 = scalar_lea.sflag [#allocation5], %s3038
        %s3040 = sand.u32 %s176, 1
        %s3041 = smul.addr %s3040, 160
        %s3042 = scalar_lea.vmem [#allocation6], %s3041
        // Predicated region
        $region49: #{tpu_custom_call.1} parent=43 // pred_check
          %p3043 = pneg %p186
        $region50: #{tpu_custom_call.1} parent=43 // pred_check_branch
          %3045 = sbr.rel (%p3043) target = $region52
        $region51: #{tpu_custom_call.1} parent=43 // pred_region
          %s3047 = ssub.s32 2560, 2560
          %3048 = vsyncadd %s3039, %s3047
          %s3049 = smul.addr %s26, 20
          %s3050 = smul.addr %s25, 40
          %s3051 = sadd.s32 %s3049, %s3050
          %s3052 = smul.addr %s3051, 128
          %s3053 = scalar_lea.hbm %s6, %s3052
          %s3054 = sshll.u32 %s3042, 4
          %s3055 = int_to_ptr.vmem [resolvable:$true] %s3054
          %3060 = dma.vmem_to_hbm [thread:$0]  %s3055, 2560, %s3053, %s3039, 128, 128, 8
        $region52: #{tpu_custom_call.1} parent=43 // pred_fallthru
          _
      $region44: #{tpu_custom_call.1} parent=5 // pred_fallthru
        _
      %p3061 = scmp.le.s32.totalorder 2, %s16
      // Predicated region
      $region53: #{tpu_custom_call.1} parent=5 // pred_check
        %p3062 = pneg %p3061
      $region54: #{tpu_custom_call.1} parent=5 // pred_check_branch
        %3064 = sbr.rel (%p3062) target = $region56
      $region55: #{tpu_custom_call.1} parent=5 // pred_region
        %s3065 = ssub.s32 %s16, 2
        // Predicated region
        $region57: #{tpu_custom_call.1} parent=55 // pred_check
          %p3066 = pneg %p192
        $region58: #{tpu_custom_call.1} parent=55 // pred_check_branch
          %3068 = sbr.rel (%p3066) target = $region60
        $region59: #{tpu_custom_call.1} parent=55 // pred_region
          %s3069 = sand.u32 %s177, 1
          %s3070 = scalar_lea.sflag [#allocation5], %s3069
          %s3071 = sand.u32 %s177, 1
          %s3072 = smul.addr %s3071, 160
          %s3073 = scalar_lea.vmem [#allocation6], %s3072
          %3074 = dma.done %s3070, 2560
        $region60: #{tpu_custom_call.1} parent=55 // pred_fallthru
          _
      $region56: #{tpu_custom_call.1} parent=5 // pred_fallthru
        _
    $region6: #{tpu_custom_call.1} parent=1 // loop_footer
      %s20 = sadd.s32 1, %s16
    $region7: #{tpu_custom_call.1} parent=1 // loop_footer_branch
      %15 = sbr.rel target = $region3
    $region8: #{tpu_custom_call.1} parent=1 // loop_exit
      _
    %3075 = vsyncpa [#allocation4], 1
    %s3076 = scalar_lea.sflag [#allocation4], 1
    %3077 = vsyncpa %s3076, 1
    %3078 = vsyncpa [#allocation5], 1
    %s3079 = scalar_lea.sflag [#allocation5], 1
    %3080 = vsyncpa %s3079, 1

</llo_original>
